<compile_context>
chip_gen: v7x
topology: tpu7x:2x2x1
jax: 0.10.0
libtpu: 0.0.40
codegen_flags: <defaults>
</compile_context>

<pallas_src>
import jax
import jax.numpy as jnp
from jax import lax
from jax.experimental import pallas as pl
from jax.experimental.pallas import tpu as pltpu

D1, D2, D3 = 10, 20, 2        # layer widths: 1 -> 10 -> 20 -> 2
LANES = 128                   # lanes per row (batch elements per row)
CHUNK = 16                    # sublane rows per inner-loop chunk (2 vregs / plane)


def _mlp_kernel(w1_ref, b1_ref, w2_ref, b2_ref, w3_ref, b3_ref, x_ref, o_ref):
    # ---- hoist all 252 SMEM scalar reads out of the per-chunk loop ----
    # Flattened PyTorch weights: w2[f][g] == W2[g, f], w3[g][k] == W3[k, g].
    w1 = [w1_ref[f] for f in range(D1)]
    b1 = [b1_ref[f] for f in range(D1)]
    w2 = [[w2_ref[f * D2 + g] for g in range(D2)] for f in range(D1)]
    b2 = [b2_ref[g] for g in range(D2)]
    w3 = [[w3_ref[g * D3 + k] for k in range(D3)] for g in range(D2)]
    b3 = [b3_ref[k] for k in range(D3)]

    n_chunks = x_ref.shape[0] // CHUNK

    def chunk_body(c, carry):
        r0 = pl.multiple_of(c * CHUNK, CHUNK)
        x = x_ref[pl.ds(r0, CHUNK), :]              # (CHUNK, 128): 2 batch vregs

        # fc1 -> tanh -> fc2, streamed: compute each h1 feature on the fly and
        # scatter it into the 20 fc2 accumulators. Peak liveness: x + 1 h1 plane
        # + 20 accumulator planes (~22 planes, ~45 vregs at CHUNK=16) -> no spills.
        acc2 = None
        for f in range(D1):
            h1f = jnp.tanh(x * w1[f] + b1[f])       # tanh rides the EUP slot
            if acc2 is None:
                acc2 = [h1f * w2[f][g] + b2[g] for g in range(D2)]
            else:
                acc2 = [acc2[g] + h1f * w2[f][g] for g in range(D2)]
        h2 = [jnp.tanh(a) for a in acc2]

        # fc3: 20 -> 2, each output feature is a full lane-dense (CHUNK,128) plane.
        for k in range(D3):
            acc = h2[0] * w3[0][k] + b3[k]
            for g in range(1, D2):
                acc = acc + h2[g] * w3[g][k]
            o_ref[k, pl.ds(r0, CHUNK), :] = acc
        return carry

    lax.fori_loop(0, n_chunks, chunk_body, 0)


def nonmonotonic_mlp(x, params, tb=1024):
    """x: (N, 1) float32 -> (N, 2) float32 (PyTorch nn.Linear semantics)."""
    w1, b1, w2, b2, w3, b3 = params                # PyTorch layout: W (out,in), b (out,)
    n = x.shape[0]

    # ---- batch-on-lanes slab, padded to a whole number of (tb, 128) tiles ----
    r = max(1, -(-n // LANES))                     # 128-wide rows needed
    r16 = -(-r // CHUNK) * CHUNK                   # rows rounded up to the chunk size
    if r16 >= 2 * CHUNK:
        # Cap tb so the grid has >=2 steps: both v7x TensorCores get work.
        half_rows = -(-r16 // 2)
        half_rows = -(-half_rows // CHUNK) * CHUNK
        tb = min(tb, half_rows)
    else:
        tb = r16
    tb = max(CHUNK, (tb // CHUNK) * CHUNK)
    r_pad = -(-r16 // tb) * tb
    n_pad = r_pad * LANES

    x_slab = jnp.pad(x.reshape(-1).astype(jnp.float32),
                     (0, n_pad - n)).reshape(r_pad, LANES)

    # ---- flatten params for scalar SMEM indexing inside the kernel ----
    # w2f[f*D2 + g] == W2[g, f]   and   w3f[g*D3 + k] == W3[k, g]
    w1f = w1.reshape(D1).astype(jnp.float32)
    b1f = b1.reshape(D1).astype(jnp.float32)
    w2f = jnp.transpose(w2).reshape(D1 * D2).astype(jnp.float32)
    b2f = b2.reshape(D2).astype(jnp.float32)
    w3f = jnp.transpose(w3).reshape(D2 * D3).astype(jnp.float32)
    b3f = b3.reshape(D3).astype(jnp.float32)

    smem = pl.BlockSpec(memory_space=pltpu.MemorySpace.SMEM)

    out_slab = pl.pallas_call(
        _mlp_kernel,
        out_shape=jax.ShapeDtypeStruct((D3, r_pad, LANES), jnp.float32),
        grid=(r_pad // tb,),
        in_specs=[smem] * 6
        + [pl.BlockSpec((tb, LANES), lambda i: (i, 0))],
        out_specs=pl.BlockSpec((D3, tb, LANES), lambda i: (0, i, 0)),
        compiler_params=pltpu.CompilerParams(
            dimension_semantics=("parallel",),     # megacore sharding on v7x
            vmem_limit_bytes=32 * 1024 * 1024,     # safe on v5e/v6e/v7x
        ),
    )(w1f, b1f, w2f, b2f, w3f, b3f, x_slab)

    # (2, r_pad, 128) lane-dense slab -> (N, 2) (kept for PyTorch output parity;
    # consumers that accept (2, N) could skip this transpose).
    return out_slab.reshape(D3, n_pad)[:, :n].T


def init_params(key):
    """PyTorch nn.Linear default init: U(-1/sqrt(fan_in), +1/sqrt(fan_in))."""
    def linear(key, fan_in, fan_out):
        kw, kb = jax.random.split(key)
        bound = 1.0 / jnp.sqrt(jnp.float32(fan_in))
        w = jax.random.uniform(kw, (fan_out, fan_in), jnp.float32, -bound, bound)
        b = jax.random.uniform(kb, (fan_out,), jnp.float32, -bound, bound)
        return w, b

    k1, k2, k3 = jax.random.split(key, 3)
    w1, b1 = linear(k1, 1, D1)
    w2, b2 = linear(k2, D1, D2)
    w3, b3 = linear(k3, D2, D3)
    return (w1, b1, w2, b2, w3, b3)


def _ref_forward(x, params):
    """Pure-JAX reference (PyTorch convention y = x @ W.T + b)."""
    w1, b1, w2, b2, w3, b3 = params
    h1 = jnp.tanh(x @ w1.T + b1)
    h2 = jnp.tanh(h1 @ w2.T + b2)
    return h2 @ w3.T + b3


if __name__ == "__main__":
    key = jax.random.PRNGKey(0)
    kp, kx = jax.random.split(key)

    params = init_params(kp)
    # Batch of 200 scalar inputs, shape (N, 1): exercises >1 lane-row and a ragged
    # tail (200 is not a multiple of 128), so the padding path is tested.
    n = 200
    x = jax.random.normal(kx, (n, 1), jnp.float32)

    out = nonmonotonic_mlp(x, params)
    out = jax.block_until_ready(out)

    ref = _ref_forward(x, params)
    assert out.shape == (n, D3), out.shape
    assert jnp.allclose(out, ref, atol=1e-4, rtol=1e-4), \
        float(jnp.max(jnp.abs(out - ref)))

    print("KERNEL_OK")
</pallas_src>

<mosaic_0001>
module attributes {stable_mosaic.version = 11 : i64} {
  func.func @_mlp_kernel(%arg0: i32, %arg1: memref<10xf32, #tpu.memory_space<smem>>, %arg2: memref<10xf32, #tpu.memory_space<smem>>, %arg3: memref<200xf32, #tpu.memory_space<smem>>, %arg4: memref<20xf32, #tpu.memory_space<smem>>, %arg5: memref<40xf32, #tpu.memory_space<smem>>, %arg6: memref<2xf32, #tpu.memory_space<smem>>, %arg7: memref<16x128xf32, #tpu.memory_space<vmem>>, %arg8: memref<2x16x128xf32, #tpu.memory_space<vmem>>) attributes {dimension_semantics = [#tpu.dimension_semantics<parallel>], iteration_bounds = array<i64: 1>, scalar_prefetch = 0 : i64, scratch_operands = 0 : i64, tpu.core_type = #tpu.core_type<tc>, window_params = [{transform_indices = @transform_0, window_bounds = array<i64: 10>}, {transform_indices = @transform_1, window_bounds = array<i64: 10>}, {transform_indices = @transform_2, window_bounds = array<i64: 200>}, {transform_indices = @transform_3, window_bounds = array<i64: 20>}, {transform_indices = @transform_4, window_bounds = array<i64: 40>}, {transform_indices = @transform_5, window_bounds = array<i64: 2>}, {transform_indices = @transform_6, window_bounds = array<i64: 16, 128>}, {transform_indices = @transform_7, window_bounds = array<i64: 2, 16, 128>}]} {
    %c0 = arith.constant 0 : index
    %0 = memref.load %arg1[%c0] : memref<10xf32, #tpu.memory_space<smem>>
    %c1 = arith.constant 1 : index
    %1 = memref.load %arg1[%c1] : memref<10xf32, #tpu.memory_space<smem>>
    %c2 = arith.constant 2 : index
    %2 = memref.load %arg1[%c2] : memref<10xf32, #tpu.memory_space<smem>>
    %c3 = arith.constant 3 : index
    %3 = memref.load %arg1[%c3] : memref<10xf32, #tpu.memory_space<smem>>
    %c4 = arith.constant 4 : index
    %4 = memref.load %arg1[%c4] : memref<10xf32, #tpu.memory_space<smem>>
    %c5 = arith.constant 5 : index
    %5 = memref.load %arg1[%c5] : memref<10xf32, #tpu.memory_space<smem>>
    %c6 = arith.constant 6 : index
    %6 = memref.load %arg1[%c6] : memref<10xf32, #tpu.memory_space<smem>>
    %c7 = arith.constant 7 : index
    %7 = memref.load %arg1[%c7] : memref<10xf32, #tpu.memory_space<smem>>
    %c8 = arith.constant 8 : index
    %8 = memref.load %arg1[%c8] : memref<10xf32, #tpu.memory_space<smem>>
    %c9 = arith.constant 9 : index
    %9 = memref.load %arg1[%c9] : memref<10xf32, #tpu.memory_space<smem>>
    %c0_0 = arith.constant 0 : index
    %10 = memref.load %arg2[%c0_0] : memref<10xf32, #tpu.memory_space<smem>>
    %c1_1 = arith.constant 1 : index
    %11 = memref.load %arg2[%c1_1] : memref<10xf32, #tpu.memory_space<smem>>
    %c2_2 = arith.constant 2 : index
    %12 = memref.load %arg2[%c2_2] : memref<10xf32, #tpu.memory_space<smem>>
    %c3_3 = arith.constant 3 : index
    %13 = memref.load %arg2[%c3_3] : memref<10xf32, #tpu.memory_space<smem>>
    %c4_4 = arith.constant 4 : index
    %14 = memref.load %arg2[%c4_4] : memref<10xf32, #tpu.memory_space<smem>>
    %c5_5 = arith.constant 5 : index
    %15 = memref.load %arg2[%c5_5] : memref<10xf32, #tpu.memory_space<smem>>
    %c6_6 = arith.constant 6 : index
    %16 = memref.load %arg2[%c6_6] : memref<10xf32, #tpu.memory_space<smem>>
    %c7_7 = arith.constant 7 : index
    %17 = memref.load %arg2[%c7_7] : memref<10xf32, #tpu.memory_space<smem>>
    %c8_8 = arith.constant 8 : index
    %18 = memref.load %arg2[%c8_8] : memref<10xf32, #tpu.memory_space<smem>>
    %c9_9 = arith.constant 9 : index
    %19 = memref.load %arg2[%c9_9] : memref<10xf32, #tpu.memory_space<smem>>
    %c0_10 = arith.constant 0 : index
    %20 = memref.load %arg3[%c0_10] : memref<200xf32, #tpu.memory_space<smem>>
    %c1_11 = arith.constant 1 : index
    %21 = memref.load %arg3[%c1_11] : memref<200xf32, #tpu.memory_space<smem>>
    %c2_12 = arith.constant 2 : index
    %22 = memref.load %arg3[%c2_12] : memref<200xf32, #tpu.memory_space<smem>>
    %c3_13 = arith.constant 3 : index
    %23 = memref.load %arg3[%c3_13] : memref<200xf32, #tpu.memory_space<smem>>
    %c4_14 = arith.constant 4 : index
    %24 = memref.load %arg3[%c4_14] : memref<200xf32, #tpu.memory_space<smem>>
    %c5_15 = arith.constant 5 : index
    %25 = memref.load %arg3[%c5_15] : memref<200xf32, #tpu.memory_space<smem>>
    %c6_16 = arith.constant 6 : index
    %26 = memref.load %arg3[%c6_16] : memref<200xf32, #tpu.memory_space<smem>>
    %c7_17 = arith.constant 7 : index
    %27 = memref.load %arg3[%c7_17] : memref<200xf32, #tpu.memory_space<smem>>
    %c8_18 = arith.constant 8 : index
    %28 = memref.load %arg3[%c8_18] : memref<200xf32, #tpu.memory_space<smem>>
    %c9_19 = arith.constant 9 : index
    %29 = memref.load %arg3[%c9_19] : memref<200xf32, #tpu.memory_space<smem>>
    %c10 = arith.constant 10 : index
    %30 = memref.load %arg3[%c10] : memref<200xf32, #tpu.memory_space<smem>>
    %c11 = arith.constant 11 : index
    %31 = memref.load %arg3[%c11] : memref<200xf32, #tpu.memory_space<smem>>
    %c12 = arith.constant 12 : index
    %32 = memref.load %arg3[%c12] : memref<200xf32, #tpu.memory_space<smem>>
    %c13 = arith.constant 13 : index
    %33 = memref.load %arg3[%c13] : memref<200xf32, #tpu.memory_space<smem>>
    %c14 = arith.constant 14 : index
    %34 = memref.load %arg3[%c14] : memref<200xf32, #tpu.memory_space<smem>>
    %c15 = arith.constant 15 : index
    %35 = memref.load %arg3[%c15] : memref<200xf32, #tpu.memory_space<smem>>
    %c16 = arith.constant 16 : index
    %36 = memref.load %arg3[%c16] : memref<200xf32, #tpu.memory_space<smem>>
    %c17 = arith.constant 17 : index
    %37 = memref.load %arg3[%c17] : memref<200xf32, #tpu.memory_space<smem>>
    %c18 = arith.constant 18 : index
    %38 = memref.load %arg3[%c18] : memref<200xf32, #tpu.memory_space<smem>>
    %c19 = arith.constant 19 : index
    %39 = memref.load %arg3[%c19] : memref<200xf32, #tpu.memory_space<smem>>
    %c20 = arith.constant 20 : index
    %40 = memref.load %arg3[%c20] : memref<200xf32, #tpu.memory_space<smem>>
    %c21 = arith.constant 21 : index
    %41 = memref.load %arg3[%c21] : memref<200xf32, #tpu.memory_space<smem>>
    %c22 = arith.constant 22 : index
    %42 = memref.load %arg3[%c22] : memref<200xf32, #tpu.memory_space<smem>>
    %c23 = arith.constant 23 : index
    %43 = memref.load %arg3[%c23] : memref<200xf32, #tpu.memory_space<smem>>
    %c24 = arith.constant 24 : index
    %44 = memref.load %arg3[%c24] : memref<200xf32, #tpu.memory_space<smem>>
    %c25 = arith.constant 25 : index
    %45 = memref.load %arg3[%c25] : memref<200xf32, #tpu.memory_space<smem>>
    %c26 = arith.constant 26 : index
    %46 = memref.load %arg3[%c26] : memref<200xf32, #tpu.memory_space<smem>>
    %c27 = arith.constant 27 : index
    %47 = memref.load %arg3[%c27] : memref<200xf32, #tpu.memory_space<smem>>
    %c28 = arith.constant 28 : index
    %48 = memref.load %arg3[%c28] : memref<200xf32, #tpu.memory_space<smem>>
    %c29 = arith.constant 29 : index
    %49 = memref.load %arg3[%c29] : memref<200xf32, #tpu.memory_space<smem>>
    %c30 = arith.constant 30 : index
    %50 = memref.load %arg3[%c30] : memref<200xf32, #tpu.memory_space<smem>>
    %c31 = arith.constant 31 : index
    %51 = memref.load %arg3[%c31] : memref<200xf32, #tpu.memory_space<smem>>
    %c32 = arith.constant 32 : index
    %52 = memref.load %arg3[%c32] : memref<200xf32, #tpu.memory_space<smem>>
    %c33 = arith.constant 33 : index
    %53 = memref.load %arg3[%c33] : memref<200xf32, #tpu.memory_space<smem>>
    %c34 = arith.constant 34 : index
    %54 = memref.load %arg3[%c34] : memref<200xf32, #tpu.memory_space<smem>>
    %c35 = arith.constant 35 : index
    %55 = memref.load %arg3[%c35] : memref<200xf32, #tpu.memory_space<smem>>
    %c36 = arith.constant 36 : index
    %56 = memref.load %arg3[%c36] : memref<200xf32, #tpu.memory_space<smem>>
    %c37 = arith.constant 37 : index
    %57 = memref.load %arg3[%c37] : memref<200xf32, #tpu.memory_space<smem>>
    %c38 = arith.constant 38 : index
    %58 = memref.load %arg3[%c38] : memref<200xf32, #tpu.memory_space<smem>>
    %c39 = arith.constant 39 : index
    %59 = memref.load %arg3[%c39] : memref<200xf32, #tpu.memory_space<smem>>
    %c40 = arith.constant 40 : index
    %60 = memref.load %arg3[%c40] : memref<200xf32, #tpu.memory_space<smem>>
    %c41 = arith.constant 41 : index
    %61 = memref.load %arg3[%c41] : memref<200xf32, #tpu.memory_space<smem>>
    %c42 = arith.constant 42 : index
    %62 = memref.load %arg3[%c42] : memref<200xf32, #tpu.memory_space<smem>>
    %c43 = arith.constant 43 : index
    %63 = memref.load %arg3[%c43] : memref<200xf32, #tpu.memory_space<smem>>
    %c44 = arith.constant 44 : index
    %64 = memref.load %arg3[%c44] : memref<200xf32, #tpu.memory_space<smem>>
    %c45 = arith.constant 45 : index
    %65 = memref.load %arg3[%c45] : memref<200xf32, #tpu.memory_space<smem>>
    %c46 = arith.constant 46 : index
    %66 = memref.load %arg3[%c46] : memref<200xf32, #tpu.memory_space<smem>>
    %c47 = arith.constant 47 : index
    %67 = memref.load %arg3[%c47] : memref<200xf32, #tpu.memory_space<smem>>
    %c48 = arith.constant 48 : index
    %68 = memref.load %arg3[%c48] : memref<200xf32, #tpu.memory_space<smem>>
    %c49 = arith.constant 49 : index
    %69 = memref.load %arg3[%c49] : memref<200xf32, #tpu.memory_space<smem>>
    %c50 = arith.constant 50 : index
    %70 = memref.load %arg3[%c50] : memref<200xf32, #tpu.memory_space<smem>>
    %c51 = arith.constant 51 : index
    %71 = memref.load %arg3[%c51] : memref<200xf32, #tpu.memory_space<smem>>
    %c52 = arith.constant 52 : index
    %72 = memref.load %arg3[%c52] : memref<200xf32, #tpu.memory_space<smem>>
    %c53 = arith.constant 53 : index
    %73 = memref.load %arg3[%c53] : memref<200xf32, #tpu.memory_space<smem>>
    %c54 = arith.constant 54 : index
    %74 = memref.load %arg3[%c54] : memref<200xf32, #tpu.memory_space<smem>>
    %c55 = arith.constant 55 : index
    %75 = memref.load %arg3[%c55] : memref<200xf32, #tpu.memory_space<smem>>
    %c56 = arith.constant 56 : index
    %76 = memref.load %arg3[%c56] : memref<200xf32, #tpu.memory_space<smem>>
    %c57 = arith.constant 57 : index
    %77 = memref.load %arg3[%c57] : memref<200xf32, #tpu.memory_space<smem>>
    %c58 = arith.constant 58 : index
    %78 = memref.load %arg3[%c58] : memref<200xf32, #tpu.memory_space<smem>>
    %c59 = arith.constant 59 : index
    %79 = memref.load %arg3[%c59] : memref<200xf32, #tpu.memory_space<smem>>
    %c60 = arith.constant 60 : index
    %80 = memref.load %arg3[%c60] : memref<200xf32, #tpu.memory_space<smem>>
    %c61 = arith.constant 61 : index
    %81 = memref.load %arg3[%c61] : memref<200xf32, #tpu.memory_space<smem>>
    %c62 = arith.constant 62 : index
    %82 = memref.load %arg3[%c62] : memref<200xf32, #tpu.memory_space<smem>>
    %c63 = arith.constant 63 : index
    %83 = memref.load %arg3[%c63] : memref<200xf32, #tpu.memory_space<smem>>
    %c64 = arith.constant 64 : index
    %84 = memref.load %arg3[%c64] : memref<200xf32, #tpu.memory_space<smem>>
    %c65 = arith.constant 65 : index
    %85 = memref.load %arg3[%c65] : memref<200xf32, #tpu.memory_space<smem>>
    %c66 = arith.constant 66 : index
    %86 = memref.load %arg3[%c66] : memref<200xf32, #tpu.memory_space<smem>>
    %c67 = arith.constant 67 : index
    %87 = memref.load %arg3[%c67] : memref<200xf32, #tpu.memory_space<smem>>
    %c68 = arith.constant 68 : index
    %88 = memref.load %arg3[%c68] : memref<200xf32, #tpu.memory_space<smem>>
    %c69 = arith.constant 69 : index
    %89 = memref.load %arg3[%c69] : memref<200xf32, #tpu.memory_space<smem>>
    %c70 = arith.constant 70 : index
    %90 = memref.load %arg3[%c70] : memref<200xf32, #tpu.memory_space<smem>>
    %c71 = arith.constant 71 : index
    %91 = memref.load %arg3[%c71] : memref<200xf32, #tpu.memory_space<smem>>
    %c72 = arith.constant 72 : index
    %92 = memref.load %arg3[%c72] : memref<200xf32, #tpu.memory_space<smem>>
    %c73 = arith.constant 73 : index
    %93 = memref.load %arg3[%c73] : memref<200xf32, #tpu.memory_space<smem>>
    %c74 = arith.constant 74 : index
    %94 = memref.load %arg3[%c74] : memref<200xf32, #tpu.memory_space<smem>>
    %c75 = arith.constant 75 : index
    %95 = memref.load %arg3[%c75] : memref<200xf32, #tpu.memory_space<smem>>
    %c76 = arith.constant 76 : index
    %96 = memref.load %arg3[%c76] : memref<200xf32, #tpu.memory_space<smem>>
    %c77 = arith.constant 77 : index
    %97 = memref.load %arg3[%c77] : memref<200xf32, #tpu.memory_space<smem>>
    %c78 = arith.constant 78 : index
    %98 = memref.load %arg3[%c78] : memref<200xf32, #tpu.memory_space<smem>>
    %c79 = arith.constant 79 : index
    %99 = memref.load %arg3[%c79] : memref<200xf32, #tpu.memory_space<smem>>
    %c80 = arith.constant 80 : index
    %100 = memref.load %arg3[%c80] : memref<200xf32, #tpu.memory_space<smem>>
    %c81 = arith.constant 81 : index
    %101 = memref.load %arg3[%c81] : memref<200xf32, #tpu.memory_space<smem>>
    %c82 = arith.constant 82 : index
    %102 = memref.load %arg3[%c82] : memref<200xf32, #tpu.memory_space<smem>>
    %c83 = arith.constant 83 : index
    %103 = memref.load %arg3[%c83] : memref<200xf32, #tpu.memory_space<smem>>
    %c84 = arith.constant 84 : index
    %104 = memref.load %arg3[%c84] : memref<200xf32, #tpu.memory_space<smem>>
    %c85 = arith.constant 85 : index
    %105 = memref.load %arg3[%c85] : memref<200xf32, #tpu.memory_space<smem>>
    %c86 = arith.constant 86 : index
    %106 = memref.load %arg3[%c86] : memref<200xf32, #tpu.memory_space<smem>>
    %c87 = arith.constant 87 : index
    %107 = memref.load %arg3[%c87] : memref<200xf32, #tpu.memory_space<smem>>
    %c88 = arith.constant 88 : index
    %108 = memref.load %arg3[%c88] : memref<200xf32, #tpu.memory_space<smem>>
    %c89 = arith.constant 89 : index
    %109 = memref.load %arg3[%c89] : memref<200xf32, #tpu.memory_space<smem>>
    %c90 = arith.constant 90 : index
    %110 = memref.load %arg3[%c90] : memref<200xf32, #tpu.memory_space<smem>>
    %c91 = arith.constant 91 : index
    %111 = memref.load %arg3[%c91] : memref<200xf32, #tpu.memory_space<smem>>
    %c92 = arith.constant 92 : index
    %112 = memref.load %arg3[%c92] : memref<200xf32, #tpu.memory_space<smem>>
    %c93 = arith.constant 93 : index
    %113 = memref.load %arg3[%c93] : memref<200xf32, #tpu.memory_space<smem>>
    %c94 = arith.constant 94 : index
    %114 = memref.load %arg3[%c94] : memref<200xf32, #tpu.memory_space<smem>>
    %c95 = arith.constant 95 : index
    %115 = memref.load %arg3[%c95] : memref<200xf32, #tpu.memory_space<smem>>
    %c96 = arith.constant 96 : index
    %116 = memref.load %arg3[%c96] : memref<200xf32, #tpu.memory_space<smem>>
    %c97 = arith.constant 97 : index
    %117 = memref.load %arg3[%c97] : memref<200xf32, #tpu.memory_space<smem>>
    %c98 = arith.constant 98 : index
    %118 = memref.load %arg3[%c98] : memref<200xf32, #tpu.memory_space<smem>>
    %c99 = arith.constant 99 : index
    %119 = memref.load %arg3[%c99] : memref<200xf32, #tpu.memory_space<smem>>
    %c100 = arith.constant 100 : index
    %120 = memref.load %arg3[%c100] : memref<200xf32, #tpu.memory_space<smem>>
    %c101 = arith.constant 101 : index
    %121 = memref.load %arg3[%c101] : memref<200xf32, #tpu.memory_space<smem>>
    %c102 = arith.constant 102 : index
    %122 = memref.load %arg3[%c102] : memref<200xf32, #tpu.memory_space<smem>>
    %c103 = arith.constant 103 : index
    %123 = memref.load %arg3[%c103] : memref<200xf32, #tpu.memory_space<smem>>
    %c104 = arith.constant 104 : index
    %124 = memref.load %arg3[%c104] : memref<200xf32, #tpu.memory_space<smem>>
    %c105 = arith.constant 105 : index
    %125 = memref.load %arg3[%c105] : memref<200xf32, #tpu.memory_space<smem>>
    %c106 = arith.constant 106 : index
    %126 = memref.load %arg3[%c106] : memref<200xf32, #tpu.memory_space<smem>>
    %c107 = arith.constant 107 : index
    %127 = memref.load %arg3[%c107] : memref<200xf32, #tpu.memory_space<smem>>
    %c108 = arith.constant 108 : index
    %128 = memref.load %arg3[%c108] : memref<200xf32, #tpu.memory_space<smem>>
    %c109 = arith.constant 109 : index
    %129 = memref.load %arg3[%c109] : memref<200xf32, #tpu.memory_space<smem>>
    %c110 = arith.constant 110 : index
    %130 = memref.load %arg3[%c110] : memref<200xf32, #tpu.memory_space<smem>>
    %c111 = arith.constant 111 : index
    %131 = memref.load %arg3[%c111] : memref<200xf32, #tpu.memory_space<smem>>
    %c112 = arith.constant 112 : index
    %132 = memref.load %arg3[%c112] : memref<200xf32, #tpu.memory_space<smem>>
    %c113 = arith.constant 113 : index
    %133 = memref.load %arg3[%c113] : memref<200xf32, #tpu.memory_space<smem>>
    %c114 = arith.constant 114 : index
    %134 = memref.load %arg3[%c114] : memref<200xf32, #tpu.memory_space<smem>>
    %c115 = arith.constant 115 : index
    %135 = memref.load %arg3[%c115] : memref<200xf32, #tpu.memory_space<smem>>
    %c116 = arith.constant 116 : index
    %136 = memref.load %arg3[%c116] : memref<200xf32, #tpu.memory_space<smem>>
    %c117 = arith.constant 117 : index
    %137 = memref.load %arg3[%c117] : memref<200xf32, #tpu.memory_space<smem>>
    %c118 = arith.constant 118 : index
    %138 = memref.load %arg3[%c118] : memref<200xf32, #tpu.memory_space<smem>>
    %c119 = arith.constant 119 : index
    %139 = memref.load %arg3[%c119] : memref<200xf32, #tpu.memory_space<smem>>
    %c120 = arith.constant 120 : index
    %140 = memref.load %arg3[%c120] : memref<200xf32, #tpu.memory_space<smem>>
    %c121 = arith.constant 121 : index
    %141 = memref.load %arg3[%c121] : memref<200xf32, #tpu.memory_space<smem>>
    %c122 = arith.constant 122 : index
    %142 = memref.load %arg3[%c122] : memref<200xf32, #tpu.memory_space<smem>>
    %c123 = arith.constant 123 : index
    %143 = memref.load %arg3[%c123] : memref<200xf32, #tpu.memory_space<smem>>
    %c124 = arith.constant 124 : index
    %144 = memref.load %arg3[%c124] : memref<200xf32, #tpu.memory_space<smem>>
    %c125 = arith.constant 125 : index
    %145 = memref.load %arg3[%c125] : memref<200xf32, #tpu.memory_space<smem>>
    %c126 = arith.constant 126 : index
    %146 = memref.load %arg3[%c126] : memref<200xf32, #tpu.memory_space<smem>>
    %c127 = arith.constant 127 : index
    %147 = memref.load %arg3[%c127] : memref<200xf32, #tpu.memory_space<smem>>
    %c128 = arith.constant 128 : index
    %148 = memref.load %arg3[%c128] : memref<200xf32, #tpu.memory_space<smem>>
    %c129 = arith.constant 129 : index
    %149 = memref.load %arg3[%c129] : memref<200xf32, #tpu.memory_space<smem>>
    %c130 = arith.constant 130 : index
    %150 = memref.load %arg3[%c130] : memref<200xf32, #tpu.memory_space<smem>>
    %c131 = arith.constant 131 : index
    %151 = memref.load %arg3[%c131] : memref<200xf32, #tpu.memory_space<smem>>
    %c132 = arith.constant 132 : index
    %152 = memref.load %arg3[%c132] : memref<200xf32, #tpu.memory_space<smem>>
    %c133 = arith.constant 133 : index
    %153 = memref.load %arg3[%c133] : memref<200xf32, #tpu.memory_space<smem>>
    %c134 = arith.constant 134 : index
    %154 = memref.load %arg3[%c134] : memref<200xf32, #tpu.memory_space<smem>>
    %c135 = arith.constant 135 : index
    %155 = memref.load %arg3[%c135] : memref<200xf32, #tpu.memory_space<smem>>
    %c136 = arith.constant 136 : index
    %156 = memref.load %arg3[%c136] : memref<200xf32, #tpu.memory_space<smem>>
    %c137 = arith.constant 137 : index
    %157 = memref.load %arg3[%c137] : memref<200xf32, #tpu.memory_space<smem>>
    %c138 = arith.constant 138 : index
    %158 = memref.load %arg3[%c138] : memref<200xf32, #tpu.memory_space<smem>>
    %c139 = arith.constant 139 : index
    %159 = memref.load %arg3[%c139] : memref<200xf32, #tpu.memory_space<smem>>
    %c140 = arith.constant 140 : index
    %160 = memref.load %arg3[%c140] : memref<200xf32, #tpu.memory_space<smem>>
    %c141 = arith.constant 141 : index
    %161 = memref.load %arg3[%c141] : memref<200xf32, #tpu.memory_space<smem>>
    %c142 = arith.constant 142 : index
    %162 = memref.load %arg3[%c142] : memref<200xf32, #tpu.memory_space<smem>>
    %c143 = arith.constant 143 : index
    %163 = memref.load %arg3[%c143] : memref<200xf32, #tpu.memory_space<smem>>
    %c144 = arith.constant 144 : index
    %164 = memref.load %arg3[%c144] : memref<200xf32, #tpu.memory_space<smem>>
    %c145 = arith.constant 145 : index
    %165 = memref.load %arg3[%c145] : memref<200xf32, #tpu.memory_space<smem>>
    %c146 = arith.constant 146 : index
    %166 = memref.load %arg3[%c146] : memref<200xf32, #tpu.memory_space<smem>>
    %c147 = arith.constant 147 : index
    %167 = memref.load %arg3[%c147] : memref<200xf32, #tpu.memory_space<smem>>
    %c148 = arith.constant 148 : index
    %168 = memref.load %arg3[%c148] : memref<200xf32, #tpu.memory_space<smem>>
    %c149 = arith.constant 149 : index
    %169 = memref.load %arg3[%c149] : memref<200xf32, #tpu.memory_space<smem>>
    %c150 = arith.constant 150 : index
    %170 = memref.load %arg3[%c150] : memref<200xf32, #tpu.memory_space<smem>>
    %c151 = arith.constant 151 : index
    %171 = memref.load %arg3[%c151] : memref<200xf32, #tpu.memory_space<smem>>
    %c152 = arith.constant 152 : index
    %172 = memref.load %arg3[%c152] : memref<200xf32, #tpu.memory_space<smem>>
    %c153 = arith.constant 153 : index
    %173 = memref.load %arg3[%c153] : memref<200xf32, #tpu.memory_space<smem>>
    %c154 = arith.constant 154 : index
    %174 = memref.load %arg3[%c154] : memref<200xf32, #tpu.memory_space<smem>>
    %c155 = arith.constant 155 : index
    %175 = memref.load %arg3[%c155] : memref<200xf32, #tpu.memory_space<smem>>
    %c156 = arith.constant 156 : index
    %176 = memref.load %arg3[%c156] : memref<200xf32, #tpu.memory_space<smem>>
    %c157 = arith.constant 157 : index
    %177 = memref.load %arg3[%c157] : memref<200xf32, #tpu.memory_space<smem>>
    %c158 = arith.constant 158 : index
    %178 = memref.load %arg3[%c158] : memref<200xf32, #tpu.memory_space<smem>>
    %c159 = arith.constant 159 : index
    %179 = memref.load %arg3[%c159] : memref<200xf32, #tpu.memory_space<smem>>
    %c160 = arith.constant 160 : index
    %180 = memref.load %arg3[%c160] : memref<200xf32, #tpu.memory_space<smem>>
    %c161 = arith.constant 161 : index
    %181 = memref.load %arg3[%c161] : memref<200xf32, #tpu.memory_space<smem>>
    %c162 = arith.constant 162 : index
    %182 = memref.load %arg3[%c162] : memref<200xf32, #tpu.memory_space<smem>>
    %c163 = arith.constant 163 : index
    %183 = memref.load %arg3[%c163] : memref<200xf32, #tpu.memory_space<smem>>
    %c164 = arith.constant 164 : index
    %184 = memref.load %arg3[%c164] : memref<200xf32, #tpu.memory_space<smem>>
    %c165 = arith.constant 165 : index
    %185 = memref.load %arg3[%c165] : memref<200xf32, #tpu.memory_space<smem>>
    %c166 = arith.constant 166 : index
    %186 = memref.load %arg3[%c166] : memref<200xf32, #tpu.memory_space<smem>>
    %c167 = arith.constant 167 : index
    %187 = memref.load %arg3[%c167] : memref<200xf32, #tpu.memory_space<smem>>
    %c168 = arith.constant 168 : index
    %188 = memref.load %arg3[%c168] : memref<200xf32, #tpu.memory_space<smem>>
    %c169 = arith.constant 169 : index
    %189 = memref.load %arg3[%c169] : memref<200xf32, #tpu.memory_space<smem>>
    %c170 = arith.constant 170 : index
    %190 = memref.load %arg3[%c170] : memref<200xf32, #tpu.memory_space<smem>>
    %c171 = arith.constant 171 : index
    %191 = memref.load %arg3[%c171] : memref<200xf32, #tpu.memory_space<smem>>
    %c172 = arith.constant 172 : index
    %192 = memref.load %arg3[%c172] : memref<200xf32, #tpu.memory_space<smem>>
    %c173 = arith.constant 173 : index
    %193 = memref.load %arg3[%c173] : memref<200xf32, #tpu.memory_space<smem>>
    %c174 = arith.constant 174 : index
    %194 = memref.load %arg3[%c174] : memref<200xf32, #tpu.memory_space<smem>>
    %c175 = arith.constant 175 : index
    %195 = memref.load %arg3[%c175] : memref<200xf32, #tpu.memory_space<smem>>
    %c176 = arith.constant 176 : index
    %196 = memref.load %arg3[%c176] : memref<200xf32, #tpu.memory_space<smem>>
    %c177 = arith.constant 177 : index
    %197 = memref.load %arg3[%c177] : memref<200xf32, #tpu.memory_space<smem>>
    %c178 = arith.constant 178 : index
    %198 = memref.load %arg3[%c178] : memref<200xf32, #tpu.memory_space<smem>>
    %c179 = arith.constant 179 : index
    %199 = memref.load %arg3[%c179] : memref<200xf32, #tpu.memory_space<smem>>
    %c180 = arith.constant 180 : index
    %200 = memref.load %arg3[%c180] : memref<200xf32, #tpu.memory_space<smem>>
    %c181 = arith.constant 181 : index
    %201 = memref.load %arg3[%c181] : memref<200xf32, #tpu.memory_space<smem>>
    %c182 = arith.constant 182 : index
    %202 = memref.load %arg3[%c182] : memref<200xf32, #tpu.memory_space<smem>>
    %c183 = arith.constant 183 : index
    %203 = memref.load %arg3[%c183] : memref<200xf32, #tpu.memory_space<smem>>
    %c184 = arith.constant 184 : index
    %204 = memref.load %arg3[%c184] : memref<200xf32, #tpu.memory_space<smem>>
    %c185 = arith.constant 185 : index
    %205 = memref.load %arg3[%c185] : memref<200xf32, #tpu.memory_space<smem>>
    %c186 = arith.constant 186 : index
    %206 = memref.load %arg3[%c186] : memref<200xf32, #tpu.memory_space<smem>>
    %c187 = arith.constant 187 : index
    %207 = memref.load %arg3[%c187] : memref<200xf32, #tpu.memory_space<smem>>
    %c188 = arith.constant 188 : index
    %208 = memref.load %arg3[%c188] : memref<200xf32, #tpu.memory_space<smem>>
    %c189 = arith.constant 189 : index
    %209 = memref.load %arg3[%c189] : memref<200xf32, #tpu.memory_space<smem>>
    %c190 = arith.constant 190 : index
    %210 = memref.load %arg3[%c190] : memref<200xf32, #tpu.memory_space<smem>>
    %c191 = arith.constant 191 : index
    %211 = memref.load %arg3[%c191] : memref<200xf32, #tpu.memory_space<smem>>
    %c192 = arith.constant 192 : index
    %212 = memref.load %arg3[%c192] : memref<200xf32, #tpu.memory_space<smem>>
    %c193 = arith.constant 193 : index
    %213 = memref.load %arg3[%c193] : memref<200xf32, #tpu.memory_space<smem>>
    %c194 = arith.constant 194 : index
    %214 = memref.load %arg3[%c194] : memref<200xf32, #tpu.memory_space<smem>>
    %c195 = arith.constant 195 : index
    %215 = memref.load %arg3[%c195] : memref<200xf32, #tpu.memory_space<smem>>
    %c196 = arith.constant 196 : index
    %216 = memref.load %arg3[%c196] : memref<200xf32, #tpu.memory_space<smem>>
    %c197 = arith.constant 197 : index
    %217 = memref.load %arg3[%c197] : memref<200xf32, #tpu.memory_space<smem>>
    %c198 = arith.constant 198 : index
    %218 = memref.load %arg3[%c198] : memref<200xf32, #tpu.memory_space<smem>>
    %c199 = arith.constant 199 : index
    %219 = memref.load %arg3[%c199] : memref<200xf32, #tpu.memory_space<smem>>
    %c0_20 = arith.constant 0 : index
    %220 = memref.load %arg4[%c0_20] : memref<20xf32, #tpu.memory_space<smem>>
    %c1_21 = arith.constant 1 : index
    %221 = memref.load %arg4[%c1_21] : memref<20xf32, #tpu.memory_space<smem>>
    %c2_22 = arith.constant 2 : index
    %222 = memref.load %arg4[%c2_22] : memref<20xf32, #tpu.memory_space<smem>>
    %c3_23 = arith.constant 3 : index
    %223 = memref.load %arg4[%c3_23] : memref<20xf32, #tpu.memory_space<smem>>
    %c4_24 = arith.constant 4 : index
    %224 = memref.load %arg4[%c4_24] : memref<20xf32, #tpu.memory_space<smem>>
    %c5_25 = arith.constant 5 : index
    %225 = memref.load %arg4[%c5_25] : memref<20xf32, #tpu.memory_space<smem>>
    %c6_26 = arith.constant 6 : index
    %226 = memref.load %arg4[%c6_26] : memref<20xf32, #tpu.memory_space<smem>>
    %c7_27 = arith.constant 7 : index
    %227 = memref.load %arg4[%c7_27] : memref<20xf32, #tpu.memory_space<smem>>
    %c8_28 = arith.constant 8 : index
    %228 = memref.load %arg4[%c8_28] : memref<20xf32, #tpu.memory_space<smem>>
    %c9_29 = arith.constant 9 : index
    %229 = memref.load %arg4[%c9_29] : memref<20xf32, #tpu.memory_space<smem>>
    %c10_30 = arith.constant 10 : index
    %230 = memref.load %arg4[%c10_30] : memref<20xf32, #tpu.memory_space<smem>>
    %c11_31 = arith.constant 11 : index
    %231 = memref.load %arg4[%c11_31] : memref<20xf32, #tpu.memory_space<smem>>
    %c12_32 = arith.constant 12 : index
    %232 = memref.load %arg4[%c12_32] : memref<20xf32, #tpu.memory_space<smem>>
    %c13_33 = arith.constant 13 : index
    %233 = memref.load %arg4[%c13_33] : memref<20xf32, #tpu.memory_space<smem>>
    %c14_34 = arith.constant 14 : index
    %234 = memref.load %arg4[%c14_34] : memref<20xf32, #tpu.memory_space<smem>>
    %c15_35 = arith.constant 15 : index
    %235 = memref.load %arg4[%c15_35] : memref<20xf32, #tpu.memory_space<smem>>
    %c16_36 = arith.constant 16 : index
    %236 = memref.load %arg4[%c16_36] : memref<20xf32, #tpu.memory_space<smem>>
    %c17_37 = arith.constant 17 : index
    %237 = memref.load %arg4[%c17_37] : memref<20xf32, #tpu.memory_space<smem>>
    %c18_38 = arith.constant 18 : index
    %238 = memref.load %arg4[%c18_38] : memref<20xf32, #tpu.memory_space<smem>>
    %c19_39 = arith.constant 19 : index
    %239 = memref.load %arg4[%c19_39] : memref<20xf32, #tpu.memory_space<smem>>
    %c0_40 = arith.constant 0 : index
    %240 = memref.load %arg5[%c0_40] : memref<40xf32, #tpu.memory_space<smem>>
    %c1_41 = arith.constant 1 : index
    %241 = memref.load %arg5[%c1_41] : memref<40xf32, #tpu.memory_space<smem>>
    %c2_42 = arith.constant 2 : index
    %242 = memref.load %arg5[%c2_42] : memref<40xf32, #tpu.memory_space<smem>>
    %c3_43 = arith.constant 3 : index
    %243 = memref.load %arg5[%c3_43] : memref<40xf32, #tpu.memory_space<smem>>
    %c4_44 = arith.constant 4 : index
    %244 = memref.load %arg5[%c4_44] : memref<40xf32, #tpu.memory_space<smem>>
    %c5_45 = arith.constant 5 : index
    %245 = memref.load %arg5[%c5_45] : memref<40xf32, #tpu.memory_space<smem>>
    %c6_46 = arith.constant 6 : index
    %246 = memref.load %arg5[%c6_46] : memref<40xf32, #tpu.memory_space<smem>>
    %c7_47 = arith.constant 7 : index
    %247 = memref.load %arg5[%c7_47] : memref<40xf32, #tpu.memory_space<smem>>
    %c8_48 = arith.constant 8 : index
    %248 = memref.load %arg5[%c8_48] : memref<40xf32, #tpu.memory_space<smem>>
    %c9_49 = arith.constant 9 : index
    %249 = memref.load %arg5[%c9_49] : memref<40xf32, #tpu.memory_space<smem>>
    %c10_50 = arith.constant 10 : index
    %250 = memref.load %arg5[%c10_50] : memref<40xf32, #tpu.memory_space<smem>>
    %c11_51 = arith.constant 11 : index
    %251 = memref.load %arg5[%c11_51] : memref<40xf32, #tpu.memory_space<smem>>
    %c12_52 = arith.constant 12 : index
    %252 = memref.load %arg5[%c12_52] : memref<40xf32, #tpu.memory_space<smem>>
    %c13_53 = arith.constant 13 : index
    %253 = memref.load %arg5[%c13_53] : memref<40xf32, #tpu.memory_space<smem>>
    %c14_54 = arith.constant 14 : index
    %254 = memref.load %arg5[%c14_54] : memref<40xf32, #tpu.memory_space<smem>>
    %c15_55 = arith.constant 15 : index
    %255 = memref.load %arg5[%c15_55] : memref<40xf32, #tpu.memory_space<smem>>
    %c16_56 = arith.constant 16 : index
    %256 = memref.load %arg5[%c16_56] : memref<40xf32, #tpu.memory_space<smem>>
    %c17_57 = arith.constant 17 : index
    %257 = memref.load %arg5[%c17_57] : memref<40xf32, #tpu.memory_space<smem>>
    %c18_58 = arith.constant 18 : index
    %258 = memref.load %arg5[%c18_58] : memref<40xf32, #tpu.memory_space<smem>>
    %c19_59 = arith.constant 19 : index
    %259 = memref.load %arg5[%c19_59] : memref<40xf32, #tpu.memory_space<smem>>
    %c20_60 = arith.constant 20 : index
    %260 = memref.load %arg5[%c20_60] : memref<40xf32, #tpu.memory_space<smem>>
    %c21_61 = arith.constant 21 : index
    %261 = memref.load %arg5[%c21_61] : memref<40xf32, #tpu.memory_space<smem>>
    %c22_62 = arith.constant 22 : index
    %262 = memref.load %arg5[%c22_62] : memref<40xf32, #tpu.memory_space<smem>>
    %c23_63 = arith.constant 23 : index
    %263 = memref.load %arg5[%c23_63] : memref<40xf32, #tpu.memory_space<smem>>
    %c24_64 = arith.constant 24 : index
    %264 = memref.load %arg5[%c24_64] : memref<40xf32, #tpu.memory_space<smem>>
    %c25_65 = arith.constant 25 : index
    %265 = memref.load %arg5[%c25_65] : memref<40xf32, #tpu.memory_space<smem>>
    %c26_66 = arith.constant 26 : index
    %266 = memref.load %arg5[%c26_66] : memref<40xf32, #tpu.memory_space<smem>>
    %c27_67 = arith.constant 27 : index
    %267 = memref.load %arg5[%c27_67] : memref<40xf32, #tpu.memory_space<smem>>
    %c28_68 = arith.constant 28 : index
    %268 = memref.load %arg5[%c28_68] : memref<40xf32, #tpu.memory_space<smem>>
    %c29_69 = arith.constant 29 : index
    %269 = memref.load %arg5[%c29_69] : memref<40xf32, #tpu.memory_space<smem>>
    %c30_70 = arith.constant 30 : index
    %270 = memref.load %arg5[%c30_70] : memref<40xf32, #tpu.memory_space<smem>>
    %c31_71 = arith.constant 31 : index
    %271 = memref.load %arg5[%c31_71] : memref<40xf32, #tpu.memory_space<smem>>
    %c32_72 = arith.constant 32 : index
    %272 = memref.load %arg5[%c32_72] : memref<40xf32, #tpu.memory_space<smem>>
    %c33_73 = arith.constant 33 : index
    %273 = memref.load %arg5[%c33_73] : memref<40xf32, #tpu.memory_space<smem>>
    %c34_74 = arith.constant 34 : index
    %274 = memref.load %arg5[%c34_74] : memref<40xf32, #tpu.memory_space<smem>>
    %c35_75 = arith.constant 35 : index
    %275 = memref.load %arg5[%c35_75] : memref<40xf32, #tpu.memory_space<smem>>
    %c36_76 = arith.constant 36 : index
    %276 = memref.load %arg5[%c36_76] : memref<40xf32, #tpu.memory_space<smem>>
    %c37_77 = arith.constant 37 : index
    %277 = memref.load %arg5[%c37_77] : memref<40xf32, #tpu.memory_space<smem>>
    %c38_78 = arith.constant 38 : index
    %278 = memref.load %arg5[%c38_78] : memref<40xf32, #tpu.memory_space<smem>>
    %c39_79 = arith.constant 39 : index
    %279 = memref.load %arg5[%c39_79] : memref<40xf32, #tpu.memory_space<smem>>
    %c0_80 = arith.constant 0 : index
    %280 = memref.load %arg6[%c0_80] : memref<2xf32, #tpu.memory_space<smem>>
    %c1_81 = arith.constant 1 : index
    %281 = memref.load %arg6[%c1_81] : memref<2xf32, #tpu.memory_space<smem>>
    %c0_i32 = arith.constant 0 : i32
    %c16_i32 = arith.constant 16 : i32
    %282 = arith.muli %c0_i32, %c16_i32 : i32
    %283 = tpu.assume_multiple %282, 16 : i32
    %284 = arith.index_cast %283 : i32 to index
    %c0_82 = arith.constant 0 : index
    %285 = vector.load %arg7[%284, %c0_82] : memref<16x128xf32, #tpu.memory_space<vmem>>, vector<16x128xf32>
    %286 = vector.broadcast %0 : f32 to vector<16x128xf32>
    %287 = arith.mulf %285, %286 : vector<16x128xf32>
    %288 = vector.broadcast %10 : f32 to vector<16x128xf32>
    %289 = arith.addf %287, %288 : vector<16x128xf32>
    %290 = math.tanh %289 : vector<16x128xf32>
    %291 = vector.broadcast %20 : f32 to vector<16x128xf32>
    %292 = arith.mulf %290, %291 : vector<16x128xf32>
    %293 = vector.broadcast %220 : f32 to vector<16x128xf32>
    %294 = arith.addf %292, %293 : vector<16x128xf32>
    %295 = vector.broadcast %21 : f32 to vector<16x128xf32>
    %296 = arith.mulf %290, %295 : vector<16x128xf32>
    %297 = vector.broadcast %221 : f32 to vector<16x128xf32>
    %298 = arith.addf %296, %297 : vector<16x128xf32>
    %299 = vector.broadcast %22 : f32 to vector<16x128xf32>
    %300 = arith.mulf %290, %299 : vector<16x128xf32>
    %301 = vector.broadcast %222 : f32 to vector<16x128xf32>
    %302 = arith.addf %300, %301 : vector<16x128xf32>
    %303 = vector.broadcast %23 : f32 to vector<16x128xf32>
    %304 = arith.mulf %290, %303 : vector<16x128xf32>
    %305 = vector.broadcast %223 : f32 to vector<16x128xf32>
    %306 = arith.addf %304, %305 : vector<16x128xf32>
    %307 = vector.broadcast %24 : f32 to vector<16x128xf32>
    %308 = arith.mulf %290, %307 : vector<16x128xf32>
    %309 = vector.broadcast %224 : f32 to vector<16x128xf32>
    %310 = arith.addf %308, %309 : vector<16x128xf32>
    %311 = vector.broadcast %25 : f32 to vector<16x128xf32>
    %312 = arith.mulf %290, %311 : vector<16x128xf32>
    %313 = vector.broadcast %225 : f32 to vector<16x128xf32>
    %314 = arith.addf %312, %313 : vector<16x128xf32>
    %315 = vector.broadcast %26 : f32 to vector<16x128xf32>
    %316 = arith.mulf %290, %315 : vector<16x128xf32>
    %317 = vector.broadcast %226 : f32 to vector<16x128xf32>
    %318 = arith.addf %316, %317 : vector<16x128xf32>
    %319 = vector.broadcast %27 : f32 to vector<16x128xf32>
    %320 = arith.mulf %290, %319 : vector<16x128xf32>
    %321 = vector.broadcast %227 : f32 to vector<16x128xf32>
    %322 = arith.addf %320, %321 : vector<16x128xf32>
    %323 = vector.broadcast %28 : f32 to vector<16x128xf32>
    %324 = arith.mulf %290, %323 : vector<16x128xf32>
    %325 = vector.broadcast %228 : f32 to vector<16x128xf32>
    %326 = arith.addf %324, %325 : vector<16x128xf32>
    %327 = vector.broadcast %29 : f32 to vector<16x128xf32>
    %328 = arith.mulf %290, %327 : vector<16x128xf32>
    %329 = vector.broadcast %229 : f32 to vector<16x128xf32>
    %330 = arith.addf %328, %329 : vector<16x128xf32>
    %331 = vector.broadcast %30 : f32 to vector<16x128xf32>
    %332 = arith.mulf %290, %331 : vector<16x128xf32>
    %333 = vector.broadcast %230 : f32 to vector<16x128xf32>
    %334 = arith.addf %332, %333 : vector<16x128xf32>
    %335 = vector.broadcast %31 : f32 to vector<16x128xf32>
    %336 = arith.mulf %290, %335 : vector<16x128xf32>
    %337 = vector.broadcast %231 : f32 to vector<16x128xf32>
    %338 = arith.addf %336, %337 : vector<16x128xf32>
    %339 = vector.broadcast %32 : f32 to vector<16x128xf32>
    %340 = arith.mulf %290, %339 : vector<16x128xf32>
    %341 = vector.broadcast %232 : f32 to vector<16x128xf32>
    %342 = arith.addf %340, %341 : vector<16x128xf32>
    %343 = vector.broadcast %33 : f32 to vector<16x128xf32>
    %344 = arith.mulf %290, %343 : vector<16x128xf32>
    %345 = vector.broadcast %233 : f32 to vector<16x128xf32>
    %346 = arith.addf %344, %345 : vector<16x128xf32>
    %347 = vector.broadcast %34 : f32 to vector<16x128xf32>
    %348 = arith.mulf %290, %347 : vector<16x128xf32>
    %349 = vector.broadcast %234 : f32 to vector<16x128xf32>
    %350 = arith.addf %348, %349 : vector<16x128xf32>
    %351 = vector.broadcast %35 : f32 to vector<16x128xf32>
    %352 = arith.mulf %290, %351 : vector<16x128xf32>
    %353 = vector.broadcast %235 : f32 to vector<16x128xf32>
    %354 = arith.addf %352, %353 : vector<16x128xf32>
    %355 = vector.broadcast %36 : f32 to vector<16x128xf32>
    %356 = arith.mulf %290, %355 : vector<16x128xf32>
    %357 = vector.broadcast %236 : f32 to vector<16x128xf32>
    %358 = arith.addf %356, %357 : vector<16x128xf32>
    %359 = vector.broadcast %37 : f32 to vector<16x128xf32>
    %360 = arith.mulf %290, %359 : vector<16x128xf32>
    %361 = vector.broadcast %237 : f32 to vector<16x128xf32>
    %362 = arith.addf %360, %361 : vector<16x128xf32>
    %363 = vector.broadcast %38 : f32 to vector<16x128xf32>
    %364 = arith.mulf %290, %363 : vector<16x128xf32>
    %365 = vector.broadcast %238 : f32 to vector<16x128xf32>
    %366 = arith.addf %364, %365 : vector<16x128xf32>
    %367 = vector.broadcast %39 : f32 to vector<16x128xf32>
    %368 = arith.mulf %290, %367 : vector<16x128xf32>
    %369 = vector.broadcast %239 : f32 to vector<16x128xf32>
    %370 = arith.addf %368, %369 : vector<16x128xf32>
    %371 = vector.broadcast %1 : f32 to vector<16x128xf32>
    %372 = arith.mulf %285, %371 : vector<16x128xf32>
    %373 = vector.broadcast %11 : f32 to vector<16x128xf32>
    %374 = arith.addf %372, %373 : vector<16x128xf32>
    %375 = math.tanh %374 : vector<16x128xf32>
    %376 = vector.broadcast %40 : f32 to vector<16x128xf32>
    %377 = arith.mulf %375, %376 : vector<16x128xf32>
    %378 = arith.addf %294, %377 : vector<16x128xf32>
    %379 = vector.broadcast %41 : f32 to vector<16x128xf32>
    %380 = arith.mulf %375, %379 : vector<16x128xf32>
    %381 = arith.addf %298, %380 : vector<16x128xf32>
    %382 = vector.broadcast %42 : f32 to vector<16x128xf32>
    %383 = arith.mulf %375, %382 : vector<16x128xf32>
    %384 = arith.addf %302, %383 : vector<16x128xf32>
    %385 = vector.broadcast %43 : f32 to vector<16x128xf32>
    %386 = arith.mulf %375, %385 : vector<16x128xf32>
    %387 = arith.addf %306, %386 : vector<16x128xf32>
    %388 = vector.broadcast %44 : f32 to vector<16x128xf32>
    %389 = arith.mulf %375, %388 : vector<16x128xf32>
    %390 = arith.addf %310, %389 : vector<16x128xf32>
    %391 = vector.broadcast %45 : f32 to vector<16x128xf32>
    %392 = arith.mulf %375, %391 : vector<16x128xf32>
    %393 = arith.addf %314, %392 : vector<16x128xf32>
    %394 = vector.broadcast %46 : f32 to vector<16x128xf32>
    %395 = arith.mulf %375, %394 : vector<16x128xf32>
    %396 = arith.addf %318, %395 : vector<16x128xf32>
    %397 = vector.broadcast %47 : f32 to vector<16x128xf32>
    %398 = arith.mulf %375, %397 : vector<16x128xf32>
    %399 = arith.addf %322, %398 : vector<16x128xf32>
    %400 = vector.broadcast %48 : f32 to vector<16x128xf32>
    %401 = arith.mulf %375, %400 : vector<16x128xf32>
    %402 = arith.addf %326, %401 : vector<16x128xf32>
    %403 = vector.broadcast %49 : f32 to vector<16x128xf32>
    %404 = arith.mulf %375, %403 : vector<16x128xf32>
    %405 = arith.addf %330, %404 : vector<16x128xf32>
    %406 = vector.broadcast %50 : f32 to vector<16x128xf32>
    %407 = arith.mulf %375, %406 : vector<16x128xf32>
    %408 = arith.addf %334, %407 : vector<16x128xf32>
    %409 = vector.broadcast %51 : f32 to vector<16x128xf32>
    %410 = arith.mulf %375, %409 : vector<16x128xf32>
    %411 = arith.addf %338, %410 : vector<16x128xf32>
    %412 = vector.broadcast %52 : f32 to vector<16x128xf32>
    %413 = arith.mulf %375, %412 : vector<16x128xf32>
    %414 = arith.addf %342, %413 : vector<16x128xf32>
    %415 = vector.broadcast %53 : f32 to vector<16x128xf32>
    %416 = arith.mulf %375, %415 : vector<16x128xf32>
    %417 = arith.addf %346, %416 : vector<16x128xf32>
    %418 = vector.broadcast %54 : f32 to vector<16x128xf32>
    %419 = arith.mulf %375, %418 : vector<16x128xf32>
    %420 = arith.addf %350, %419 : vector<16x128xf32>
    %421 = vector.broadcast %55 : f32 to vector<16x128xf32>
    %422 = arith.mulf %375, %421 : vector<16x128xf32>
    %423 = arith.addf %354, %422 : vector<16x128xf32>
    %424 = vector.broadcast %56 : f32 to vector<16x128xf32>
    %425 = arith.mulf %375, %424 : vector<16x128xf32>
    %426 = arith.addf %358, %425 : vector<16x128xf32>
    %427 = vector.broadcast %57 : f32 to vector<16x128xf32>
    %428 = arith.mulf %375, %427 : vector<16x128xf32>
    %429 = arith.addf %362, %428 : vector<16x128xf32>
    %430 = vector.broadcast %58 : f32 to vector<16x128xf32>
    %431 = arith.mulf %375, %430 : vector<16x128xf32>
    %432 = arith.addf %366, %431 : vector<16x128xf32>
    %433 = vector.broadcast %59 : f32 to vector<16x128xf32>
    %434 = arith.mulf %375, %433 : vector<16x128xf32>
    %435 = arith.addf %370, %434 : vector<16x128xf32>
    %436 = vector.broadcast %2 : f32 to vector<16x128xf32>
    %437 = arith.mulf %285, %436 : vector<16x128xf32>
    %438 = vector.broadcast %12 : f32 to vector<16x128xf32>
    %439 = arith.addf %437, %438 : vector<16x128xf32>
    %440 = math.tanh %439 : vector<16x128xf32>
    %441 = vector.broadcast %60 : f32 to vector<16x128xf32>
    %442 = arith.mulf %440, %441 : vector<16x128xf32>
    %443 = arith.addf %378, %442 : vector<16x128xf32>
    %444 = vector.broadcast %61 : f32 to vector<16x128xf32>
    %445 = arith.mulf %440, %444 : vector<16x128xf32>
    %446 = arith.addf %381, %445 : vector<16x128xf32>
    %447 = vector.broadcast %62 : f32 to vector<16x128xf32>
    %448 = arith.mulf %440, %447 : vector<16x128xf32>
    %449 = arith.addf %384, %448 : vector<16x128xf32>
    %450 = vector.broadcast %63 : f32 to vector<16x128xf32>
    %451 = arith.mulf %440, %450 : vector<16x128xf32>
    %452 = arith.addf %387, %451 : vector<16x128xf32>
    %453 = vector.broadcast %64 : f32 to vector<16x128xf32>
    %454 = arith.mulf %440, %453 : vector<16x128xf32>
    %455 = arith.addf %390, %454 : vector<16x128xf32>
    %456 = vector.broadcast %65 : f32 to vector<16x128xf32>
    %457 = arith.mulf %440, %456 : vector<16x128xf32>
    %458 = arith.addf %393, %457 : vector<16x128xf32>
    %459 = vector.broadcast %66 : f32 to vector<16x128xf32>
    %460 = arith.mulf %440, %459 : vector<16x128xf32>
    %461 = arith.addf %396, %460 : vector<16x128xf32>
    %462 = vector.broadcast %67 : f32 to vector<16x128xf32>
    %463 = arith.mulf %440, %462 : vector<16x128xf32>
    %464 = arith.addf %399, %463 : vector<16x128xf32>
    %465 = vector.broadcast %68 : f32 to vector<16x128xf32>
    %466 = arith.mulf %440, %465 : vector<16x128xf32>
    %467 = arith.addf %402, %466 : vector<16x128xf32>
    %468 = vector.broadcast %69 : f32 to vector<16x128xf32>
    %469 = arith.mulf %440, %468 : vector<16x128xf32>
    %470 = arith.addf %405, %469 : vector<16x128xf32>
    %471 = vector.broadcast %70 : f32 to vector<16x128xf32>
    %472 = arith.mulf %440, %471 : vector<16x128xf32>
    %473 = arith.addf %408, %472 : vector<16x128xf32>
    %474 = vector.broadcast %71 : f32 to vector<16x128xf32>
    %475 = arith.mulf %440, %474 : vector<16x128xf32>
    %476 = arith.addf %411, %475 : vector<16x128xf32>
    %477 = vector.broadcast %72 : f32 to vector<16x128xf32>
    %478 = arith.mulf %440, %477 : vector<16x128xf32>
    %479 = arith.addf %414, %478 : vector<16x128xf32>
    %480 = vector.broadcast %73 : f32 to vector<16x128xf32>
    %481 = arith.mulf %440, %480 : vector<16x128xf32>
    %482 = arith.addf %417, %481 : vector<16x128xf32>
    %483 = vector.broadcast %74 : f32 to vector<16x128xf32>
    %484 = arith.mulf %440, %483 : vector<16x128xf32>
    %485 = arith.addf %420, %484 : vector<16x128xf32>
    %486 = vector.broadcast %75 : f32 to vector<16x128xf32>
    %487 = arith.mulf %440, %486 : vector<16x128xf32>
    %488 = arith.addf %423, %487 : vector<16x128xf32>
    %489 = vector.broadcast %76 : f32 to vector<16x128xf32>
    %490 = arith.mulf %440, %489 : vector<16x128xf32>
    %491 = arith.addf %426, %490 : vector<16x128xf32>
    %492 = vector.broadcast %77 : f32 to vector<16x128xf32>
    %493 = arith.mulf %440, %492 : vector<16x128xf32>
    %494 = arith.addf %429, %493 : vector<16x128xf32>
    %495 = vector.broadcast %78 : f32 to vector<16x128xf32>
    %496 = arith.mulf %440, %495 : vector<16x128xf32>
    %497 = arith.addf %432, %496 : vector<16x128xf32>
    %498 = vector.broadcast %79 : f32 to vector<16x128xf32>
    %499 = arith.mulf %440, %498 : vector<16x128xf32>
    %500 = arith.addf %435, %499 : vector<16x128xf32>
    %501 = vector.broadcast %3 : f32 to vector<16x128xf32>
    %502 = arith.mulf %285, %501 : vector<16x128xf32>
    %503 = vector.broadcast %13 : f32 to vector<16x128xf32>
    %504 = arith.addf %502, %503 : vector<16x128xf32>
    %505 = math.tanh %504 : vector<16x128xf32>
    %506 = vector.broadcast %80 : f32 to vector<16x128xf32>
    %507 = arith.mulf %505, %506 : vector<16x128xf32>
    %508 = arith.addf %443, %507 : vector<16x128xf32>
    %509 = vector.broadcast %81 : f32 to vector<16x128xf32>
    %510 = arith.mulf %505, %509 : vector<16x128xf32>
    %511 = arith.addf %446, %510 : vector<16x128xf32>
    %512 = vector.broadcast %82 : f32 to vector<16x128xf32>
    %513 = arith.mulf %505, %512 : vector<16x128xf32>
    %514 = arith.addf %449, %513 : vector<16x128xf32>
    %515 = vector.broadcast %83 : f32 to vector<16x128xf32>
    %516 = arith.mulf %505, %515 : vector<16x128xf32>
    %517 = arith.addf %452, %516 : vector<16x128xf32>
    %518 = vector.broadcast %84 : f32 to vector<16x128xf32>
    %519 = arith.mulf %505, %518 : vector<16x128xf32>
    %520 = arith.addf %455, %519 : vector<16x128xf32>
    %521 = vector.broadcast %85 : f32 to vector<16x128xf32>
    %522 = arith.mulf %505, %521 : vector<16x128xf32>
    %523 = arith.addf %458, %522 : vector<16x128xf32>
    %524 = vector.broadcast %86 : f32 to vector<16x128xf32>
    %525 = arith.mulf %505, %524 : vector<16x128xf32>
    %526 = arith.addf %461, %525 : vector<16x128xf32>
    %527 = vector.broadcast %87 : f32 to vector<16x128xf32>
    %528 = arith.mulf %505, %527 : vector<16x128xf32>
    %529 = arith.addf %464, %528 : vector<16x128xf32>
    %530 = vector.broadcast %88 : f32 to vector<16x128xf32>
    %531 = arith.mulf %505, %530 : vector<16x128xf32>
    %532 = arith.addf %467, %531 : vector<16x128xf32>
    %533 = vector.broadcast %89 : f32 to vector<16x128xf32>
    %534 = arith.mulf %505, %533 : vector<16x128xf32>
    %535 = arith.addf %470, %534 : vector<16x128xf32>
    %536 = vector.broadcast %90 : f32 to vector<16x128xf32>
    %537 = arith.mulf %505, %536 : vector<16x128xf32>
    %538 = arith.addf %473, %537 : vector<16x128xf32>
    %539 = vector.broadcast %91 : f32 to vector<16x128xf32>
    %540 = arith.mulf %505, %539 : vector<16x128xf32>
    %541 = arith.addf %476, %540 : vector<16x128xf32>
    %542 = vector.broadcast %92 : f32 to vector<16x128xf32>
    %543 = arith.mulf %505, %542 : vector<16x128xf32>
    %544 = arith.addf %479, %543 : vector<16x128xf32>
    %545 = vector.broadcast %93 : f32 to vector<16x128xf32>
    %546 = arith.mulf %505, %545 : vector<16x128xf32>
    %547 = arith.addf %482, %546 : vector<16x128xf32>
    %548 = vector.broadcast %94 : f32 to vector<16x128xf32>
    %549 = arith.mulf %505, %548 : vector<16x128xf32>
    %550 = arith.addf %485, %549 : vector<16x128xf32>
    %551 = vector.broadcast %95 : f32 to vector<16x128xf32>
    %552 = arith.mulf %505, %551 : vector<16x128xf32>
    %553 = arith.addf %488, %552 : vector<16x128xf32>
    %554 = vector.broadcast %96 : f32 to vector<16x128xf32>
    %555 = arith.mulf %505, %554 : vector<16x128xf32>
    %556 = arith.addf %491, %555 : vector<16x128xf32>
    %557 = vector.broadcast %97 : f32 to vector<16x128xf32>
    %558 = arith.mulf %505, %557 : vector<16x128xf32>
    %559 = arith.addf %494, %558 : vector<16x128xf32>
    %560 = vector.broadcast %98 : f32 to vector<16x128xf32>
    %561 = arith.mulf %505, %560 : vector<16x128xf32>
    %562 = arith.addf %497, %561 : vector<16x128xf32>
    %563 = vector.broadcast %99 : f32 to vector<16x128xf32>
    %564 = arith.mulf %505, %563 : vector<16x128xf32>
    %565 = arith.addf %500, %564 : vector<16x128xf32>
    %566 = vector.broadcast %4 : f32 to vector<16x128xf32>
    %567 = arith.mulf %285, %566 : vector<16x128xf32>
    %568 = vector.broadcast %14 : f32 to vector<16x128xf32>
    %569 = arith.addf %567, %568 : vector<16x128xf32>
    %570 = math.tanh %569 : vector<16x128xf32>
    %571 = vector.broadcast %100 : f32 to vector<16x128xf32>
    %572 = arith.mulf %570, %571 : vector<16x128xf32>
    %573 = arith.addf %508, %572 : vector<16x128xf32>
    %574 = vector.broadcast %101 : f32 to vector<16x128xf32>
    %575 = arith.mulf %570, %574 : vector<16x128xf32>
    %576 = arith.addf %511, %575 : vector<16x128xf32>
    %577 = vector.broadcast %102 : f32 to vector<16x128xf32>
    %578 = arith.mulf %570, %577 : vector<16x128xf32>
    %579 = arith.addf %514, %578 : vector<16x128xf32>
    %580 = vector.broadcast %103 : f32 to vector<16x128xf32>
    %581 = arith.mulf %570, %580 : vector<16x128xf32>
    %582 = arith.addf %517, %581 : vector<16x128xf32>
    %583 = vector.broadcast %104 : f32 to vector<16x128xf32>
    %584 = arith.mulf %570, %583 : vector<16x128xf32>
    %585 = arith.addf %520, %584 : vector<16x128xf32>
    %586 = vector.broadcast %105 : f32 to vector<16x128xf32>
    %587 = arith.mulf %570, %586 : vector<16x128xf32>
    %588 = arith.addf %523, %587 : vector<16x128xf32>
    %589 = vector.broadcast %106 : f32 to vector<16x128xf32>
    %590 = arith.mulf %570, %589 : vector<16x128xf32>
    %591 = arith.addf %526, %590 : vector<16x128xf32>
    %592 = vector.broadcast %107 : f32 to vector<16x128xf32>
    %593 = arith.mulf %570, %592 : vector<16x128xf32>
    %594 = arith.addf %529, %593 : vector<16x128xf32>
    %595 = vector.broadcast %108 : f32 to vector<16x128xf32>
    %596 = arith.mulf %570, %595 : vector<16x128xf32>
    %597 = arith.addf %532, %596 : vector<16x128xf32>
    %598 = vector.broadcast %109 : f32 to vector<16x128xf32>
    %599 = arith.mulf %570, %598 : vector<16x128xf32>
    %600 = arith.addf %535, %599 : vector<16x128xf32>
    %601 = vector.broadcast %110 : f32 to vector<16x128xf32>
    %602 = arith.mulf %570, %601 : vector<16x128xf32>
    %603 = arith.addf %538, %602 : vector<16x128xf32>
    %604 = vector.broadcast %111 : f32 to vector<16x128xf32>
    %605 = arith.mulf %570, %604 : vector<16x128xf32>
    %606 = arith.addf %541, %605 : vector<16x128xf32>
    %607 = vector.broadcast %112 : f32 to vector<16x128xf32>
    %608 = arith.mulf %570, %607 : vector<16x128xf32>
    %609 = arith.addf %544, %608 : vector<16x128xf32>
    %610 = vector.broadcast %113 : f32 to vector<16x128xf32>
    %611 = arith.mulf %570, %610 : vector<16x128xf32>
    %612 = arith.addf %547, %611 : vector<16x128xf32>
    %613 = vector.broadcast %114 : f32 to vector<16x128xf32>
    %614 = arith.mulf %570, %613 : vector<16x128xf32>
    %615 = arith.addf %550, %614 : vector<16x128xf32>
    %616 = vector.broadcast %115 : f32 to vector<16x128xf32>
    %617 = arith.mulf %570, %616 : vector<16x128xf32>
    %618 = arith.addf %553, %617 : vector<16x128xf32>
    %619 = vector.broadcast %116 : f32 to vector<16x128xf32>
    %620 = arith.mulf %570, %619 : vector<16x128xf32>
    %621 = arith.addf %556, %620 : vector<16x128xf32>
    %622 = vector.broadcast %117 : f32 to vector<16x128xf32>
    %623 = arith.mulf %570, %622 : vector<16x128xf32>
    %624 = arith.addf %559, %623 : vector<16x128xf32>
    %625 = vector.broadcast %118 : f32 to vector<16x128xf32>
    %626 = arith.mulf %570, %625 : vector<16x128xf32>
    %627 = arith.addf %562, %626 : vector<16x128xf32>
    %628 = vector.broadcast %119 : f32 to vector<16x128xf32>
    %629 = arith.mulf %570, %628 : vector<16x128xf32>
    %630 = arith.addf %565, %629 : vector<16x128xf32>
    %631 = vector.broadcast %5 : f32 to vector<16x128xf32>
    %632 = arith.mulf %285, %631 : vector<16x128xf32>
    %633 = vector.broadcast %15 : f32 to vector<16x128xf32>
    %634 = arith.addf %632, %633 : vector<16x128xf32>
    %635 = math.tanh %634 : vector<16x128xf32>
    %636 = vector.broadcast %120 : f32 to vector<16x128xf32>
    %637 = arith.mulf %635, %636 : vector<16x128xf32>
    %638 = arith.addf %573, %637 : vector<16x128xf32>
    %639 = vector.broadcast %121 : f32 to vector<16x128xf32>
    %640 = arith.mulf %635, %639 : vector<16x128xf32>
    %641 = arith.addf %576, %640 : vector<16x128xf32>
    %642 = vector.broadcast %122 : f32 to vector<16x128xf32>
    %643 = arith.mulf %635, %642 : vector<16x128xf32>
    %644 = arith.addf %579, %643 : vector<16x128xf32>
    %645 = vector.broadcast %123 : f32 to vector<16x128xf32>
    %646 = arith.mulf %635, %645 : vector<16x128xf32>
    %647 = arith.addf %582, %646 : vector<16x128xf32>
    %648 = vector.broadcast %124 : f32 to vector<16x128xf32>
    %649 = arith.mulf %635, %648 : vector<16x128xf32>
    %650 = arith.addf %585, %649 : vector<16x128xf32>
    %651 = vector.broadcast %125 : f32 to vector<16x128xf32>
    %652 = arith.mulf %635, %651 : vector<16x128xf32>
    %653 = arith.addf %588, %652 : vector<16x128xf32>
    %654 = vector.broadcast %126 : f32 to vector<16x128xf32>
    %655 = arith.mulf %635, %654 : vector<16x128xf32>
    %656 = arith.addf %591, %655 : vector<16x128xf32>
    %657 = vector.broadcast %127 : f32 to vector<16x128xf32>
    %658 = arith.mulf %635, %657 : vector<16x128xf32>
    %659 = arith.addf %594, %658 : vector<16x128xf32>
    %660 = vector.broadcast %128 : f32 to vector<16x128xf32>
    %661 = arith.mulf %635, %660 : vector<16x128xf32>
    %662 = arith.addf %597, %661 : vector<16x128xf32>
    %663 = vector.broadcast %129 : f32 to vector<16x128xf32>
    %664 = arith.mulf %635, %663 : vector<16x128xf32>
    %665 = arith.addf %600, %664 : vector<16x128xf32>
    %666 = vector.broadcast %130 : f32 to vector<16x128xf32>
    %667 = arith.mulf %635, %666 : vector<16x128xf32>
    %668 = arith.addf %603, %667 : vector<16x128xf32>
    %669 = vector.broadcast %131 : f32 to vector<16x128xf32>
    %670 = arith.mulf %635, %669 : vector<16x128xf32>
    %671 = arith.addf %606, %670 : vector<16x128xf32>
    %672 = vector.broadcast %132 : f32 to vector<16x128xf32>
    %673 = arith.mulf %635, %672 : vector<16x128xf32>
    %674 = arith.addf %609, %673 : vector<16x128xf32>
    %675 = vector.broadcast %133 : f32 to vector<16x128xf32>
    %676 = arith.mulf %635, %675 : vector<16x128xf32>
    %677 = arith.addf %612, %676 : vector<16x128xf32>
    %678 = vector.broadcast %134 : f32 to vector<16x128xf32>
    %679 = arith.mulf %635, %678 : vector<16x128xf32>
    %680 = arith.addf %615, %679 : vector<16x128xf32>
    %681 = vector.broadcast %135 : f32 to vector<16x128xf32>
    %682 = arith.mulf %635, %681 : vector<16x128xf32>
    %683 = arith.addf %618, %682 : vector<16x128xf32>
    %684 = vector.broadcast %136 : f32 to vector<16x128xf32>
    %685 = arith.mulf %635, %684 : vector<16x128xf32>
    %686 = arith.addf %621, %685 : vector<16x128xf32>
    %687 = vector.broadcast %137 : f32 to vector<16x128xf32>
    %688 = arith.mulf %635, %687 : vector<16x128xf32>
    %689 = arith.addf %624, %688 : vector<16x128xf32>
    %690 = vector.broadcast %138 : f32 to vector<16x128xf32>
    %691 = arith.mulf %635, %690 : vector<16x128xf32>
    %692 = arith.addf %627, %691 : vector<16x128xf32>
    %693 = vector.broadcast %139 : f32 to vector<16x128xf32>
    %694 = arith.mulf %635, %693 : vector<16x128xf32>
    %695 = arith.addf %630, %694 : vector<16x128xf32>
    %696 = vector.broadcast %6 : f32 to vector<16x128xf32>
    %697 = arith.mulf %285, %696 : vector<16x128xf32>
    %698 = vector.broadcast %16 : f32 to vector<16x128xf32>
    %699 = arith.addf %697, %698 : vector<16x128xf32>
    %700 = math.tanh %699 : vector<16x128xf32>
    %701 = vector.broadcast %140 : f32 to vector<16x128xf32>
    %702 = arith.mulf %700, %701 : vector<16x128xf32>
    %703 = arith.addf %638, %702 : vector<16x128xf32>
    %704 = vector.broadcast %141 : f32 to vector<16x128xf32>
    %705 = arith.mulf %700, %704 : vector<16x128xf32>
    %706 = arith.addf %641, %705 : vector<16x128xf32>
    %707 = vector.broadcast %142 : f32 to vector<16x128xf32>
    %708 = arith.mulf %700, %707 : vector<16x128xf32>
    %709 = arith.addf %644, %708 : vector<16x128xf32>
    %710 = vector.broadcast %143 : f32 to vector<16x128xf32>
    %711 = arith.mulf %700, %710 : vector<16x128xf32>
    %712 = arith.addf %647, %711 : vector<16x128xf32>
    %713 = vector.broadcast %144 : f32 to vector<16x128xf32>
    %714 = arith.mulf %700, %713 : vector<16x128xf32>
    %715 = arith.addf %650, %714 : vector<16x128xf32>
    %716 = vector.broadcast %145 : f32 to vector<16x128xf32>
    %717 = arith.mulf %700, %716 : vector<16x128xf32>
    %718 = arith.addf %653, %717 : vector<16x128xf32>
    %719 = vector.broadcast %146 : f32 to vector<16x128xf32>
    %720 = arith.mulf %700, %719 : vector<16x128xf32>
    %721 = arith.addf %656, %720 : vector<16x128xf32>
    %722 = vector.broadcast %147 : f32 to vector<16x128xf32>
    %723 = arith.mulf %700, %722 : vector<16x128xf32>
    %724 = arith.addf %659, %723 : vector<16x128xf32>
    %725 = vector.broadcast %148 : f32 to vector<16x128xf32>
    %726 = arith.mulf %700, %725 : vector<16x128xf32>
    %727 = arith.addf %662, %726 : vector<16x128xf32>
    %728 = vector.broadcast %149 : f32 to vector<16x128xf32>
    %729 = arith.mulf %700, %728 : vector<16x128xf32>
    %730 = arith.addf %665, %729 : vector<16x128xf32>
    %731 = vector.broadcast %150 : f32 to vector<16x128xf32>
    %732 = arith.mulf %700, %731 : vector<16x128xf32>
    %733 = arith.addf %668, %732 : vector<16x128xf32>
    %734 = vector.broadcast %151 : f32 to vector<16x128xf32>
    %735 = arith.mulf %700, %734 : vector<16x128xf32>
    %736 = arith.addf %671, %735 : vector<16x128xf32>
    %737 = vector.broadcast %152 : f32 to vector<16x128xf32>
    %738 = arith.mulf %700, %737 : vector<16x128xf32>
    %739 = arith.addf %674, %738 : vector<16x128xf32>
    %740 = vector.broadcast %153 : f32 to vector<16x128xf32>
    %741 = arith.mulf %700, %740 : vector<16x128xf32>
    %742 = arith.addf %677, %741 : vector<16x128xf32>
    %743 = vector.broadcast %154 : f32 to vector<16x128xf32>
    %744 = arith.mulf %700, %743 : vector<16x128xf32>
    %745 = arith.addf %680, %744 : vector<16x128xf32>
    %746 = vector.broadcast %155 : f32 to vector<16x128xf32>
    %747 = arith.mulf %700, %746 : vector<16x128xf32>
    %748 = arith.addf %683, %747 : vector<16x128xf32>
    %749 = vector.broadcast %156 : f32 to vector<16x128xf32>
    %750 = arith.mulf %700, %749 : vector<16x128xf32>
    %751 = arith.addf %686, %750 : vector<16x128xf32>
    %752 = vector.broadcast %157 : f32 to vector<16x128xf32>
    %753 = arith.mulf %700, %752 : vector<16x128xf32>
    %754 = arith.addf %689, %753 : vector<16x128xf32>
    %755 = vector.broadcast %158 : f32 to vector<16x128xf32>
    %756 = arith.mulf %700, %755 : vector<16x128xf32>
    %757 = arith.addf %692, %756 : vector<16x128xf32>
    %758 = vector.broadcast %159 : f32 to vector<16x128xf32>
    %759 = arith.mulf %700, %758 : vector<16x128xf32>
    %760 = arith.addf %695, %759 : vector<16x128xf32>
    %761 = vector.broadcast %7 : f32 to vector<16x128xf32>
    %762 = arith.mulf %285, %761 : vector<16x128xf32>
    %763 = vector.broadcast %17 : f32 to vector<16x128xf32>
    %764 = arith.addf %762, %763 : vector<16x128xf32>
    %765 = math.tanh %764 : vector<16x128xf32>
    %766 = vector.broadcast %160 : f32 to vector<16x128xf32>
    %767 = arith.mulf %765, %766 : vector<16x128xf32>
    %768 = arith.addf %703, %767 : vector<16x128xf32>
    %769 = vector.broadcast %161 : f32 to vector<16x128xf32>
    %770 = arith.mulf %765, %769 : vector<16x128xf32>
    %771 = arith.addf %706, %770 : vector<16x128xf32>
    %772 = vector.broadcast %162 : f32 to vector<16x128xf32>
    %773 = arith.mulf %765, %772 : vector<16x128xf32>
    %774 = arith.addf %709, %773 : vector<16x128xf32>
    %775 = vector.broadcast %163 : f32 to vector<16x128xf32>
    %776 = arith.mulf %765, %775 : vector<16x128xf32>
    %777 = arith.addf %712, %776 : vector<16x128xf32>
    %778 = vector.broadcast %164 : f32 to vector<16x128xf32>
    %779 = arith.mulf %765, %778 : vector<16x128xf32>
    %780 = arith.addf %715, %779 : vector<16x128xf32>
    %781 = vector.broadcast %165 : f32 to vector<16x128xf32>
    %782 = arith.mulf %765, %781 : vector<16x128xf32>
    %783 = arith.addf %718, %782 : vector<16x128xf32>
    %784 = vector.broadcast %166 : f32 to vector<16x128xf32>
    %785 = arith.mulf %765, %784 : vector<16x128xf32>
    %786 = arith.addf %721, %785 : vector<16x128xf32>
    %787 = vector.broadcast %167 : f32 to vector<16x128xf32>
    %788 = arith.mulf %765, %787 : vector<16x128xf32>
    %789 = arith.addf %724, %788 : vector<16x128xf32>
    %790 = vector.broadcast %168 : f32 to vector<16x128xf32>
    %791 = arith.mulf %765, %790 : vector<16x128xf32>
    %792 = arith.addf %727, %791 : vector<16x128xf32>
    %793 = vector.broadcast %169 : f32 to vector<16x128xf32>
    %794 = arith.mulf %765, %793 : vector<16x128xf32>
    %795 = arith.addf %730, %794 : vector<16x128xf32>
    %796 = vector.broadcast %170 : f32 to vector<16x128xf32>
    %797 = arith.mulf %765, %796 : vector<16x128xf32>
    %798 = arith.addf %733, %797 : vector<16x128xf32>
    %799 = vector.broadcast %171 : f32 to vector<16x128xf32>
    %800 = arith.mulf %765, %799 : vector<16x128xf32>
    %801 = arith.addf %736, %800 : vector<16x128xf32>
    %802 = vector.broadcast %172 : f32 to vector<16x128xf32>
    %803 = arith.mulf %765, %802 : vector<16x128xf32>
    %804 = arith.addf %739, %803 : vector<16x128xf32>
    %805 = vector.broadcast %173 : f32 to vector<16x128xf32>
    %806 = arith.mulf %765, %805 : vector<16x128xf32>
    %807 = arith.addf %742, %806 : vector<16x128xf32>
    %808 = vector.broadcast %174 : f32 to vector<16x128xf32>
    %809 = arith.mulf %765, %808 : vector<16x128xf32>
    %810 = arith.addf %745, %809 : vector<16x128xf32>
    %811 = vector.broadcast %175 : f32 to vector<16x128xf32>
    %812 = arith.mulf %765, %811 : vector<16x128xf32>
    %813 = arith.addf %748, %812 : vector<16x128xf32>
    %814 = vector.broadcast %176 : f32 to vector<16x128xf32>
    %815 = arith.mulf %765, %814 : vector<16x128xf32>
    %816 = arith.addf %751, %815 : vector<16x128xf32>
    %817 = vector.broadcast %177 : f32 to vector<16x128xf32>
    %818 = arith.mulf %765, %817 : vector<16x128xf32>
    %819 = arith.addf %754, %818 : vector<16x128xf32>
    %820 = vector.broadcast %178 : f32 to vector<16x128xf32>
    %821 = arith.mulf %765, %820 : vector<16x128xf32>
    %822 = arith.addf %757, %821 : vector<16x128xf32>
    %823 = vector.broadcast %179 : f32 to vector<16x128xf32>
    %824 = arith.mulf %765, %823 : vector<16x128xf32>
    %825 = arith.addf %760, %824 : vector<16x128xf32>
    %826 = vector.broadcast %8 : f32 to vector<16x128xf32>
    %827 = arith.mulf %285, %826 : vector<16x128xf32>
    %828 = vector.broadcast %18 : f32 to vector<16x128xf32>
    %829 = arith.addf %827, %828 : vector<16x128xf32>
    %830 = math.tanh %829 : vector<16x128xf32>
    %831 = vector.broadcast %180 : f32 to vector<16x128xf32>
    %832 = arith.mulf %830, %831 : vector<16x128xf32>
    %833 = arith.addf %768, %832 : vector<16x128xf32>
    %834 = vector.broadcast %181 : f32 to vector<16x128xf32>
    %835 = arith.mulf %830, %834 : vector<16x128xf32>
    %836 = arith.addf %771, %835 : vector<16x128xf32>
    %837 = vector.broadcast %182 : f32 to vector<16x128xf32>
    %838 = arith.mulf %830, %837 : vector<16x128xf32>
    %839 = arith.addf %774, %838 : vector<16x128xf32>
    %840 = vector.broadcast %183 : f32 to vector<16x128xf32>
    %841 = arith.mulf %830, %840 : vector<16x128xf32>
    %842 = arith.addf %777, %841 : vector<16x128xf32>
    %843 = vector.broadcast %184 : f32 to vector<16x128xf32>
    %844 = arith.mulf %830, %843 : vector<16x128xf32>
    %845 = arith.addf %780, %844 : vector<16x128xf32>
    %846 = vector.broadcast %185 : f32 to vector<16x128xf32>
    %847 = arith.mulf %830, %846 : vector<16x128xf32>
    %848 = arith.addf %783, %847 : vector<16x128xf32>
    %849 = vector.broadcast %186 : f32 to vector<16x128xf32>
    %850 = arith.mulf %830, %849 : vector<16x128xf32>
    %851 = arith.addf %786, %850 : vector<16x128xf32>
    %852 = vector.broadcast %187 : f32 to vector<16x128xf32>
    %853 = arith.mulf %830, %852 : vector<16x128xf32>
    %854 = arith.addf %789, %853 : vector<16x128xf32>
    %855 = vector.broadcast %188 : f32 to vector<16x128xf32>
    %856 = arith.mulf %830, %855 : vector<16x128xf32>
    %857 = arith.addf %792, %856 : vector<16x128xf32>
    %858 = vector.broadcast %189 : f32 to vector<16x128xf32>
    %859 = arith.mulf %830, %858 : vector<16x128xf32>
    %860 = arith.addf %795, %859 : vector<16x128xf32>
    %861 = vector.broadcast %190 : f32 to vector<16x128xf32>
    %862 = arith.mulf %830, %861 : vector<16x128xf32>
    %863 = arith.addf %798, %862 : vector<16x128xf32>
    %864 = vector.broadcast %191 : f32 to vector<16x128xf32>
    %865 = arith.mulf %830, %864 : vector<16x128xf32>
    %866 = arith.addf %801, %865 : vector<16x128xf32>
    %867 = vector.broadcast %192 : f32 to vector<16x128xf32>
    %868 = arith.mulf %830, %867 : vector<16x128xf32>
    %869 = arith.addf %804, %868 : vector<16x128xf32>
    %870 = vector.broadcast %193 : f32 to vector<16x128xf32>
    %871 = arith.mulf %830, %870 : vector<16x128xf32>
    %872 = arith.addf %807, %871 : vector<16x128xf32>
    %873 = vector.broadcast %194 : f32 to vector<16x128xf32>
    %874 = arith.mulf %830, %873 : vector<16x128xf32>
    %875 = arith.addf %810, %874 : vector<16x128xf32>
    %876 = vector.broadcast %195 : f32 to vector<16x128xf32>
    %877 = arith.mulf %830, %876 : vector<16x128xf32>
    %878 = arith.addf %813, %877 : vector<16x128xf32>
    %879 = vector.broadcast %196 : f32 to vector<16x128xf32>
    %880 = arith.mulf %830, %879 : vector<16x128xf32>
    %881 = arith.addf %816, %880 : vector<16x128xf32>
    %882 = vector.broadcast %197 : f32 to vector<16x128xf32>
    %883 = arith.mulf %830, %882 : vector<16x128xf32>
    %884 = arith.addf %819, %883 : vector<16x128xf32>
    %885 = vector.broadcast %198 : f32 to vector<16x128xf32>
    %886 = arith.mulf %830, %885 : vector<16x128xf32>
    %887 = arith.addf %822, %886 : vector<16x128xf32>
    %888 = vector.broadcast %199 : f32 to vector<16x128xf32>
    %889 = arith.mulf %830, %888 : vector<16x128xf32>
    %890 = arith.addf %825, %889 : vector<16x128xf32>
    %891 = vector.broadcast %9 : f32 to vector<16x128xf32>
    %892 = arith.mulf %285, %891 : vector<16x128xf32>
    %893 = vector.broadcast %19 : f32 to vector<16x128xf32>
    %894 = arith.addf %892, %893 : vector<16x128xf32>
    %895 = math.tanh %894 : vector<16x128xf32>
    %896 = vector.broadcast %200 : f32 to vector<16x128xf32>
    %897 = arith.mulf %895, %896 : vector<16x128xf32>
    %898 = arith.addf %833, %897 : vector<16x128xf32>
    %899 = vector.broadcast %201 : f32 to vector<16x128xf32>
    %900 = arith.mulf %895, %899 : vector<16x128xf32>
    %901 = arith.addf %836, %900 : vector<16x128xf32>
    %902 = vector.broadcast %202 : f32 to vector<16x128xf32>
    %903 = arith.mulf %895, %902 : vector<16x128xf32>
    %904 = arith.addf %839, %903 : vector<16x128xf32>
    %905 = vector.broadcast %203 : f32 to vector<16x128xf32>
    %906 = arith.mulf %895, %905 : vector<16x128xf32>
    %907 = arith.addf %842, %906 : vector<16x128xf32>
    %908 = vector.broadcast %204 : f32 to vector<16x128xf32>
    %909 = arith.mulf %895, %908 : vector<16x128xf32>
    %910 = arith.addf %845, %909 : vector<16x128xf32>
    %911 = vector.broadcast %205 : f32 to vector<16x128xf32>
    %912 = arith.mulf %895, %911 : vector<16x128xf32>
    %913 = arith.addf %848, %912 : vector<16x128xf32>
    %914 = vector.broadcast %206 : f32 to vector<16x128xf32>
    %915 = arith.mulf %895, %914 : vector<16x128xf32>
    %916 = arith.addf %851, %915 : vector<16x128xf32>
    %917 = vector.broadcast %207 : f32 to vector<16x128xf32>
    %918 = arith.mulf %895, %917 : vector<16x128xf32>
    %919 = arith.addf %854, %918 : vector<16x128xf32>
    %920 = vector.broadcast %208 : f32 to vector<16x128xf32>
    %921 = arith.mulf %895, %920 : vector<16x128xf32>
    %922 = arith.addf %857, %921 : vector<16x128xf32>
    %923 = vector.broadcast %209 : f32 to vector<16x128xf32>
    %924 = arith.mulf %895, %923 : vector<16x128xf32>
    %925 = arith.addf %860, %924 : vector<16x128xf32>
    %926 = vector.broadcast %210 : f32 to vector<16x128xf32>
    %927 = arith.mulf %895, %926 : vector<16x128xf32>
    %928 = arith.addf %863, %927 : vector<16x128xf32>
    %929 = vector.broadcast %211 : f32 to vector<16x128xf32>
    %930 = arith.mulf %895, %929 : vector<16x128xf32>
    %931 = arith.addf %866, %930 : vector<16x128xf32>
    %932 = vector.broadcast %212 : f32 to vector<16x128xf32>
    %933 = arith.mulf %895, %932 : vector<16x128xf32>
    %934 = arith.addf %869, %933 : vector<16x128xf32>
    %935 = vector.broadcast %213 : f32 to vector<16x128xf32>
    %936 = arith.mulf %895, %935 : vector<16x128xf32>
    %937 = arith.addf %872, %936 : vector<16x128xf32>
    %938 = vector.broadcast %214 : f32 to vector<16x128xf32>
    %939 = arith.mulf %895, %938 : vector<16x128xf32>
    %940 = arith.addf %875, %939 : vector<16x128xf32>
    %941 = vector.broadcast %215 : f32 to vector<16x128xf32>
    %942 = arith.mulf %895, %941 : vector<16x128xf32>
    %943 = arith.addf %878, %942 : vector<16x128xf32>
    %944 = vector.broadcast %216 : f32 to vector<16x128xf32>
    %945 = arith.mulf %895, %944 : vector<16x128xf32>
    %946 = arith.addf %881, %945 : vector<16x128xf32>
    %947 = vector.broadcast %217 : f32 to vector<16x128xf32>
    %948 = arith.mulf %895, %947 : vector<16x128xf32>
    %949 = arith.addf %884, %948 : vector<16x128xf32>
    %950 = vector.broadcast %218 : f32 to vector<16x128xf32>
    %951 = arith.mulf %895, %950 : vector<16x128xf32>
    %952 = arith.addf %887, %951 : vector<16x128xf32>
    %953 = vector.broadcast %219 : f32 to vector<16x128xf32>
    %954 = arith.mulf %895, %953 : vector<16x128xf32>
    %955 = arith.addf %890, %954 : vector<16x128xf32>
    %956 = math.tanh %898 : vector<16x128xf32>
    %957 = math.tanh %901 : vector<16x128xf32>
    %958 = math.tanh %904 : vector<16x128xf32>
    %959 = math.tanh %907 : vector<16x128xf32>
    %960 = math.tanh %910 : vector<16x128xf32>
    %961 = math.tanh %913 : vector<16x128xf32>
    %962 = math.tanh %916 : vector<16x128xf32>
    %963 = math.tanh %919 : vector<16x128xf32>
    %964 = math.tanh %922 : vector<16x128xf32>
    %965 = math.tanh %925 : vector<16x128xf32>
    %966 = math.tanh %928 : vector<16x128xf32>
    %967 = math.tanh %931 : vector<16x128xf32>
    %968 = math.tanh %934 : vector<16x128xf32>
    %969 = math.tanh %937 : vector<16x128xf32>
    %970 = math.tanh %940 : vector<16x128xf32>
    %971 = math.tanh %943 : vector<16x128xf32>
    %972 = math.tanh %946 : vector<16x128xf32>
    %973 = math.tanh %949 : vector<16x128xf32>
    %974 = math.tanh %952 : vector<16x128xf32>
    %975 = math.tanh %955 : vector<16x128xf32>
    %976 = vector.broadcast %240 : f32 to vector<16x128xf32>
    %977 = arith.mulf %956, %976 : vector<16x128xf32>
    %978 = vector.broadcast %280 : f32 to vector<16x128xf32>
    %979 = arith.addf %977, %978 : vector<16x128xf32>
    %980 = vector.broadcast %242 : f32 to vector<16x128xf32>
    %981 = arith.mulf %957, %980 : vector<16x128xf32>
    %982 = arith.addf %979, %981 : vector<16x128xf32>
    %983 = vector.broadcast %244 : f32 to vector<16x128xf32>
    %984 = arith.mulf %958, %983 : vector<16x128xf32>
    %985 = arith.addf %982, %984 : vector<16x128xf32>
    %986 = vector.broadcast %246 : f32 to vector<16x128xf32>
    %987 = arith.mulf %959, %986 : vector<16x128xf32>
    %988 = arith.addf %985, %987 : vector<16x128xf32>
    %989 = vector.broadcast %248 : f32 to vector<16x128xf32>
    %990 = arith.mulf %960, %989 : vector<16x128xf32>
    %991 = arith.addf %988, %990 : vector<16x128xf32>
    %992 = vector.broadcast %250 : f32 to vector<16x128xf32>
    %993 = arith.mulf %961, %992 : vector<16x128xf32>
    %994 = arith.addf %991, %993 : vector<16x128xf32>
    %995 = vector.broadcast %252 : f32 to vector<16x128xf32>
    %996 = arith.mulf %962, %995 : vector<16x128xf32>
    %997 = arith.addf %994, %996 : vector<16x128xf32>
    %998 = vector.broadcast %254 : f32 to vector<16x128xf32>
    %999 = arith.mulf %963, %998 : vector<16x128xf32>
    %1000 = arith.addf %997, %999 : vector<16x128xf32>
    %1001 = vector.broadcast %256 : f32 to vector<16x128xf32>
    %1002 = arith.mulf %964, %1001 : vector<16x128xf32>
    %1003 = arith.addf %1000, %1002 : vector<16x128xf32>
    %1004 = vector.broadcast %258 : f32 to vector<16x128xf32>
    %1005 = arith.mulf %965, %1004 : vector<16x128xf32>
    %1006 = arith.addf %1003, %1005 : vector<16x128xf32>
    %1007 = vector.broadcast %260 : f32 to vector<16x128xf32>
    %1008 = arith.mulf %966, %1007 : vector<16x128xf32>
    %1009 = arith.addf %1006, %1008 : vector<16x128xf32>
    %1010 = vector.broadcast %262 : f32 to vector<16x128xf32>
    %1011 = arith.mulf %967, %1010 : vector<16x128xf32>
    %1012 = arith.addf %1009, %1011 : vector<16x128xf32>
    %1013 = vector.broadcast %264 : f32 to vector<16x128xf32>
    %1014 = arith.mulf %968, %1013 : vector<16x128xf32>
    %1015 = arith.addf %1012, %1014 : vector<16x128xf32>
    %1016 = vector.broadcast %266 : f32 to vector<16x128xf32>
    %1017 = arith.mulf %969, %1016 : vector<16x128xf32>
    %1018 = arith.addf %1015, %1017 : vector<16x128xf32>
    %1019 = vector.broadcast %268 : f32 to vector<16x128xf32>
    %1020 = arith.mulf %970, %1019 : vector<16x128xf32>
    %1021 = arith.addf %1018, %1020 : vector<16x128xf32>
    %1022 = vector.broadcast %270 : f32 to vector<16x128xf32>
    %1023 = arith.mulf %971, %1022 : vector<16x128xf32>
    %1024 = arith.addf %1021, %1023 : vector<16x128xf32>
    %1025 = vector.broadcast %272 : f32 to vector<16x128xf32>
    %1026 = arith.mulf %972, %1025 : vector<16x128xf32>
    %1027 = arith.addf %1024, %1026 : vector<16x128xf32>
    %1028 = vector.broadcast %274 : f32 to vector<16x128xf32>
    %1029 = arith.mulf %973, %1028 : vector<16x128xf32>
    %1030 = arith.addf %1027, %1029 : vector<16x128xf32>
    %1031 = vector.broadcast %276 : f32 to vector<16x128xf32>
    %1032 = arith.mulf %974, %1031 : vector<16x128xf32>
    %1033 = arith.addf %1030, %1032 : vector<16x128xf32>
    %1034 = vector.broadcast %278 : f32 to vector<16x128xf32>
    %1035 = arith.mulf %975, %1034 : vector<16x128xf32>
    %1036 = arith.addf %1033, %1035 : vector<16x128xf32>
    %c0_83 = arith.constant 0 : index
    %1037 = arith.index_cast %283 : i32 to index
    %c0_84 = arith.constant 0 : index
    %1038 = vector.load %arg8[%c0_83, %1037, %c0_84] : memref<2x16x128xf32, #tpu.memory_space<vmem>>, vector<1x16x128xf32>
    %1039 = vector.shape_cast %1038 : vector<1x16x128xf32> to vector<16x128xf32>
    %1040 = vector.shape_cast %1036 : vector<16x128xf32> to vector<1x16x128xf32>
    tpu.vector_store %arg8[%c0_83, %1037, %c0_84], %1040 {strides = array<i32>} : memref<2x16x128xf32, #tpu.memory_space<vmem>>, vector<1x16x128xf32>,
    %1041 = vector.broadcast %241 : f32 to vector<16x128xf32>
    %1042 = arith.mulf %956, %1041 : vector<16x128xf32>
    %1043 = vector.broadcast %281 : f32 to vector<16x128xf32>
    %1044 = arith.addf %1042, %1043 : vector<16x128xf32>
    %1045 = vector.broadcast %243 : f32 to vector<16x128xf32>
    %1046 = arith.mulf %957, %1045 : vector<16x128xf32>
    %1047 = arith.addf %1044, %1046 : vector<16x128xf32>
    %1048 = vector.broadcast %245 : f32 to vector<16x128xf32>
    %1049 = arith.mulf %958, %1048 : vector<16x128xf32>
    %1050 = arith.addf %1047, %1049 : vector<16x128xf32>
    %1051 = vector.broadcast %247 : f32 to vector<16x128xf32>
    %1052 = arith.mulf %959, %1051 : vector<16x128xf32>
    %1053 = arith.addf %1050, %1052 : vector<16x128xf32>
    %1054 = vector.broadcast %249 : f32 to vector<16x128xf32>
    %1055 = arith.mulf %960, %1054 : vector<16x128xf32>
    %1056 = arith.addf %1053, %1055 : vector<16x128xf32>
    %1057 = vector.broadcast %251 : f32 to vector<16x128xf32>
    %1058 = arith.mulf %961, %1057 : vector<16x128xf32>
    %1059 = arith.addf %1056, %1058 : vector<16x128xf32>
    %1060 = vector.broadcast %253 : f32 to vector<16x128xf32>
    %1061 = arith.mulf %962, %1060 : vector<16x128xf32>
    %1062 = arith.addf %1059, %1061 : vector<16x128xf32>
    %1063 = vector.broadcast %255 : f32 to vector<16x128xf32>
    %1064 = arith.mulf %963, %1063 : vector<16x128xf32>
    %1065 = arith.addf %1062, %1064 : vector<16x128xf32>
    %1066 = vector.broadcast %257 : f32 to vector<16x128xf32>
    %1067 = arith.mulf %964, %1066 : vector<16x128xf32>
    %1068 = arith.addf %1065, %1067 : vector<16x128xf32>
    %1069 = vector.broadcast %259 : f32 to vector<16x128xf32>
    %1070 = arith.mulf %965, %1069 : vector<16x128xf32>
    %1071 = arith.addf %1068, %1070 : vector<16x128xf32>
    %1072 = vector.broadcast %261 : f32 to vector<16x128xf32>
    %1073 = arith.mulf %966, %1072 : vector<16x128xf32>
    %1074 = arith.addf %1071, %1073 : vector<16x128xf32>
    %1075 = vector.broadcast %263 : f32 to vector<16x128xf32>
    %1076 = arith.mulf %967, %1075 : vector<16x128xf32>
    %1077 = arith.addf %1074, %1076 : vector<16x128xf32>
    %1078 = vector.broadcast %265 : f32 to vector<16x128xf32>
    %1079 = arith.mulf %968, %1078 : vector<16x128xf32>
    %1080 = arith.addf %1077, %1079 : vector<16x128xf32>
    %1081 = vector.broadcast %267 : f32 to vector<16x128xf32>
    %1082 = arith.mulf %969, %1081 : vector<16x128xf32>
    %1083 = arith.addf %1080, %1082 : vector<16x128xf32>
    %1084 = vector.broadcast %269 : f32 to vector<16x128xf32>
    %1085 = arith.mulf %970, %1084 : vector<16x128xf32>
    %1086 = arith.addf %1083, %1085 : vector<16x128xf32>
    %1087 = vector.broadcast %271 : f32 to vector<16x128xf32>
    %1088 = arith.mulf %971, %1087 : vector<16x128xf32>
    %1089 = arith.addf %1086, %1088 : vector<16x128xf32>
    %1090 = vector.broadcast %273 : f32 to vector<16x128xf32>
    %1091 = arith.mulf %972, %1090 : vector<16x128xf32>
    %1092 = arith.addf %1089, %1091 : vector<16x128xf32>
    %1093 = vector.broadcast %275 : f32 to vector<16x128xf32>
    %1094 = arith.mulf %973, %1093 : vector<16x128xf32>
    %1095 = arith.addf %1092, %1094 : vector<16x128xf32>
    %1096 = vector.broadcast %277 : f32 to vector<16x128xf32>
    %1097 = arith.mulf %974, %1096 : vector<16x128xf32>
    %1098 = arith.addf %1095, %1097 : vector<16x128xf32>
    %1099 = vector.broadcast %279 : f32 to vector<16x128xf32>
    %1100 = arith.mulf %975, %1099 : vector<16x128xf32>
    %1101 = arith.addf %1098, %1100 : vector<16x128xf32>
    %c1_85 = arith.constant 1 : index
    %1102 = arith.index_cast %283 : i32 to index
    %c0_86 = arith.constant 0 : index
    %1103 = vector.load %arg8[%c1_85, %1102, %c0_86] : memref<2x16x128xf32, #tpu.memory_space<vmem>>, vector<1x16x128xf32>
    %1104 = vector.shape_cast %1103 : vector<1x16x128xf32> to vector<16x128xf32>
    %1105 = vector.shape_cast %1101 : vector<16x128xf32> to vector<1x16x128xf32>
    tpu.vector_store %arg8[%c1_85, %1102, %c0_86], %1105 {strides = array<i32>} : memref<2x16x128xf32, #tpu.memory_space<vmem>>, vector<1x16x128xf32>,
    %c1_i32 = arith.constant 1 : i32
    return
  }
  func.func @transform_0(%arg0: i32) -> i32 {
    %c0_i32 = arith.constant 0 : i32
    %c0_i32_0 = arith.constant 0 : i32
    return %c0_i32 : i32
  }
  func.func @transform_1(%arg0: i32) -> i32 {
    %c0_i32 = arith.constant 0 : i32
    %c0_i32_0 = arith.constant 0 : i32
    return %c0_i32 : i32
  }
  func.func @transform_2(%arg0: i32) -> i32 {
    %c0_i32 = arith.constant 0 : i32
    %c0_i32_0 = arith.constant 0 : i32
    return %c0_i32 : i32
  }
  func.func @transform_3(%arg0: i32) -> i32 {
    %c0_i32 = arith.constant 0 : i32
    %c0_i32_0 = arith.constant 0 : i32
    return %c0_i32 : i32
  }
  func.func @transform_4(%arg0: i32) -> i32 {
    %c0_i32 = arith.constant 0 : i32
    %c0_i32_0 = arith.constant 0 : i32
    return %c0_i32 : i32
  }
  func.func @transform_5(%arg0: i32) -> i32 {
    %c0_i32 = arith.constant 0 : i32
    %c0_i32_0 = arith.constant 0 : i32
    return %c0_i32 : i32
  }
  func.func @transform_6(%arg0: i32) -> (i32, i32) {
    %c0_i32 = arith.constant 0 : i32
    %c0_i32_0 = arith.constant 0 : i32
    return %arg0, %c0_i32 : i32, i32
  }
  func.func @transform_7(%arg0: i32) -> (i32, i32, i32) {
    %c0_i32 = arith.constant 0 : i32
    %c0_i32_0 = arith.constant 0 : i32
    %c0_i32_1 = arith.constant 0 : i32
    return %c0_i32, %arg0, %c0_i32_0 : i32, i32, i32
  }
}

</mosaic_0001>

<llo_original>
// kernel: tpu_custom_call.1
$region0: #{tpu_custom_call.1}
  #allocation0 [shape = 'u32[]', space=smem, size = 0x4, offset = 0x4, fixed_abs, tag = 'smem constant byte address 0x4 - core index']
  #allocation1 [shape = 'u32[144,128]{1,0:T(1,128)}', space=vmem, size = 0x12000, scoped, tag = 'internal scratch']
  %s0 = inlined_call_operand.hbm [shape: f32[10], index: 0, kind: input, shape index: {}]
  %s1 = inlined_call_operand.vmem [shape: f32[10], index: 1, kind: input, shape index: {}]
  %s2 = inlined_call_operand.vmem [shape: f32[200], index: 2, kind: input, shape index: {}]
  %s3 = inlined_call_operand.vmem [shape: f32[20], index: 3, kind: input, shape index: {}]
  %s4 = inlined_call_operand.vmem [shape: f32[40], index: 4, kind: input, shape index: {}]
  %s5 = inlined_call_operand.vmem [shape: f32[2], index: 5, kind: input, shape index: {}]
  %s6 = inlined_call_operand.vmem [shape: f32[16,128], index: 6, kind: input, shape index: {}]
  %s7 = inlined_call_operand.hbm [shape: f32[2,16,128], index: 7, kind: output, shape index: {}]
  %s8 = sld [smem:[#allocation0]]
  $region62: #{tpu_custom_call.1} parent=0
    _
  %s10 = ssub.s32 1, %s8
  %s11 = scalar_select 0, %s10, %s8
  $region1: #{tpu_custom_call.1} parent=0
    #allocation2 [shape = 'u8[512]{0}', space=smem, size = 0x200, scoped, tag = 'input window, operand 0, single buffered']
    #allocation3 [shape = 's32[1]{0}', space=sflag, size = 0x4, scoped, tag = 'scoped memory for tpu_custom_call.1']
    #allocation4 [shape = 's32[1]{0}', space=sflag, size = 0x4, scoped, tag = 'scoped memory for tpu_custom_call.1']
    #allocation5 [shape = 's32[1]{0}', space=sflag, size = 0x4, scoped, tag = 'scoped memory for tpu_custom_call.1']
    #allocation6 [shape = 'u8[512]{0}', space=smem, size = 0x200, scoped, tag = 'input window, operand 1, single buffered']
    #allocation7 [shape = 'u8[1024]{0}', space=smem, size = 0x400, scoped, tag = 'input window, operand 2, single buffered']
    #allocation8 [shape = 's32[1]{0}', space=sflag, size = 0x4, scoped, tag = 'scoped memory for tpu_custom_call.1']
    #allocation9 [shape = 'u8[512]{0}', space=smem, size = 0x200, scoped, tag = 'input window, operand 3, single buffered']
    #allocation10 [shape = 'u8[512]{0}', space=smem, size = 0x200, scoped, tag = 'input window, operand 4, single buffered']
    #allocation11 [shape = 's32[1]{0}', space=sflag, size = 0x4, scoped, tag = 'scoped memory for tpu_custom_call.1']
    #allocation12 [shape = 'u8[512]{0}', space=smem, size = 0x200, scoped, tag = 'input window, operand 5, single buffered']
    #allocation13 [shape = 'u8[16384]{0}', space=vmem, size = 0x4000, scoped, tag = 'output window, operand 0, single buffered']
    %12 = vsyncpa [#allocation4], 0
    %13 = vsyncpa [#allocation5], 0
    %14 = vsyncpa [#allocation8], 0
    %15 = vsyncpa [#allocation11], 0
    %16 = vsyncpa [#allocation3], 0
    // Predicated region
    $region2: #{tpu_custom_call.1} parent=1 // pred_check
      _
    $region3: #{tpu_custom_call.1} parent=1 // pred_check_branch
      %18 = sbr.rel (0) target = $region5
    $region4: #{tpu_custom_call.1} parent=1 // pred_region
      %s20 = ssub.s32 16, 16
      %21 = vsyncadd [#allocation4], %s20
      %24 = dma.hbm_to_smem %s0, 16, [#allocation2], [#allocation4]
    $region5: #{tpu_custom_call.1} parent=1 // pred_fallthru
      _
    // Predicated region
    $region6: #{tpu_custom_call.1} parent=1 // pred_check
      _
    $region7: #{tpu_custom_call.1} parent=1 // pred_check_branch
      %26 = sbr.rel (0) target = $region9
    $region8: #{tpu_custom_call.1} parent=1 // pred_region
      %s28 = ssub.s32 16, 16
      %29 = vsyncadd [#allocation5], %s28
      %s31 = sshll.u32 %s1, 4
      %s32 = int_to_ptr.vmem [resolvable:$true] %s31
      %34 = dma.vmem_to_smem %s32, 16, [#allocation6], [#allocation5]
    $region9: #{tpu_custom_call.1} parent=1 // pred_fallthru
      _
    // Predicated region
    $region10: #{tpu_custom_call.1} parent=1 // pred_check
      _
    $region11: #{tpu_custom_call.1} parent=1 // pred_check_branch
      %36 = sbr.rel (0) target = $region13
    $region12: #{tpu_custom_call.1} parent=1 // pred_region
      %s38 = ssub.s32 32, 32
      %39 = vsyncadd [#allocation8], %s38
      %s41 = sshll.u32 %s2, 4
      %s42 = int_to_ptr.vmem [resolvable:$true] %s41
      %44 = dma.vmem_to_smem %s42, 32, [#allocation7], [#allocation8]
    $region13: #{tpu_custom_call.1} parent=1 // pred_fallthru
      _
    // Predicated region
    $region14: #{tpu_custom_call.1} parent=1 // pred_check
      _
    $region15: #{tpu_custom_call.1} parent=1 // pred_check_branch
      %46 = sbr.rel (0) target = $region17
    $region16: #{tpu_custom_call.1} parent=1 // pred_region
      %s48 = ssub.s32 16, 16
      %49 = vsyncadd [#allocation8], %s48
      %s51 = sshll.u32 %s3, 4
      %s52 = int_to_ptr.vmem [resolvable:$true] %s51
      %54 = dma.vmem_to_smem %s52, 16, [#allocation9], [#allocation8]
    $region17: #{tpu_custom_call.1} parent=1 // pred_fallthru
      _
    // Predicated region
    $region18: #{tpu_custom_call.1} parent=1 // pred_check
      _
    $region19: #{tpu_custom_call.1} parent=1 // pred_check_branch
      %56 = sbr.rel (0) target = $region21
    $region20: #{tpu_custom_call.1} parent=1 // pred_region
      %s58 = ssub.s32 16, 16
      %59 = vsyncadd [#allocation11], %s58
      %s61 = sshll.u32 %s4, 4
      %s62 = int_to_ptr.vmem [resolvable:$true] %s61
      %64 = dma.vmem_to_smem %s62, 16, [#allocation10], [#allocation11]
    $region21: #{tpu_custom_call.1} parent=1 // pred_fallthru
      _
    // Predicated region
    $region22: #{tpu_custom_call.1} parent=1 // pred_check
      _
    $region23: #{tpu_custom_call.1} parent=1 // pred_check_branch
      %66 = sbr.rel (0) target = $region25
    $region24: #{tpu_custom_call.1} parent=1 // pred_region
      %s68 = ssub.s32 16, 16
      %69 = vsyncadd [#allocation11], %s68
      %s71 = sshll.u32 %s5, 4
      %s72 = int_to_ptr.vmem [resolvable:$true] %s71
      %74 = dma.vmem_to_smem %s72, 16, [#allocation12], [#allocation11]
    $region25: #{tpu_custom_call.1} parent=1 // pred_fallthru
      _
    // Predicated region
    $region26: #{tpu_custom_call.1} parent=1 // pred_check
      _
    $region27: #{tpu_custom_call.1} parent=1 // pred_check_branch
      %76 = sbr.rel (0) target = $region29
    $region28: #{tpu_custom_call.1} parent=1 // pred_region
      _
    $region29: #{tpu_custom_call.1} parent=1 // pred_fallthru
      _
    // Predicated region
    $region30: #{tpu_custom_call.1} parent=1 // pred_check
      _
    $region31: #{tpu_custom_call.1} parent=1 // pred_check_branch
      %78 = sbr.rel (0) target = $region33
    $region32: #{tpu_custom_call.1} parent=1 // pred_region
      %79 = dma.done [#allocation4], 16
    $region33: #{tpu_custom_call.1} parent=1 // pred_fallthru
      _
    // Predicated region
    $region34: #{tpu_custom_call.1} parent=1 // pred_check
      _
    $region35: #{tpu_custom_call.1} parent=1 // pred_check_branch
      %81 = sbr.rel (0) target = $region37
    $region36: #{tpu_custom_call.1} parent=1 // pred_region
      %82 = dma.done [#allocation5], 16
    $region37: #{tpu_custom_call.1} parent=1 // pred_fallthru
      _
    // Predicated region
    $region38: #{tpu_custom_call.1} parent=1 // pred_check
      _
    $region39: #{tpu_custom_call.1} parent=1 // pred_check_branch
      %84 = sbr.rel (0) target = $region41
    $region40: #{tpu_custom_call.1} parent=1 // pred_region
      %85 = dma.done [#allocation8], 32
    $region41: #{tpu_custom_call.1} parent=1 // pred_fallthru
      _
    // Predicated region
    $region42: #{tpu_custom_call.1} parent=1 // pred_check
      _
    $region43: #{tpu_custom_call.1} parent=1 // pred_check_branch
      %87 = sbr.rel (0) target = $region45
    $region44: #{tpu_custom_call.1} parent=1 // pred_region
      %88 = dma.done [#allocation8], 16
    $region45: #{tpu_custom_call.1} parent=1 // pred_fallthru
      _
    // Predicated region
    $region46: #{tpu_custom_call.1} parent=1 // pred_check
      _
    $region47: #{tpu_custom_call.1} parent=1 // pred_check_branch
      %90 = sbr.rel (0) target = $region49
    $region48: #{tpu_custom_call.1} parent=1 // pred_region
      %91 = dma.done [#allocation11], 16
    $region49: #{tpu_custom_call.1} parent=1 // pred_fallthru
      _
    // Predicated region
    $region50: #{tpu_custom_call.1} parent=1 // pred_check
      _
    $region51: #{tpu_custom_call.1} parent=1 // pred_check_branch
      %93 = sbr.rel (0) target = $region53
    $region52: #{tpu_custom_call.1} parent=1 // pred_region
      %94 = dma.done [#allocation11], 16
    $region53: #{tpu_custom_call.1} parent=1 // pred_fallthru
      _
    %95 = sfence
    %s96 = sld [smem:[#allocation2]]
    %s97 = sld [smem:[#allocation2 + $0x1]]
    %s98 = sld [smem:[#allocation2 + $0x2]]
    %s99 = sld [smem:[#allocation2 + $0x3]]
    %s100 = sld [smem:[#allocation2 + $0x4]]
    %s101 = sld [smem:[#allocation2 + $0x5]]
    %s102 = sld [smem:[#allocation2 + $0x6]]
    %s103 = sld [smem:[#allocation2 + $0x7]]
    %s104 = sld [smem:[#allocation2 + $0x8]]
    %s105 = sld [smem:[#allocation2 + $0x9]]
    %s106 = sld [smem:[#allocation6]]
    %s107 = sld [smem:[#allocation6 + $0x1]]
    %s108 = sld [smem:[#allocation6 + $0x2]]
    %s109 = sld [smem:[#allocation6 + $0x3]]
    %s110 = sld [smem:[#allocation6 + $0x4]]
    %s111 = sld [smem:[#allocation6 + $0x5]]
    %s112 = sld [smem:[#allocation6 + $0x6]]
    %s113 = sld [smem:[#allocation6 + $0x7]]
    %s114 = sld [smem:[#allocation6 + $0x8]]
    %s115 = sld [smem:[#allocation6 + $0x9]]
    %s116 = sld [smem:[#allocation7]]
    %s117 = sld [smem:[#allocation7 + $0x1]]
    %s118 = sld [smem:[#allocation7 + $0x2]]
    %s119 = sld [smem:[#allocation7 + $0x3]]
    %s120 = sld [smem:[#allocation7 + $0x4]]
    %s121 = sld [smem:[#allocation7 + $0x5]]
    %s122 = sld [smem:[#allocation7 + $0x6]]
    %s123 = sld [smem:[#allocation7 + $0x7]]
    %s124 = sld [smem:[#allocation7 + $0x8]]
    %s125 = sld [smem:[#allocation7 + $0x9]]
    %s126 = sld [smem:[#allocation7 + $0xa]]
    %s127 = sld [smem:[#allocation7 + $0xb]]
    %s128 = sld [smem:[#allocation7 + $0xc]]
    %s129 = sld [smem:[#allocation7 + $0xd]]
    %s130 = sld [smem:[#allocation7 + $0xe]]
    %s131 = sld [smem:[#allocation7 + $0xf]]
    %s132 = sld [smem:[#allocation7 + $0x10]]
    %s133 = sld [smem:[#allocation7 + $0x11]]
    %s134 = sld [smem:[#allocation7 + $0x12]]
    %s135 = sld [smem:[#allocation7 + $0x13]]
    %s136 = sld [smem:[#allocation7 + $0x14]]
    %s137 = sld [smem:[#allocation7 + $0x15]]
    %s138 = sld [smem:[#allocation7 + $0x16]]
    %s139 = sld [smem:[#allocation7 + $0x17]]
    %s140 = sld [smem:[#allocation7 + $0x18]]
    %s141 = sld [smem:[#allocation7 + $0x19]]
    %s142 = sld [smem:[#allocation7 + $0x1a]]
    %s143 = sld [smem:[#allocation7 + $0x1b]]
    %s144 = sld [smem:[#allocation7 + $0x1c]]
    %s145 = sld [smem:[#allocation7 + $0x1d]]
    %s146 = sld [smem:[#allocation7 + $0x1e]]
    %s147 = sld [smem:[#allocation7 + $0x1f]]
    %s148 = sld [smem:[#allocation7 + $0x20]]
    %s149 = sld [smem:[#allocation7 + $0x21]]
    %s150 = sld [smem:[#allocation7 + $0x22]]
    %s151 = sld [smem:[#allocation7 + $0x23]]
    %s152 = sld [smem:[#allocation7 + $0x24]]
    %s153 = sld [smem:[#allocation7 + $0x25]]
    %s154 = sld [smem:[#allocation7 + $0x26]]
    %s155 = sld [smem:[#allocation7 + $0x27]]
    %s156 = sld [smem:[#allocation7 + $0x28]]
    %s157 = sld [smem:[#allocation7 + $0x29]]
    %s158 = sld [smem:[#allocation7 + $0x2a]]
    %s159 = sld [smem:[#allocation7 + $0x2b]]
    %s160 = sld [smem:[#allocation7 + $0x2c]]
    %s161 = sld [smem:[#allocation7 + $0x2d]]
    %s162 = sld [smem:[#allocation7 + $0x2e]]
    %s163 = sld [smem:[#allocation7 + $0x2f]]
    %s164 = sld [smem:[#allocation7 + $0x30]]
    %s165 = sld [smem:[#allocation7 + $0x31]]
    %s166 = sld [smem:[#allocation7 + $0x32]]
    %s167 = sld [smem:[#allocation7 + $0x33]]
    %s168 = sld [smem:[#allocation7 + $0x34]]
    %s169 = sld [smem:[#allocation7 + $0x35]]
    %s170 = sld [smem:[#allocation7 + $0x36]]
    %s171 = sld [smem:[#allocation7 + $0x37]]
    %s172 = sld [smem:[#allocation7 + $0x38]]
    %s173 = sld [smem:[#allocation7 + $0x39]]
    %s174 = sld [smem:[#allocation7 + $0x3a]]
    %s175 = sld [smem:[#allocation7 + $0x3b]]
    %s176 = sld [smem:[#allocation7 + $0x3c]]
    %s177 = sld [smem:[#allocation7 + $0x3d]]
    %s178 = sld [smem:[#allocation7 + $0x3e]]
    %s179 = sld [smem:[#allocation7 + $0x3f]]
    %s180 = sld [smem:[#allocation7 + $0x40]]
    %s181 = sld [smem:[#allocation7 + $0x41]]
    %s182 = sld [smem:[#allocation7 + $0x42]]
    %s183 = sld [smem:[#allocation7 + $0x43]]
    %s184 = sld [smem:[#allocation7 + $0x44]]
    %s185 = sld [smem:[#allocation7 + $0x45]]
    %s186 = sld [smem:[#allocation7 + $0x46]]
    %s187 = sld [smem:[#allocation7 + $0x47]]
    %s188 = sld [smem:[#allocation7 + $0x48]]
    %s189 = sld [smem:[#allocation7 + $0x49]]
    %s190 = sld [smem:[#allocation7 + $0x4a]]
    %s191 = sld [smem:[#allocation7 + $0x4b]]
    %s192 = sld [smem:[#allocation7 + $0x4c]]
    %s193 = sld [smem:[#allocation7 + $0x4d]]
    %s194 = sld [smem:[#allocation7 + $0x4e]]
    %s195 = sld [smem:[#allocation7 + $0x4f]]
    %s196 = sld [smem:[#allocation7 + $0x50]]
    %s197 = sld [smem:[#allocation7 + $0x51]]
    %s198 = sld [smem:[#allocation7 + $0x52]]
    %s199 = sld [smem:[#allocation7 + $0x53]]
    %s200 = sld [smem:[#allocation7 + $0x54]]
    %s201 = sld [smem:[#allocation7 + $0x55]]
    %s202 = sld [smem:[#allocation7 + $0x56]]
    %s203 = sld [smem:[#allocation7 + $0x57]]
    %s204 = sld [smem:[#allocation7 + $0x58]]
    %s205 = sld [smem:[#allocation7 + $0x59]]
    %s206 = sld [smem:[#allocation7 + $0x5a]]
    %s207 = sld [smem:[#allocation7 + $0x5b]]
    %s208 = sld [smem:[#allocation7 + $0x5c]]
    %s209 = sld [smem:[#allocation7 + $0x5d]]
    %s210 = sld [smem:[#allocation7 + $0x5e]]
    %s211 = sld [smem:[#allocation7 + $0x5f]]
    %s212 = sld [smem:[#allocation7 + $0x60]]
    %s213 = sld [smem:[#allocation7 + $0x61]]
    %s214 = sld [smem:[#allocation7 + $0x62]]
    %s215 = sld [smem:[#allocation7 + $0x63]]
    %s216 = sld [smem:[#allocation7 + $0x64]]
    %s217 = sld [smem:[#allocation7 + $0x65]]
    %s218 = sld [smem:[#allocation7 + $0x66]]
    %s219 = sld [smem:[#allocation7 + $0x67]]
    %s220 = sld [smem:[#allocation7 + $0x68]]
    %s221 = sld [smem:[#allocation7 + $0x69]]
    %s222 = sld [smem:[#allocation7 + $0x6a]]
    %s223 = sld [smem:[#allocation7 + $0x6b]]
    %s224 = sld [smem:[#allocation7 + $0x6c]]
    %s225 = sld [smem:[#allocation7 + $0x6d]]
    %s226 = sld [smem:[#allocation7 + $0x6e]]
    %s227 = sld [smem:[#allocation7 + $0x6f]]
    %s228 = sld [smem:[#allocation7 + $0x70]]
    %s229 = sld [smem:[#allocation7 + $0x71]]
    %s230 = sld [smem:[#allocation7 + $0x72]]
    %s231 = sld [smem:[#allocation7 + $0x73]]
    %s232 = sld [smem:[#allocation7 + $0x74]]
    %s233 = sld [smem:[#allocation7 + $0x75]]
    %s234 = sld [smem:[#allocation7 + $0x76]]
    %s235 = sld [smem:[#allocation7 + $0x77]]
    %s236 = sld [smem:[#allocation7 + $0x78]]
    %s237 = sld [smem:[#allocation7 + $0x79]]
    %s238 = sld [smem:[#allocation7 + $0x7a]]
    %s239 = sld [smem:[#allocation7 + $0x7b]]
    %s240 = sld [smem:[#allocation7 + $0x7c]]
    %s241 = sld [smem:[#allocation7 + $0x7d]]
    %s242 = sld [smem:[#allocation7 + $0x7e]]
    %s243 = sld [smem:[#allocation7 + $0x7f]]
    %s244 = sld [smem:[#allocation7 + $0x80]]
    %s245 = sld [smem:[#allocation7 + $0x81]]
    %s246 = sld [smem:[#allocation7 + $0x82]]
    %s247 = sld [smem:[#allocation7 + $0x83]]
    %s248 = sld [smem:[#allocation7 + $0x84]]
    %s249 = sld [smem:[#allocation7 + $0x85]]
    %s250 = sld [smem:[#allocation7 + $0x86]]
    %s251 = sld [smem:[#allocation7 + $0x87]]
    %s252 = sld [smem:[#allocation7 + $0x88]]
    %s253 = sld [smem:[#allocation7 + $0x89]]
    %s254 = sld [smem:[#allocation7 + $0x8a]]
    %s255 = sld [smem:[#allocation7 + $0x8b]]
    %s256 = sld [smem:[#allocation7 + $0x8c]]
    %s257 = sld [smem:[#allocation7 + $0x8d]]
    %s258 = sld [smem:[#allocation7 + $0x8e]]
    %s259 = sld [smem:[#allocation7 + $0x8f]]
    %s260 = sld [smem:[#allocation7 + $0x90]]
    %s261 = sld [smem:[#allocation7 + $0x91]]
    %s262 = sld [smem:[#allocation7 + $0x92]]
    %s263 = sld [smem:[#allocation7 + $0x93]]
    %s264 = sld [smem:[#allocation7 + $0x94]]
    %s265 = sld [smem:[#allocation7 + $0x95]]
    %s266 = sld [smem:[#allocation7 + $0x96]]
    %s267 = sld [smem:[#allocation7 + $0x97]]
    %s268 = sld [smem:[#allocation7 + $0x98]]
    %s269 = sld [smem:[#allocation7 + $0x99]]
    %s270 = sld [smem:[#allocation7 + $0x9a]]
    %s271 = sld [smem:[#allocation7 + $0x9b]]
    %s272 = sld [smem:[#allocation7 + $0x9c]]
    %s273 = sld [smem:[#allocation7 + $0x9d]]
    %s274 = sld [smem:[#allocation7 + $0x9e]]
    %s275 = sld [smem:[#allocation7 + $0x9f]]
    %s276 = sld [smem:[#allocation7 + $0xa0]]
    %s277 = sld [smem:[#allocation7 + $0xa1]]
    %s278 = sld [smem:[#allocation7 + $0xa2]]
    %s279 = sld [smem:[#allocation7 + $0xa3]]
    %s280 = sld [smem:[#allocation7 + $0xa4]]
    %s281 = sld [smem:[#allocation7 + $0xa5]]
    %s282 = sld [smem:[#allocation7 + $0xa6]]
    %s283 = sld [smem:[#allocation7 + $0xa7]]
    %s284 = sld [smem:[#allocation7 + $0xa8]]
    %s285 = sld [smem:[#allocation7 + $0xa9]]
    %s286 = sld [smem:[#allocation7 + $0xaa]]
    %s287 = sld [smem:[#allocation7 + $0xab]]
    %s288 = sld [smem:[#allocation7 + $0xac]]
    %s289 = sld [smem:[#allocation7 + $0xad]]
    %s290 = sld [smem:[#allocation7 + $0xae]]
    %s291 = sld [smem:[#allocation7 + $0xaf]]
    %s292 = sld [smem:[#allocation7 + $0xb0]]
    %s293 = sld [smem:[#allocation7 + $0xb1]]
    %s294 = sld [smem:[#allocation7 + $0xb2]]
    %s295 = sld [smem:[#allocation7 + $0xb3]]
    %s296 = sld [smem:[#allocation7 + $0xb4]]
    %s297 = sld [smem:[#allocation7 + $0xb5]]
    %s298 = sld [smem:[#allocation7 + $0xb6]]
    %s299 = sld [smem:[#allocation7 + $0xb7]]
    %s300 = sld [smem:[#allocation7 + $0xb8]]
    %s301 = sld [smem:[#allocation7 + $0xb9]]
    %s302 = sld [smem:[#allocation7 + $0xba]]
    %s303 = sld [smem:[#allocation7 + $0xbb]]
    %s304 = sld [smem:[#allocation7 + $0xbc]]
    %s305 = sld [smem:[#allocation7 + $0xbd]]
    %s306 = sld [smem:[#allocation7 + $0xbe]]
    %s307 = sld [smem:[#allocation7 + $0xbf]]
    %s308 = sld [smem:[#allocation7 + $0xc0]]
    %s309 = sld [smem:[#allocation7 + $0xc1]]
    %s310 = sld [smem:[#allocation7 + $0xc2]]
    %s311 = sld [smem:[#allocation7 + $0xc3]]
    %s312 = sld [smem:[#allocation7 + $0xc4]]
    %s313 = sld [smem:[#allocation7 + $0xc5]]
    %s314 = sld [smem:[#allocation7 + $0xc6]]
    %s315 = sld [smem:[#allocation7 + $0xc7]]
    %s316 = sld [smem:[#allocation9]]
    %s317 = sld [smem:[#allocation9 + $0x1]]
    %s318 = sld [smem:[#allocation9 + $0x2]]
    %s319 = sld [smem:[#allocation9 + $0x3]]
    %s320 = sld [smem:[#allocation9 + $0x4]]
    %s321 = sld [smem:[#allocation9 + $0x5]]
    %s322 = sld [smem:[#allocation9 + $0x6]]
    %s323 = sld [smem:[#allocation9 + $0x7]]
    %s324 = sld [smem:[#allocation9 + $0x8]]
    %s325 = sld [smem:[#allocation9 + $0x9]]
    %s326 = sld [smem:[#allocation9 + $0xa]]
    %s327 = sld [smem:[#allocation9 + $0xb]]
    %s328 = sld [smem:[#allocation9 + $0xc]]
    %s329 = sld [smem:[#allocation9 + $0xd]]
    %s330 = sld [smem:[#allocation9 + $0xe]]
    %s331 = sld [smem:[#allocation9 + $0xf]]
    %s332 = sld [smem:[#allocation9 + $0x10]]
    %s333 = sld [smem:[#allocation9 + $0x11]]
    %s334 = sld [smem:[#allocation9 + $0x12]]
    %s335 = sld [smem:[#allocation9 + $0x13]]
    %s336 = sld [smem:[#allocation10]]
    %s337 = sld [smem:[#allocation10 + $0x1]]
    %s338 = sld [smem:[#allocation10 + $0x2]]
    %s339 = sld [smem:[#allocation10 + $0x3]]
    %s340 = sld [smem:[#allocation10 + $0x4]]
    %s341 = sld [smem:[#allocation10 + $0x5]]
    %s342 = sld [smem:[#allocation10 + $0x6]]
    %s343 = sld [smem:[#allocation10 + $0x7]]
    %s344 = sld [smem:[#allocation10 + $0x8]]
    %s345 = sld [smem:[#allocation10 + $0x9]]
    %s346 = sld [smem:[#allocation10 + $0xa]]
    %s347 = sld [smem:[#allocation10 + $0xb]]
    %s348 = sld [smem:[#allocation10 + $0xc]]
    %s349 = sld [smem:[#allocation10 + $0xd]]
    %s350 = sld [smem:[#allocation10 + $0xe]]
    %s351 = sld [smem:[#allocation10 + $0xf]]
    %s352 = sld [smem:[#allocation10 + $0x10]]
    %s353 = sld [smem:[#allocation10 + $0x11]]
    %s354 = sld [smem:[#allocation10 + $0x12]]
    %s355 = sld [smem:[#allocation10 + $0x13]]
    %s356 = sld [smem:[#allocation10 + $0x14]]
    %s357 = sld [smem:[#allocation10 + $0x15]]
    %s358 = sld [smem:[#allocation10 + $0x16]]
    %s359 = sld [smem:[#allocation10 + $0x17]]
    %s360 = sld [smem:[#allocation10 + $0x18]]
    %s361 = sld [smem:[#allocation10 + $0x19]]
    %s362 = sld [smem:[#allocation10 + $0x1a]]
    %s363 = sld [smem:[#allocation10 + $0x1b]]
    %s364 = sld [smem:[#allocation10 + $0x1c]]
    %s365 = sld [smem:[#allocation10 + $0x1d]]
    %s366 = sld [smem:[#allocation10 + $0x1e]]
    %s367 = sld [smem:[#allocation10 + $0x1f]]
    %s368 = sld [smem:[#allocation10 + $0x20]]
    %s369 = sld [smem:[#allocation10 + $0x21]]
    %s370 = sld [smem:[#allocation10 + $0x22]]
    %s371 = sld [smem:[#allocation10 + $0x23]]
    %s372 = sld [smem:[#allocation10 + $0x24]]
    %s373 = sld [smem:[#allocation10 + $0x25]]
    %s374 = sld [smem:[#allocation10 + $0x26]]
    %s375 = sld [smem:[#allocation10 + $0x27]]
    %s376 = sld [smem:[#allocation12]]
    %s377 = sld [smem:[#allocation12 + $0x1]]
    %v378 = vld [vmem:[%s6] sm:$0xff]
    %v379 = vld [vmem:[%s6 + $0x8] sm:$0xff]
    %v380 = vstv %s96
    %v381 = vmul.f32 %v378, %v380
    %v382 = vmul.f32 %v379, %v380
    %v383 = vstv %s106
    %v384 = vadd.f32 %v381, %v383
    %v385 = vadd.f32 %v382, %v383
    %v386 = vtanh.pop %v384
    %v387 = vtanh.pop %v385
    %v388 = vstv %s116
    %v389 = vmul.f32 %v386, %v388
    %v390 = vmul.f32 %v387, %v388
    %v391 = vstv %s316
    %v392 = vadd.f32 %v389, %v391
    %v393 = vadd.f32 %v390, %v391
    %v394 = vstv %s117
    %v395 = vmul.f32 %v386, %v394
    %v396 = vmul.f32 %v387, %v394
    %v397 = vstv %s317
    %v398 = vadd.f32 %v395, %v397
    %v399 = vadd.f32 %v396, %v397
    %v400 = vstv %s118
    %v401 = vmul.f32 %v386, %v400
    %v402 = vmul.f32 %v387, %v400
    %v403 = vstv %s318
    %v404 = vadd.f32 %v401, %v403
    %v405 = vadd.f32 %v402, %v403
    %v406 = vstv %s119
    %v407 = vmul.f32 %v386, %v406
    %v408 = vmul.f32 %v387, %v406
    %v409 = vstv %s319
    %v410 = vadd.f32 %v407, %v409
    %v411 = vadd.f32 %v408, %v409
    %v412 = vstv %s120
    %v413 = vmul.f32 %v386, %v412
    %v414 = vmul.f32 %v387, %v412
    %v415 = vstv %s320
    %v416 = vadd.f32 %v413, %v415
    %v417 = vadd.f32 %v414, %v415
    %v418 = vstv %s121
    %v419 = vmul.f32 %v386, %v418
    %v420 = vmul.f32 %v387, %v418
    %v421 = vstv %s321
    %v422 = vadd.f32 %v419, %v421
    %v423 = vadd.f32 %v420, %v421
    %v424 = vstv %s122
    %v425 = vmul.f32 %v386, %v424
    %v426 = vmul.f32 %v387, %v424
    %v427 = vstv %s322
    %v428 = vadd.f32 %v425, %v427
    %v429 = vadd.f32 %v426, %v427
    %v430 = vstv %s123
    %v431 = vmul.f32 %v386, %v430
    %v432 = vmul.f32 %v387, %v430
    %v433 = vstv %s323
    %v434 = vadd.f32 %v431, %v433
    %v435 = vadd.f32 %v432, %v433
    %v436 = vstv %s124
    %v437 = vmul.f32 %v386, %v436
    %v438 = vmul.f32 %v387, %v436
    %v439 = vstv %s324
    %v440 = vadd.f32 %v437, %v439
    %v441 = vadd.f32 %v438, %v439
    %v442 = vstv %s125
    %v443 = vmul.f32 %v386, %v442
    %v444 = vmul.f32 %v387, %v442
    %v445 = vstv %s325
    %v446 = vadd.f32 %v443, %v445
    %v447 = vadd.f32 %v444, %v445
    %v448 = vstv %s126
    %v449 = vmul.f32 %v386, %v448
    %v450 = vmul.f32 %v387, %v448
    %v451 = vstv %s326
    %v452 = vadd.f32 %v449, %v451
    %v453 = vadd.f32 %v450, %v451
    %v454 = vstv %s127
    %v455 = vmul.f32 %v386, %v454
    %v456 = vmul.f32 %v387, %v454
    %v457 = vstv %s327
    %v458 = vadd.f32 %v455, %v457
    %v459 = vadd.f32 %v456, %v457
    %v460 = vstv %s128
    %v461 = vmul.f32 %v386, %v460
    %v462 = vmul.f32 %v387, %v460
    %v463 = vstv %s328
    %v464 = vadd.f32 %v461, %v463
    %v465 = vadd.f32 %v462, %v463
    %v466 = vstv %s129
    %v467 = vmul.f32 %v386, %v466
    %v468 = vmul.f32 %v387, %v466
    %v469 = vstv %s329
    %v470 = vadd.f32 %v467, %v469
    %v471 = vadd.f32 %v468, %v469
    %v472 = vstv %s130
    %v473 = vmul.f32 %v386, %v472
    %v474 = vmul.f32 %v387, %v472
    %v475 = vstv %s330
    %v476 = vadd.f32 %v473, %v475
    %v477 = vadd.f32 %v474, %v475
    %v478 = vstv %s131
    %v479 = vmul.f32 %v386, %v478
    %v480 = vmul.f32 %v387, %v478
    %v481 = vstv %s331
    %v482 = vadd.f32 %v479, %v481
    %v483 = vadd.f32 %v480, %v481
    %v484 = vstv %s132
    %v485 = vmul.f32 %v386, %v484
    %v486 = vmul.f32 %v387, %v484
    %v487 = vstv %s332
    %v488 = vadd.f32 %v485, %v487
    %v489 = vadd.f32 %v486, %v487
    %v490 = vstv %s133
    %v491 = vmul.f32 %v386, %v490
    %v492 = vmul.f32 %v387, %v490
    %v493 = vstv %s333
    %v494 = vadd.f32 %v491, %v493
    %v495 = vadd.f32 %v492, %v493
    %v496 = vstv %s134
    %v497 = vmul.f32 %v386, %v496
    %v498 = vmul.f32 %v387, %v496
    %v499 = vstv %s334
    %v500 = vadd.f32 %v497, %v499
    %v501 = vadd.f32 %v498, %v499
    %v502 = vstv %s135
    %v503 = vmul.f32 %v386, %v502
    %v504 = vmul.f32 %v387, %v502
    %v505 = vstv %s335
    %v506 = vadd.f32 %v503, %v505
    %v507 = vadd.f32 %v504, %v505
    %v508 = vstv %s97
    %v509 = vmul.f32 %v378, %v508
    %v510 = vmul.f32 %v379, %v508
    %v511 = vstv %s107
    %v512 = vadd.f32 %v509, %v511
    %v513 = vadd.f32 %v510, %v511
    %v514 = vtanh.pop %v512
    %v515 = vtanh.pop %v513
    %v516 = vstv %s136
    %v517 = vmul.f32 %v514, %v516
    %v518 = vmul.f32 %v515, %v516
    %v519 = vadd.f32 %v392, %v517
    %v520 = vadd.f32 %v393, %v518
    %v521 = vstv %s137
    %v522 = vmul.f32 %v514, %v521
    %v523 = vmul.f32 %v515, %v521
    %v524 = vadd.f32 %v398, %v522
    %v525 = vadd.f32 %v399, %v523
    %v526 = vstv %s138
    %v527 = vmul.f32 %v514, %v526
    %v528 = vmul.f32 %v515, %v526
    %v529 = vadd.f32 %v404, %v527
    %v530 = vadd.f32 %v405, %v528
    %v531 = vstv %s139
    %v532 = vmul.f32 %v514, %v531
    %v533 = vmul.f32 %v515, %v531
    %v534 = vadd.f32 %v410, %v532
    %v535 = vadd.f32 %v411, %v533
    %v536 = vstv %s140
    %v537 = vmul.f32 %v514, %v536
    %v538 = vmul.f32 %v515, %v536
    %v539 = vadd.f32 %v416, %v537
    %v540 = vadd.f32 %v417, %v538
    %v541 = vstv %s141
    %v542 = vmul.f32 %v514, %v541
    %v543 = vmul.f32 %v515, %v541
    %v544 = vadd.f32 %v422, %v542
    %v545 = vadd.f32 %v423, %v543
    %v546 = vstv %s142
    %v547 = vmul.f32 %v514, %v546
    %v548 = vmul.f32 %v515, %v546
    %v549 = vadd.f32 %v428, %v547
    %v550 = vadd.f32 %v429, %v548
    %v551 = vstv %s143
    %v552 = vmul.f32 %v514, %v551
    %v553 = vmul.f32 %v515, %v551
    %v554 = vadd.f32 %v434, %v552
    %v555 = vadd.f32 %v435, %v553
    %v556 = vstv %s144
    %v557 = vmul.f32 %v514, %v556
    %v558 = vmul.f32 %v515, %v556
    %v559 = vadd.f32 %v440, %v557
    %v560 = vadd.f32 %v441, %v558
    %v561 = vstv %s145
    %v562 = vmul.f32 %v514, %v561
    %v563 = vmul.f32 %v515, %v561
    %v564 = vadd.f32 %v446, %v562
    %v565 = vadd.f32 %v447, %v563
    %v566 = vstv %s146
    %v567 = vmul.f32 %v514, %v566
    %v568 = vmul.f32 %v515, %v566
    %v569 = vadd.f32 %v452, %v567
    %v570 = vadd.f32 %v453, %v568
    %v571 = vstv %s147
    %v572 = vmul.f32 %v514, %v571
    %v573 = vmul.f32 %v515, %v571
    %v574 = vadd.f32 %v458, %v572
    %v575 = vadd.f32 %v459, %v573
    %v576 = vstv %s148
    %v577 = vmul.f32 %v514, %v576
    %v578 = vmul.f32 %v515, %v576
    %v579 = vadd.f32 %v464, %v577
    %v580 = vadd.f32 %v465, %v578
    %v581 = vstv %s149
    %v582 = vmul.f32 %v514, %v581
    %v583 = vmul.f32 %v515, %v581
    %v584 = vadd.f32 %v470, %v582
    %v585 = vadd.f32 %v471, %v583
    %v586 = vstv %s150
    %v587 = vmul.f32 %v514, %v586
    %v588 = vmul.f32 %v515, %v586
    %v589 = vadd.f32 %v476, %v587
    %v590 = vadd.f32 %v477, %v588
    %v591 = vstv %s151
    %v592 = vmul.f32 %v514, %v591
    %v593 = vmul.f32 %v515, %v591
    %v594 = vadd.f32 %v482, %v592
    %v595 = vadd.f32 %v483, %v593
    %v596 = vstv %s152
    %v597 = vmul.f32 %v514, %v596
    %v598 = vmul.f32 %v515, %v596
    %v599 = vadd.f32 %v488, %v597
    %v600 = vadd.f32 %v489, %v598
    %v601 = vstv %s153
    %v602 = vmul.f32 %v514, %v601
    %v603 = vmul.f32 %v515, %v601
    %v604 = vadd.f32 %v494, %v602
    %v605 = vadd.f32 %v495, %v603
    %v606 = vstv %s154
    %v607 = vmul.f32 %v514, %v606
    %v608 = vmul.f32 %v515, %v606
    %v609 = vadd.f32 %v500, %v607
    %v610 = vadd.f32 %v501, %v608
    %v611 = vstv %s155
    %v612 = vmul.f32 %v514, %v611
    %v613 = vmul.f32 %v515, %v611
    %v614 = vadd.f32 %v506, %v612
    %v615 = vadd.f32 %v507, %v613
    %v616 = vstv %s98
    %v617 = vmul.f32 %v378, %v616
    %v618 = vmul.f32 %v379, %v616
    %v619 = vstv %s108
    %v620 = vadd.f32 %v617, %v619
    %v621 = vadd.f32 %v618, %v619
    %v622 = vtanh.pop %v620
    %v623 = vtanh.pop %v621
    %v624 = vstv %s156
    %v625 = vmul.f32 %v622, %v624
    %v626 = vmul.f32 %v623, %v624
    %v627 = vadd.f32 %v519, %v625
    %v628 = vadd.f32 %v520, %v626
    %v629 = vstv %s157
    %v630 = vmul.f32 %v622, %v629
    %v631 = vmul.f32 %v623, %v629
    %v632 = vadd.f32 %v524, %v630
    %v633 = vadd.f32 %v525, %v631
    %v634 = vstv %s158
    %v635 = vmul.f32 %v622, %v634
    %v636 = vmul.f32 %v623, %v634
    %v637 = vadd.f32 %v529, %v635
    %v638 = vadd.f32 %v530, %v636
    %v639 = vstv %s159
    %v640 = vmul.f32 %v622, %v639
    %v641 = vmul.f32 %v623, %v639
    %v642 = vadd.f32 %v534, %v640
    %v643 = vadd.f32 %v535, %v641
    %v644 = vstv %s160
    %v645 = vmul.f32 %v622, %v644
    %v646 = vmul.f32 %v623, %v644
    %v647 = vadd.f32 %v539, %v645
    %v648 = vadd.f32 %v540, %v646
    %v649 = vstv %s161
    %v650 = vmul.f32 %v622, %v649
    %v651 = vmul.f32 %v623, %v649
    %v652 = vadd.f32 %v544, %v650
    %v653 = vadd.f32 %v545, %v651
    %v654 = vstv %s162
    %v655 = vmul.f32 %v622, %v654
    %v656 = vmul.f32 %v623, %v654
    %v657 = vadd.f32 %v549, %v655
    %v658 = vadd.f32 %v550, %v656
    %v659 = vstv %s163
    %v660 = vmul.f32 %v622, %v659
    %v661 = vmul.f32 %v623, %v659
    %v662 = vadd.f32 %v554, %v660
    %v663 = vadd.f32 %v555, %v661
    %v664 = vstv %s164
    %v665 = vmul.f32 %v622, %v664
    %v666 = vmul.f32 %v623, %v664
    %v667 = vadd.f32 %v559, %v665
    %v668 = vadd.f32 %v560, %v666
    %v669 = vstv %s165
    %v670 = vmul.f32 %v622, %v669
    %v671 = vmul.f32 %v623, %v669
    %v672 = vadd.f32 %v564, %v670
    %v673 = vadd.f32 %v565, %v671
    %v674 = vstv %s166
    %v675 = vmul.f32 %v622, %v674
    %v676 = vmul.f32 %v623, %v674
    %v677 = vadd.f32 %v569, %v675
    %v678 = vadd.f32 %v570, %v676
    %v679 = vstv %s167
    %v680 = vmul.f32 %v622, %v679
    %v681 = vmul.f32 %v623, %v679
    %v682 = vadd.f32 %v574, %v680
    %v683 = vadd.f32 %v575, %v681
    %v684 = vstv %s168
    %v685 = vmul.f32 %v622, %v684
    %v686 = vmul.f32 %v623, %v684
    %v687 = vadd.f32 %v579, %v685
    %v688 = vadd.f32 %v580, %v686
    %v689 = vstv %s169
    %v690 = vmul.f32 %v622, %v689
    %v691 = vmul.f32 %v623, %v689
    %v692 = vadd.f32 %v584, %v690
    %v693 = vadd.f32 %v585, %v691
    %v694 = vstv %s170
    %v695 = vmul.f32 %v622, %v694
    %v696 = vmul.f32 %v623, %v694
    %v697 = vadd.f32 %v589, %v695
    %v698 = vadd.f32 %v590, %v696
    %v699 = vstv %s171
    %v700 = vmul.f32 %v622, %v699
    %v701 = vmul.f32 %v623, %v699
    %v702 = vadd.f32 %v594, %v700
    %v703 = vadd.f32 %v595, %v701
    %v704 = vstv %s172
    %v705 = vmul.f32 %v622, %v704
    %v706 = vmul.f32 %v623, %v704
    %v707 = vadd.f32 %v599, %v705
    %v708 = vadd.f32 %v600, %v706
    %v709 = vstv %s173
    %v710 = vmul.f32 %v622, %v709
    %v711 = vmul.f32 %v623, %v709
    %v712 = vadd.f32 %v604, %v710
    %v713 = vadd.f32 %v605, %v711
    %v714 = vstv %s174
    %v715 = vmul.f32 %v622, %v714
    %v716 = vmul.f32 %v623, %v714
    %v717 = vadd.f32 %v609, %v715
    %v718 = vadd.f32 %v610, %v716
    %v719 = vstv %s175
    %v720 = vmul.f32 %v622, %v719
    %v721 = vmul.f32 %v623, %v719
    %v722 = vadd.f32 %v614, %v720
    %v723 = vadd.f32 %v615, %v721
    %v724 = vstv %s99
    %v725 = vmul.f32 %v378, %v724
    %v726 = vmul.f32 %v379, %v724
    %v727 = vstv %s109
    %v728 = vadd.f32 %v725, %v727
    %v729 = vadd.f32 %v726, %v727
    %v730 = vtanh.pop %v728
    %v731 = vtanh.pop %v729
    %v732 = vstv %s176
    %v733 = vmul.f32 %v730, %v732
    %v734 = vmul.f32 %v731, %v732
    %v735 = vadd.f32 %v627, %v733
    %v736 = vadd.f32 %v628, %v734
    %v737 = vstv %s177
    %v738 = vmul.f32 %v730, %v737
    %v739 = vmul.f32 %v731, %v737
    %v740 = vadd.f32 %v632, %v738
    %v741 = vadd.f32 %v633, %v739
    %v742 = vstv %s178
    %v743 = vmul.f32 %v730, %v742
    %v744 = vmul.f32 %v731, %v742
    %v745 = vadd.f32 %v637, %v743
    %v746 = vadd.f32 %v638, %v744
    %v747 = vstv %s179
    %v748 = vmul.f32 %v730, %v747
    %v749 = vmul.f32 %v731, %v747
    %v750 = vadd.f32 %v642, %v748
    %v751 = vadd.f32 %v643, %v749
    %v752 = vstv %s180
    %v753 = vmul.f32 %v730, %v752
    %v754 = vmul.f32 %v731, %v752
    %v755 = vadd.f32 %v647, %v753
    %v756 = vadd.f32 %v648, %v754
    %v757 = vstv %s181
    %v758 = vmul.f32 %v730, %v757
    %v759 = vmul.f32 %v731, %v757
    %v760 = vadd.f32 %v652, %v758
    %v761 = vadd.f32 %v653, %v759
    %v762 = vstv %s182
    %v763 = vmul.f32 %v730, %v762
    %v764 = vmul.f32 %v731, %v762
    %v765 = vadd.f32 %v657, %v763
    %v766 = vadd.f32 %v658, %v764
    %v767 = vstv %s183
    %v768 = vmul.f32 %v730, %v767
    %v769 = vmul.f32 %v731, %v767
    %v770 = vadd.f32 %v662, %v768
    %v771 = vadd.f32 %v663, %v769
    %v772 = vstv %s184
    %v773 = vmul.f32 %v730, %v772
    %v774 = vmul.f32 %v731, %v772
    %v775 = vadd.f32 %v667, %v773
    %v776 = vadd.f32 %v668, %v774
    %v777 = vstv %s185
    %v778 = vmul.f32 %v730, %v777
    %v779 = vmul.f32 %v731, %v777
    %v780 = vadd.f32 %v672, %v778
    %v781 = vadd.f32 %v673, %v779
    %v782 = vstv %s186
    %v783 = vmul.f32 %v730, %v782
    %v784 = vmul.f32 %v731, %v782
    %v785 = vadd.f32 %v677, %v783
    %v786 = vadd.f32 %v678, %v784
    %v787 = vstv %s187
    %v788 = vmul.f32 %v730, %v787
    %v789 = vmul.f32 %v731, %v787
    %v790 = vadd.f32 %v682, %v788
    %v791 = vadd.f32 %v683, %v789
    %v792 = vstv %s188
    %v793 = vmul.f32 %v730, %v792
    %v794 = vmul.f32 %v731, %v792
    %v795 = vadd.f32 %v687, %v793
    %v796 = vadd.f32 %v688, %v794
    %v797 = vstv %s189
    %v798 = vmul.f32 %v730, %v797
    %v799 = vmul.f32 %v731, %v797
    %v800 = vadd.f32 %v692, %v798
    %v801 = vadd.f32 %v693, %v799
    %v802 = vstv %s190
    %v803 = vmul.f32 %v730, %v802
    %v804 = vmul.f32 %v731, %v802
    %v805 = vadd.f32 %v697, %v803
    %v806 = vadd.f32 %v698, %v804
    %v807 = vstv %s191
    %v808 = vmul.f32 %v730, %v807
    %v809 = vmul.f32 %v731, %v807
    %v810 = vadd.f32 %v702, %v808
    %v811 = vadd.f32 %v703, %v809
    %v812 = vstv %s192
    %v813 = vmul.f32 %v730, %v812
    %v814 = vmul.f32 %v731, %v812
    %v815 = vadd.f32 %v707, %v813
    %v816 = vadd.f32 %v708, %v814
    %v817 = vstv %s193
    %v818 = vmul.f32 %v730, %v817
    %v819 = vmul.f32 %v731, %v817
    %v820 = vadd.f32 %v712, %v818
    %v821 = vadd.f32 %v713, %v819
    %v822 = vstv %s194
    %v823 = vmul.f32 %v730, %v822
    %v824 = vmul.f32 %v731, %v822
    %v825 = vadd.f32 %v717, %v823
    %v826 = vadd.f32 %v718, %v824
    %v827 = vstv %s195
    %v828 = vmul.f32 %v730, %v827
    %v829 = vmul.f32 %v731, %v827
    %v830 = vadd.f32 %v722, %v828
    %v831 = vadd.f32 %v723, %v829
    %v832 = vstv %s100
    %v833 = vmul.f32 %v378, %v832
    %v834 = vmul.f32 %v379, %v832
    %v835 = vstv %s110
    %v836 = vadd.f32 %v833, %v835
    %v837 = vadd.f32 %v834, %v835
    %v838 = vtanh.pop %v836
    %v839 = vtanh.pop %v837
    %v840 = vstv %s196
    %v841 = vmul.f32 %v838, %v840
    %v842 = vmul.f32 %v839, %v840
    %v843 = vadd.f32 %v735, %v841
    %v844 = vadd.f32 %v736, %v842
    %v845 = vstv %s197
    %v846 = vmul.f32 %v838, %v845
    %v847 = vmul.f32 %v839, %v845
    %v848 = vadd.f32 %v740, %v846
    %v849 = vadd.f32 %v741, %v847
    %v850 = vstv %s198
    %v851 = vmul.f32 %v838, %v850
    %v852 = vmul.f32 %v839, %v850
    %v853 = vadd.f32 %v745, %v851
    %v854 = vadd.f32 %v746, %v852
    %v855 = vstv %s199
    %v856 = vmul.f32 %v838, %v855
    %v857 = vmul.f32 %v839, %v855
    %v858 = vadd.f32 %v750, %v856
    %v859 = vadd.f32 %v751, %v857
    %v860 = vstv %s200
    %v861 = vmul.f32 %v838, %v860
    %v862 = vmul.f32 %v839, %v860
    %v863 = vadd.f32 %v755, %v861
    %v864 = vadd.f32 %v756, %v862
    %v865 = vstv %s201
    %v866 = vmul.f32 %v838, %v865
    %v867 = vmul.f32 %v839, %v865
    %v868 = vadd.f32 %v760, %v866
    %v869 = vadd.f32 %v761, %v867
    %v870 = vstv %s202
    %v871 = vmul.f32 %v838, %v870
    %v872 = vmul.f32 %v839, %v870
    %v873 = vadd.f32 %v765, %v871
    %v874 = vadd.f32 %v766, %v872
    %v875 = vstv %s203
    %v876 = vmul.f32 %v838, %v875
    %v877 = vmul.f32 %v839, %v875
    %v878 = vadd.f32 %v770, %v876
    %v879 = vadd.f32 %v771, %v877
    %v880 = vstv %s204
    %v881 = vmul.f32 %v838, %v880
    %v882 = vmul.f32 %v839, %v880
    %v883 = vadd.f32 %v775, %v881
    %v884 = vadd.f32 %v776, %v882
    %v885 = vstv %s205
    %v886 = vmul.f32 %v838, %v885
    %v887 = vmul.f32 %v839, %v885
    %v888 = vadd.f32 %v780, %v886
    %v889 = vadd.f32 %v781, %v887
    %v890 = vstv %s206
    %v891 = vmul.f32 %v838, %v890
    %v892 = vmul.f32 %v839, %v890
    %v893 = vadd.f32 %v785, %v891
    %v894 = vadd.f32 %v786, %v892
    %v895 = vstv %s207
    %v896 = vmul.f32 %v838, %v895
    %v897 = vmul.f32 %v839, %v895
    %v898 = vadd.f32 %v790, %v896
    %v899 = vadd.f32 %v791, %v897
    %v900 = vstv %s208
    %v901 = vmul.f32 %v838, %v900
    %v902 = vmul.f32 %v839, %v900
    %v903 = vadd.f32 %v795, %v901
    %v904 = vadd.f32 %v796, %v902
    %v905 = vstv %s209
    %v906 = vmul.f32 %v838, %v905
    %v907 = vmul.f32 %v839, %v905
    %v908 = vadd.f32 %v800, %v906
    %v909 = vadd.f32 %v801, %v907
    %v910 = vstv %s210
    %v911 = vmul.f32 %v838, %v910
    %v912 = vmul.f32 %v839, %v910
    %v913 = vadd.f32 %v805, %v911
    %v914 = vadd.f32 %v806, %v912
    %v915 = vstv %s211
    %v916 = vmul.f32 %v838, %v915
    %v917 = vmul.f32 %v839, %v915
    %v918 = vadd.f32 %v810, %v916
    %v919 = vadd.f32 %v811, %v917
    %v920 = vstv %s212
    %v921 = vmul.f32 %v838, %v920
    %v922 = vmul.f32 %v839, %v920
    %v923 = vadd.f32 %v815, %v921
    %v924 = vadd.f32 %v816, %v922
    %v925 = vstv %s213
    %v926 = vmul.f32 %v838, %v925
    %v927 = vmul.f32 %v839, %v925
    %v928 = vadd.f32 %v820, %v926
    %v929 = vadd.f32 %v821, %v927
    %v930 = vstv %s214
    %v931 = vmul.f32 %v838, %v930
    %v932 = vmul.f32 %v839, %v930
    %v933 = vadd.f32 %v825, %v931
    %v934 = vadd.f32 %v826, %v932
    %v935 = vstv %s215
    %v936 = vmul.f32 %v838, %v935
    %v937 = vmul.f32 %v839, %v935
    %v938 = vadd.f32 %v830, %v936
    %v939 = vadd.f32 %v831, %v937
    %v940 = vstv %s101
    %v941 = vmul.f32 %v378, %v940
    %v942 = vmul.f32 %v379, %v940
    %v943 = vstv %s111
    %v944 = vadd.f32 %v941, %v943
    %v945 = vadd.f32 %v942, %v943
    %v946 = vtanh.pop %v944
    %v947 = vtanh.pop %v945
    %v948 = vstv %s216
    %v949 = vmul.f32 %v946, %v948
    %v950 = vmul.f32 %v947, %v948
    %v951 = vadd.f32 %v843, %v949
    %v952 = vadd.f32 %v844, %v950
    %v953 = vstv %s217
    %v954 = vmul.f32 %v946, %v953
    %v955 = vmul.f32 %v947, %v953
    %v956 = vadd.f32 %v848, %v954
    %v957 = vadd.f32 %v849, %v955
    %v958 = vstv %s218
    %v959 = vmul.f32 %v946, %v958
    %v960 = vmul.f32 %v947, %v958
    %v961 = vadd.f32 %v853, %v959
    %v962 = vadd.f32 %v854, %v960
    %v963 = vstv %s219
    %v964 = vmul.f32 %v946, %v963
    %v965 = vmul.f32 %v947, %v963
    %v966 = vadd.f32 %v858, %v964
    %v967 = vadd.f32 %v859, %v965
    %v968 = vstv %s220
    %v969 = vmul.f32 %v946, %v968
    %v970 = vmul.f32 %v947, %v968
    %v971 = vadd.f32 %v863, %v969
    %v972 = vadd.f32 %v864, %v970
    %v973 = vstv %s221
    %v974 = vmul.f32 %v946, %v973
    %v975 = vmul.f32 %v947, %v973
    %v976 = vadd.f32 %v868, %v974
    %v977 = vadd.f32 %v869, %v975
    %v978 = vstv %s222
    %v979 = vmul.f32 %v946, %v978
    %v980 = vmul.f32 %v947, %v978
    %v981 = vadd.f32 %v873, %v979
    %v982 = vadd.f32 %v874, %v980
    %v983 = vstv %s223
    %v984 = vmul.f32 %v946, %v983
    %v985 = vmul.f32 %v947, %v983
    %v986 = vadd.f32 %v878, %v984
    %v987 = vadd.f32 %v879, %v985
    %v988 = vstv %s224
    %v989 = vmul.f32 %v946, %v988
    %v990 = vmul.f32 %v947, %v988
    %v991 = vadd.f32 %v883, %v989
    %v992 = vadd.f32 %v884, %v990
    %v993 = vstv %s225
    %v994 = vmul.f32 %v946, %v993
    %v995 = vmul.f32 %v947, %v993
    %v996 = vadd.f32 %v888, %v994
    %v997 = vadd.f32 %v889, %v995
    %v998 = vstv %s226
    %v999 = vmul.f32 %v946, %v998
    %v1000 = vmul.f32 %v947, %v998
    %v1001 = vadd.f32 %v893, %v999
    %v1002 = vadd.f32 %v894, %v1000
    %v1003 = vstv %s227
    %v1004 = vmul.f32 %v946, %v1003
    %v1005 = vmul.f32 %v947, %v1003
    %v1006 = vadd.f32 %v898, %v1004
    %v1007 = vadd.f32 %v899, %v1005
    %v1008 = vstv %s228
    %v1009 = vmul.f32 %v946, %v1008
    %v1010 = vmul.f32 %v947, %v1008
    %v1011 = vadd.f32 %v903, %v1009
    %v1012 = vadd.f32 %v904, %v1010
    %v1013 = vstv %s229
    %v1014 = vmul.f32 %v946, %v1013
    %v1015 = vmul.f32 %v947, %v1013
    %v1016 = vadd.f32 %v908, %v1014
    %v1017 = vadd.f32 %v909, %v1015
    %v1018 = vstv %s230
    %v1019 = vmul.f32 %v946, %v1018
    %v1020 = vmul.f32 %v947, %v1018
    %v1021 = vadd.f32 %v913, %v1019
    %v1022 = vadd.f32 %v914, %v1020
    %v1023 = vstv %s231
    %v1024 = vmul.f32 %v946, %v1023
    %v1025 = vmul.f32 %v947, %v1023
    %v1026 = vadd.f32 %v918, %v1024
    %v1027 = vadd.f32 %v919, %v1025
    %v1028 = vstv %s232
    %v1029 = vmul.f32 %v946, %v1028
    %v1030 = vmul.f32 %v947, %v1028
    %v1031 = vadd.f32 %v923, %v1029
    %v1032 = vadd.f32 %v924, %v1030
    %v1033 = vstv %s233
    %v1034 = vmul.f32 %v946, %v1033
    %v1035 = vmul.f32 %v947, %v1033
    %v1036 = vadd.f32 %v928, %v1034
    %v1037 = vadd.f32 %v929, %v1035
    %v1038 = vstv %s234
    %v1039 = vmul.f32 %v946, %v1038
    %v1040 = vmul.f32 %v947, %v1038
    %v1041 = vadd.f32 %v933, %v1039
    %v1042 = vadd.f32 %v934, %v1040
    %v1043 = vstv %s235
    %v1044 = vmul.f32 %v946, %v1043
    %v1045 = vmul.f32 %v947, %v1043
    %v1046 = vadd.f32 %v938, %v1044
    %v1047 = vadd.f32 %v939, %v1045
    %v1048 = vstv %s102
    %v1049 = vmul.f32 %v378, %v1048
    %v1050 = vmul.f32 %v379, %v1048
    %v1051 = vstv %s112
    %v1052 = vadd.f32 %v1049, %v1051
    %v1053 = vadd.f32 %v1050, %v1051
    %v1054 = vtanh.pop %v1052
    %v1055 = vtanh.pop %v1053
    %v1056 = vstv %s236
    %v1057 = vmul.f32 %v1054, %v1056
    %v1058 = vmul.f32 %v1055, %v1056
    %v1059 = vadd.f32 %v951, %v1057
    %v1060 = vadd.f32 %v952, %v1058
    %v1061 = vstv %s237
    %v1062 = vmul.f32 %v1054, %v1061
    %v1063 = vmul.f32 %v1055, %v1061
    %v1064 = vadd.f32 %v956, %v1062
    %v1065 = vadd.f32 %v957, %v1063
    %v1066 = vstv %s238
    %v1067 = vmul.f32 %v1054, %v1066
    %v1068 = vmul.f32 %v1055, %v1066
    %v1069 = vadd.f32 %v961, %v1067
    %v1070 = vadd.f32 %v962, %v1068
    %v1071 = vstv %s239
    %v1072 = vmul.f32 %v1054, %v1071
    %v1073 = vmul.f32 %v1055, %v1071
    %v1074 = vadd.f32 %v966, %v1072
    %v1075 = vadd.f32 %v967, %v1073
    %v1076 = vstv %s240
    %v1077 = vmul.f32 %v1054, %v1076
    %v1078 = vmul.f32 %v1055, %v1076
    %v1079 = vadd.f32 %v971, %v1077
    %v1080 = vadd.f32 %v972, %v1078
    %v1081 = vstv %s241
    %v1082 = vmul.f32 %v1054, %v1081
    %v1083 = vmul.f32 %v1055, %v1081
    %v1084 = vadd.f32 %v976, %v1082
    %v1085 = vadd.f32 %v977, %v1083
    %v1086 = vstv %s242
    %v1087 = vmul.f32 %v1054, %v1086
    %v1088 = vmul.f32 %v1055, %v1086
    %v1089 = vadd.f32 %v981, %v1087
    %v1090 = vadd.f32 %v982, %v1088
    %v1091 = vstv %s243
    %v1092 = vmul.f32 %v1054, %v1091
    %v1093 = vmul.f32 %v1055, %v1091
    %v1094 = vadd.f32 %v986, %v1092
    %v1095 = vadd.f32 %v987, %v1093
    %v1096 = vstv %s244
    %v1097 = vmul.f32 %v1054, %v1096
    %v1098 = vmul.f32 %v1055, %v1096
    %v1099 = vadd.f32 %v991, %v1097
    %v1100 = vadd.f32 %v992, %v1098
    %v1101 = vstv %s245
    %v1102 = vmul.f32 %v1054, %v1101
    %v1103 = vmul.f32 %v1055, %v1101
    %v1104 = vadd.f32 %v996, %v1102
    %v1105 = vadd.f32 %v997, %v1103
    %v1106 = vstv %s246
    %v1107 = vmul.f32 %v1054, %v1106
    %v1108 = vmul.f32 %v1055, %v1106
    %v1109 = vadd.f32 %v1001, %v1107
    %v1110 = vadd.f32 %v1002, %v1108
    %v1111 = vstv %s247
    %v1112 = vmul.f32 %v1054, %v1111
    %v1113 = vmul.f32 %v1055, %v1111
    %v1114 = vadd.f32 %v1006, %v1112
    %v1115 = vadd.f32 %v1007, %v1113
    %v1116 = vstv %s248
    %v1117 = vmul.f32 %v1054, %v1116
    %v1118 = vmul.f32 %v1055, %v1116
    %v1119 = vadd.f32 %v1011, %v1117
    %v1120 = vadd.f32 %v1012, %v1118
    %v1121 = vstv %s249
    %v1122 = vmul.f32 %v1054, %v1121
    %v1123 = vmul.f32 %v1055, %v1121
    %v1124 = vadd.f32 %v1016, %v1122
    %v1125 = vadd.f32 %v1017, %v1123
    %v1126 = vstv %s250
    %v1127 = vmul.f32 %v1054, %v1126
    %v1128 = vmul.f32 %v1055, %v1126
    %v1129 = vadd.f32 %v1021, %v1127
    %v1130 = vadd.f32 %v1022, %v1128
    %v1131 = vstv %s251
    %v1132 = vmul.f32 %v1054, %v1131
    %v1133 = vmul.f32 %v1055, %v1131
    %v1134 = vadd.f32 %v1026, %v1132
    %v1135 = vadd.f32 %v1027, %v1133
    %v1136 = vstv %s252
    %v1137 = vmul.f32 %v1054, %v1136
    %v1138 = vmul.f32 %v1055, %v1136
    %v1139 = vadd.f32 %v1031, %v1137
    %v1140 = vadd.f32 %v1032, %v1138
    %v1141 = vstv %s253
    %v1142 = vmul.f32 %v1054, %v1141
    %v1143 = vmul.f32 %v1055, %v1141
    %v1144 = vadd.f32 %v1036, %v1142
    %v1145 = vadd.f32 %v1037, %v1143
    %v1146 = vstv %s254
    %v1147 = vmul.f32 %v1054, %v1146
    %v1148 = vmul.f32 %v1055, %v1146
    %v1149 = vadd.f32 %v1041, %v1147
    %v1150 = vadd.f32 %v1042, %v1148
    %v1151 = vstv %s255
    %v1152 = vmul.f32 %v1054, %v1151
    %v1153 = vmul.f32 %v1055, %v1151
    %v1154 = vadd.f32 %v1046, %v1152
    %v1155 = vadd.f32 %v1047, %v1153
    %v1156 = vstv %s103
    %v1157 = vmul.f32 %v378, %v1156
    %v1158 = vmul.f32 %v379, %v1156
    %v1159 = vstv %s113
    %v1160 = vadd.f32 %v1157, %v1159
    %v1161 = vadd.f32 %v1158, %v1159
    %v1162 = vtanh.pop %v1160
    %v1163 = vtanh.pop %v1161
    %v1164 = vstv %s256
    %v1165 = vmul.f32 %v1162, %v1164
    %v1166 = vmul.f32 %v1163, %v1164
    %v1167 = vadd.f32 %v1059, %v1165
    %v1168 = vadd.f32 %v1060, %v1166
    %v1169 = vstv %s257
    %v1170 = vmul.f32 %v1162, %v1169
    %v1171 = vmul.f32 %v1163, %v1169
    %v1172 = vadd.f32 %v1064, %v1170
    %v1173 = vadd.f32 %v1065, %v1171
    %v1174 = vstv %s258
    %v1175 = vmul.f32 %v1162, %v1174
    %v1176 = vmul.f32 %v1163, %v1174
    %v1177 = vadd.f32 %v1069, %v1175
    %v1178 = vadd.f32 %v1070, %v1176
    %v1179 = vstv %s259
    %v1180 = vmul.f32 %v1162, %v1179
    %v1181 = vmul.f32 %v1163, %v1179
    %v1182 = vadd.f32 %v1074, %v1180
    %v1183 = vadd.f32 %v1075, %v1181
    %v1184 = vstv %s260
    %v1185 = vmul.f32 %v1162, %v1184
    %v1186 = vmul.f32 %v1163, %v1184
    %v1187 = vadd.f32 %v1079, %v1185
    %v1188 = vadd.f32 %v1080, %v1186
    %v1189 = vstv %s261
    %v1190 = vmul.f32 %v1162, %v1189
    %v1191 = vmul.f32 %v1163, %v1189
    %v1192 = vadd.f32 %v1084, %v1190
    %v1193 = vadd.f32 %v1085, %v1191
    %v1194 = vstv %s262
    %v1195 = vmul.f32 %v1162, %v1194
    %v1196 = vmul.f32 %v1163, %v1194
    %v1197 = vadd.f32 %v1089, %v1195
    %v1198 = vadd.f32 %v1090, %v1196
    %v1199 = vstv %s263
    %v1200 = vmul.f32 %v1162, %v1199
    %v1201 = vmul.f32 %v1163, %v1199
    %v1202 = vadd.f32 %v1094, %v1200
    %v1203 = vadd.f32 %v1095, %v1201
    %v1204 = vstv %s264
    %v1205 = vmul.f32 %v1162, %v1204
    %v1206 = vmul.f32 %v1163, %v1204
    %v1207 = vadd.f32 %v1099, %v1205
    %v1208 = vadd.f32 %v1100, %v1206
    %v1209 = vstv %s265
    %v1210 = vmul.f32 %v1162, %v1209
    %v1211 = vmul.f32 %v1163, %v1209
    %v1212 = vadd.f32 %v1104, %v1210
    %v1213 = vadd.f32 %v1105, %v1211
    %v1214 = vstv %s266
    %v1215 = vmul.f32 %v1162, %v1214
    %v1216 = vmul.f32 %v1163, %v1214
    %v1217 = vadd.f32 %v1109, %v1215
    %v1218 = vadd.f32 %v1110, %v1216
    %v1219 = vstv %s267
    %v1220 = vmul.f32 %v1162, %v1219
    %v1221 = vmul.f32 %v1163, %v1219
    %v1222 = vadd.f32 %v1114, %v1220
    %v1223 = vadd.f32 %v1115, %v1221
    %v1224 = vstv %s268
    %v1225 = vmul.f32 %v1162, %v1224
    %v1226 = vmul.f32 %v1163, %v1224
    %v1227 = vadd.f32 %v1119, %v1225
    %v1228 = vadd.f32 %v1120, %v1226
    %v1229 = vstv %s269
    %v1230 = vmul.f32 %v1162, %v1229
    %v1231 = vmul.f32 %v1163, %v1229
    %v1232 = vadd.f32 %v1124, %v1230
    %v1233 = vadd.f32 %v1125, %v1231
    %v1234 = vstv %s270
    %v1235 = vmul.f32 %v1162, %v1234
    %v1236 = vmul.f32 %v1163, %v1234
    %v1237 = vadd.f32 %v1129, %v1235
    %v1238 = vadd.f32 %v1130, %v1236
    %v1239 = vstv %s271
    %v1240 = vmul.f32 %v1162, %v1239
    %v1241 = vmul.f32 %v1163, %v1239
    %v1242 = vadd.f32 %v1134, %v1240
    %v1243 = vadd.f32 %v1135, %v1241
    %v1244 = vstv %s272
    %v1245 = vmul.f32 %v1162, %v1244
    %v1246 = vmul.f32 %v1163, %v1244
    %v1247 = vadd.f32 %v1139, %v1245
    %v1248 = vadd.f32 %v1140, %v1246
    %v1249 = vstv %s273
    %v1250 = vmul.f32 %v1162, %v1249
    %v1251 = vmul.f32 %v1163, %v1249
    %v1252 = vadd.f32 %v1144, %v1250
    %v1253 = vadd.f32 %v1145, %v1251
    %v1254 = vstv %s274
    %v1255 = vmul.f32 %v1162, %v1254
    %v1256 = vmul.f32 %v1163, %v1254
    %v1257 = vadd.f32 %v1149, %v1255
    %v1258 = vadd.f32 %v1150, %v1256
    %v1259 = vstv %s275
    %v1260 = vmul.f32 %v1162, %v1259
    %v1261 = vmul.f32 %v1163, %v1259
    %v1262 = vadd.f32 %v1154, %v1260
    %v1263 = vadd.f32 %v1155, %v1261
    %v1264 = vstv %s104
    %v1265 = vmul.f32 %v378, %v1264
    %v1266 = vmul.f32 %v379, %v1264
    %v1267 = vstv %s114
    %v1268 = vadd.f32 %v1265, %v1267
    %v1269 = vadd.f32 %v1266, %v1267
    %v1270 = vtanh.pop %v1268
    %v1271 = vtanh.pop %v1269
    %v1272 = vstv %s276
    %v1273 = vmul.f32 %v1270, %v1272
    %v1274 = vmul.f32 %v1271, %v1272
    %v1275 = vadd.f32 %v1167, %v1273
    %v1276 = vadd.f32 %v1168, %v1274
    %v1277 = vstv %s277
    %v1278 = vmul.f32 %v1270, %v1277
    %v1279 = vmul.f32 %v1271, %v1277
    %v1280 = vadd.f32 %v1172, %v1278
    %v1281 = vadd.f32 %v1173, %v1279
    %v1282 = vstv %s278
    %v1283 = vmul.f32 %v1270, %v1282
    %v1284 = vmul.f32 %v1271, %v1282
    %v1285 = vadd.f32 %v1177, %v1283
    %v1286 = vadd.f32 %v1178, %v1284
    %v1287 = vstv %s279
    %v1288 = vmul.f32 %v1270, %v1287
    %v1289 = vmul.f32 %v1271, %v1287
    %v1290 = vadd.f32 %v1182, %v1288
    %v1291 = vadd.f32 %v1183, %v1289
    %v1292 = vstv %s280
    %v1293 = vmul.f32 %v1270, %v1292
    %v1294 = vmul.f32 %v1271, %v1292
    %v1295 = vadd.f32 %v1187, %v1293
    %v1296 = vadd.f32 %v1188, %v1294
    %v1297 = vstv %s281
    %v1298 = vmul.f32 %v1270, %v1297
    %v1299 = vmul.f32 %v1271, %v1297
    %v1300 = vadd.f32 %v1192, %v1298
    %v1301 = vadd.f32 %v1193, %v1299
    %v1302 = vstv %s282
    %v1303 = vmul.f32 %v1270, %v1302
    %v1304 = vmul.f32 %v1271, %v1302
    %v1305 = vadd.f32 %v1197, %v1303
    %v1306 = vadd.f32 %v1198, %v1304
    %v1307 = vstv %s283
    %v1308 = vmul.f32 %v1270, %v1307
    %v1309 = vmul.f32 %v1271, %v1307
    %v1310 = vadd.f32 %v1202, %v1308
    %v1311 = vadd.f32 %v1203, %v1309
    %v1312 = vstv %s284
    %v1313 = vmul.f32 %v1270, %v1312
    %v1314 = vmul.f32 %v1271, %v1312
    %v1315 = vadd.f32 %v1207, %v1313
    %v1316 = vadd.f32 %v1208, %v1314
    %v1317 = vstv %s285
    %v1318 = vmul.f32 %v1270, %v1317
    %v1319 = vmul.f32 %v1271, %v1317
    %v1320 = vadd.f32 %v1212, %v1318
    %v1321 = vadd.f32 %v1213, %v1319
    %v1322 = vstv %s286
    %v1323 = vmul.f32 %v1270, %v1322
    %v1324 = vmul.f32 %v1271, %v1322
    %v1325 = vadd.f32 %v1217, %v1323
    %v1326 = vadd.f32 %v1218, %v1324
    %v1327 = vstv %s287
    %v1328 = vmul.f32 %v1270, %v1327
    %v1329 = vmul.f32 %v1271, %v1327
    %v1330 = vadd.f32 %v1222, %v1328
    %v1331 = vadd.f32 %v1223, %v1329
    %v1332 = vstv %s288
    %v1333 = vmul.f32 %v1270, %v1332
    %v1334 = vmul.f32 %v1271, %v1332
    %v1335 = vadd.f32 %v1227, %v1333
    %v1336 = vadd.f32 %v1228, %v1334
    %v1337 = vstv %s289
    %v1338 = vmul.f32 %v1270, %v1337
    %v1339 = vmul.f32 %v1271, %v1337
    %v1340 = vadd.f32 %v1232, %v1338
    %v1341 = vadd.f32 %v1233, %v1339
    %v1342 = vstv %s290
    %v1343 = vmul.f32 %v1270, %v1342
    %v1344 = vmul.f32 %v1271, %v1342
    %v1345 = vadd.f32 %v1237, %v1343
    %v1346 = vadd.f32 %v1238, %v1344
    %v1347 = vstv %s291
    %v1348 = vmul.f32 %v1270, %v1347
    %v1349 = vmul.f32 %v1271, %v1347
    %v1350 = vadd.f32 %v1242, %v1348
    %v1351 = vadd.f32 %v1243, %v1349
    %v1352 = vstv %s292
    %v1353 = vmul.f32 %v1270, %v1352
    %v1354 = vmul.f32 %v1271, %v1352
    %v1355 = vadd.f32 %v1247, %v1353
    %v1356 = vadd.f32 %v1248, %v1354
    %v1357 = vstv %s293
    %v1358 = vmul.f32 %v1270, %v1357
    %v1359 = vmul.f32 %v1271, %v1357
    %v1360 = vadd.f32 %v1252, %v1358
    %v1361 = vadd.f32 %v1253, %v1359
    %v1362 = vstv %s294
    %v1363 = vmul.f32 %v1270, %v1362
    %v1364 = vmul.f32 %v1271, %v1362
    %v1365 = vadd.f32 %v1257, %v1363
    %v1366 = vadd.f32 %v1258, %v1364
    %v1367 = vstv %s295
    %v1368 = vmul.f32 %v1270, %v1367
    %v1369 = vmul.f32 %v1271, %v1367
    %v1370 = vadd.f32 %v1262, %v1368
    %v1371 = vadd.f32 %v1263, %v1369
    %v1372 = vstv %s105
    %v1373 = vmul.f32 %v378, %v1372
    %v1374 = vmul.f32 %v379, %v1372
    %v1375 = vstv %s115
    %v1376 = vadd.f32 %v1373, %v1375
    %v1377 = vadd.f32 %v1374, %v1375
    %v1378 = vtanh.pop %v1376
    %v1379 = vtanh.pop %v1377
    %v1380 = vstv %s296
    %v1381 = vmul.f32 %v1378, %v1380
    %v1382 = vmul.f32 %v1379, %v1380
    %v1383 = vadd.f32 %v1275, %v1381
    %v1384 = vadd.f32 %v1276, %v1382
    %v1385 = vstv %s297
    %v1386 = vmul.f32 %v1378, %v1385
    %v1387 = vmul.f32 %v1379, %v1385
    %v1388 = vadd.f32 %v1280, %v1386
    %v1389 = vadd.f32 %v1281, %v1387
    %v1390 = vstv %s298
    %v1391 = vmul.f32 %v1378, %v1390
    %v1392 = vmul.f32 %v1379, %v1390
    %v1393 = vadd.f32 %v1285, %v1391
    %v1394 = vadd.f32 %v1286, %v1392
    %v1395 = vstv %s299
    %v1396 = vmul.f32 %v1378, %v1395
    %v1397 = vmul.f32 %v1379, %v1395
    %v1398 = vadd.f32 %v1290, %v1396
    %v1399 = vadd.f32 %v1291, %v1397
    %v1400 = vstv %s300
    %v1401 = vmul.f32 %v1378, %v1400
    %v1402 = vmul.f32 %v1379, %v1400
    %v1403 = vadd.f32 %v1295, %v1401
    %v1404 = vadd.f32 %v1296, %v1402
    %v1405 = vstv %s301
    %v1406 = vmul.f32 %v1378, %v1405
    %v1407 = vmul.f32 %v1379, %v1405
    %v1408 = vadd.f32 %v1300, %v1406
    %v1409 = vadd.f32 %v1301, %v1407
    %v1410 = vstv %s302
    %v1411 = vmul.f32 %v1378, %v1410
    %v1412 = vmul.f32 %v1379, %v1410
    %v1413 = vadd.f32 %v1305, %v1411
    %v1414 = vadd.f32 %v1306, %v1412
    %v1415 = vstv %s303
    %v1416 = vmul.f32 %v1378, %v1415
    %v1417 = vmul.f32 %v1379, %v1415
    %v1418 = vadd.f32 %v1310, %v1416
    %v1419 = vadd.f32 %v1311, %v1417
    %v1420 = vstv %s304
    %v1421 = vmul.f32 %v1378, %v1420
    %v1422 = vmul.f32 %v1379, %v1420
    %v1423 = vadd.f32 %v1315, %v1421
    %v1424 = vadd.f32 %v1316, %v1422
    %v1425 = vstv %s305
    %v1426 = vmul.f32 %v1378, %v1425
    %v1427 = vmul.f32 %v1379, %v1425
    %v1428 = vadd.f32 %v1320, %v1426
    %v1429 = vadd.f32 %v1321, %v1427
    %v1430 = vstv %s306
    %v1431 = vmul.f32 %v1378, %v1430
    %v1432 = vmul.f32 %v1379, %v1430
    %v1433 = vadd.f32 %v1325, %v1431
    %v1434 = vadd.f32 %v1326, %v1432
    %v1435 = vstv %s307
    %v1436 = vmul.f32 %v1378, %v1435
    %v1437 = vmul.f32 %v1379, %v1435
    %v1438 = vadd.f32 %v1330, %v1436
    %v1439 = vadd.f32 %v1331, %v1437
    %v1440 = vstv %s308
    %v1441 = vmul.f32 %v1378, %v1440
    %v1442 = vmul.f32 %v1379, %v1440
    %v1443 = vadd.f32 %v1335, %v1441
    %v1444 = vadd.f32 %v1336, %v1442
    %v1445 = vstv %s309
    %v1446 = vmul.f32 %v1378, %v1445
    %v1447 = vmul.f32 %v1379, %v1445
    %v1448 = vadd.f32 %v1340, %v1446
    %v1449 = vadd.f32 %v1341, %v1447
    %v1450 = vstv %s310
    %v1451 = vmul.f32 %v1378, %v1450
    %v1452 = vmul.f32 %v1379, %v1450
    %v1453 = vadd.f32 %v1345, %v1451
    %v1454 = vadd.f32 %v1346, %v1452
    %v1455 = vstv %s311
    %v1456 = vmul.f32 %v1378, %v1455
    %v1457 = vmul.f32 %v1379, %v1455
    %v1458 = vadd.f32 %v1350, %v1456
    %v1459 = vadd.f32 %v1351, %v1457
    %v1460 = vstv %s312
    %v1461 = vmul.f32 %v1378, %v1460
    %v1462 = vmul.f32 %v1379, %v1460
    %v1463 = vadd.f32 %v1355, %v1461
    %v1464 = vadd.f32 %v1356, %v1462
    %v1465 = vstv %s313
    %v1466 = vmul.f32 %v1378, %v1465
    %v1467 = vmul.f32 %v1379, %v1465
    %v1468 = vadd.f32 %v1360, %v1466
    %v1469 = vadd.f32 %v1361, %v1467
    %v1470 = vstv %s314
    %v1471 = vmul.f32 %v1378, %v1470
    %v1472 = vmul.f32 %v1379, %v1470
    %v1473 = vadd.f32 %v1365, %v1471
    %v1474 = vadd.f32 %v1366, %v1472
    %v1475 = vstv %s315
    %v1476 = vmul.f32 %v1378, %v1475
    %v1477 = vmul.f32 %v1379, %v1475
    %v1478 = vadd.f32 %v1370, %v1476
    %v1479 = vadd.f32 %v1371, %v1477
    %v1480 = vtanh.pop %v1383
    %v1481 = vtanh.pop %v1384
    %v1482 = vtanh.pop %v1388
    %v1483 = vtanh.pop %v1389
    %v1484 = vtanh.pop %v1393
    %v1485 = vtanh.pop %v1394
    %v1486 = vtanh.pop %v1398
    %v1487 = vtanh.pop %v1399
    %v1488 = vtanh.pop %v1403
    %v1489 = vtanh.pop %v1404
    %v1490 = vtanh.pop %v1408
    %v1491 = vtanh.pop %v1409
    %v1492 = vtanh.pop %v1413
    %v1493 = vtanh.pop %v1414
    %v1494 = vtanh.pop %v1418
    %v1495 = vtanh.pop %v1419
    %v1496 = vtanh.pop %v1423
    %v1497 = vtanh.pop %v1424
    %v1498 = vtanh.pop %v1428
    %v1499 = vtanh.pop %v1429
    %v1500 = vtanh.pop %v1433
    %v1501 = vtanh.pop %v1434
    %v1502 = vtanh.pop %v1438
    %v1503 = vtanh.pop %v1439
    %v1504 = vtanh.pop %v1443
    %v1505 = vtanh.pop %v1444
    %v1506 = vtanh.pop %v1448
    %v1507 = vtanh.pop %v1449
    %v1508 = vtanh.pop %v1453
    %v1509 = vtanh.pop %v1454
    %v1510 = vtanh.pop %v1458
    %v1511 = vtanh.pop %v1459
    %v1512 = vtanh.pop %v1463
    %v1513 = vtanh.pop %v1464
    %v1514 = vtanh.pop %v1468
    %v1515 = vtanh.pop %v1469
    %v1516 = vtanh.pop %v1473
    %v1517 = vtanh.pop %v1474
    %v1518 = vtanh.pop %v1478
    %v1519 = vtanh.pop %v1479
    %v1520 = vstv %s336
    %v1521 = vmul.f32 %v1480, %v1520
    %v1522 = vmul.f32 %v1481, %v1520
    %v1523 = vstv %s376
    %v1524 = vadd.f32 %v1521, %v1523
    %v1525 = vadd.f32 %v1522, %v1523
    %v1526 = vstv %s338
    %v1527 = vmul.f32 %v1482, %v1526
    %v1528 = vmul.f32 %v1483, %v1526
    %v1529 = vadd.f32 %v1524, %v1527
    %v1530 = vadd.f32 %v1525, %v1528
    %v1531 = vstv %s340
    %v1532 = vmul.f32 %v1484, %v1531
    %v1533 = vmul.f32 %v1485, %v1531
    %v1534 = vadd.f32 %v1529, %v1532
    %v1535 = vadd.f32 %v1530, %v1533
    %v1536 = vstv %s342
    %v1537 = vmul.f32 %v1486, %v1536
    %v1538 = vmul.f32 %v1487, %v1536
    %v1539 = vadd.f32 %v1534, %v1537
    %v1540 = vadd.f32 %v1535, %v1538
    %v1541 = vstv %s344
    %v1542 = vmul.f32 %v1488, %v1541
    %v1543 = vmul.f32 %v1489, %v1541
    %v1544 = vadd.f32 %v1539, %v1542
    %v1545 = vadd.f32 %v1540, %v1543
    %v1546 = vstv %s346
    %v1547 = vmul.f32 %v1490, %v1546
    %v1548 = vmul.f32 %v1491, %v1546
    %v1549 = vadd.f32 %v1544, %v1547
    %v1550 = vadd.f32 %v1545, %v1548
    %v1551 = vstv %s348
    %v1552 = vmul.f32 %v1492, %v1551
    %v1553 = vmul.f32 %v1493, %v1551
    %v1554 = vadd.f32 %v1549, %v1552
    %v1555 = vadd.f32 %v1550, %v1553
    %v1556 = vstv %s350
    %v1557 = vmul.f32 %v1494, %v1556
    %v1558 = vmul.f32 %v1495, %v1556
    %v1559 = vadd.f32 %v1554, %v1557
    %v1560 = vadd.f32 %v1555, %v1558
    %v1561 = vstv %s352
    %v1562 = vmul.f32 %v1496, %v1561
    %v1563 = vmul.f32 %v1497, %v1561
    %v1564 = vadd.f32 %v1559, %v1562
    %v1565 = vadd.f32 %v1560, %v1563
    %v1566 = vstv %s354
    %v1567 = vmul.f32 %v1498, %v1566
    %v1568 = vmul.f32 %v1499, %v1566
    %v1569 = vadd.f32 %v1564, %v1567
    %v1570 = vadd.f32 %v1565, %v1568
    %v1571 = vstv %s356
    %v1572 = vmul.f32 %v1500, %v1571
    %v1573 = vmul.f32 %v1501, %v1571
    %v1574 = vadd.f32 %v1569, %v1572
    %v1575 = vadd.f32 %v1570, %v1573
    %v1576 = vstv %s358
    %v1577 = vmul.f32 %v1502, %v1576
    %v1578 = vmul.f32 %v1503, %v1576
    %v1579 = vadd.f32 %v1574, %v1577
    %v1580 = vadd.f32 %v1575, %v1578
    %v1581 = vstv %s360
    %v1582 = vmul.f32 %v1504, %v1581
    %v1583 = vmul.f32 %v1505, %v1581
    %v1584 = vadd.f32 %v1579, %v1582
    %v1585 = vadd.f32 %v1580, %v1583
    %v1586 = vstv %s362
    %v1587 = vmul.f32 %v1506, %v1586
    %v1588 = vmul.f32 %v1507, %v1586
    %v1589 = vadd.f32 %v1584, %v1587
    %v1590 = vadd.f32 %v1585, %v1588
    %v1591 = vstv %s364
    %v1592 = vmul.f32 %v1508, %v1591
    %v1593 = vmul.f32 %v1509, %v1591
    %v1594 = vadd.f32 %v1589, %v1592
    %v1595 = vadd.f32 %v1590, %v1593
    %v1596 = vstv %s366
    %v1597 = vmul.f32 %v1510, %v1596
    %v1598 = vmul.f32 %v1511, %v1596
    %v1599 = vadd.f32 %v1594, %v1597
    %v1600 = vadd.f32 %v1595, %v1598
    %v1601 = vstv %s368
    %v1602 = vmul.f32 %v1512, %v1601
    %v1603 = vmul.f32 %v1513, %v1601
    %v1604 = vadd.f32 %v1599, %v1602
    %v1605 = vadd.f32 %v1600, %v1603
    %v1606 = vstv %s370
    %v1607 = vmul.f32 %v1514, %v1606
    %v1608 = vmul.f32 %v1515, %v1606
    %v1609 = vadd.f32 %v1604, %v1607
    %v1610 = vadd.f32 %v1605, %v1608
    %v1611 = vstv %s372
    %v1612 = vmul.f32 %v1516, %v1611
    %v1613 = vmul.f32 %v1517, %v1611
    %v1614 = vadd.f32 %v1609, %v1612
    %v1615 = vadd.f32 %v1610, %v1613
    %v1616 = vstv %s374
    %v1617 = vmul.f32 %v1518, %v1616
    %v1618 = vmul.f32 %v1519, %v1616
    %v1619 = vadd.f32 %v1614, %v1617
    %v1620 = vadd.f32 %v1615, %v1618
    %1621 = vst [vmem:[#allocation13] sm:$0xff] %v1619
    %1622 = vst [vmem:[#allocation13 + $0x8] sm:$0xff] %v1620
    %v1623 = vstv %s337
    %v1624 = vmul.f32 %v1480, %v1623
    %v1625 = vmul.f32 %v1481, %v1623
    %v1626 = vstv %s377
    %v1627 = vadd.f32 %v1624, %v1626
    %v1628 = vadd.f32 %v1625, %v1626
    %v1629 = vstv %s339
    %v1630 = vmul.f32 %v1482, %v1629
    %v1631 = vmul.f32 %v1483, %v1629
    %v1632 = vadd.f32 %v1627, %v1630
    %v1633 = vadd.f32 %v1628, %v1631
    %v1634 = vstv %s341
    %v1635 = vmul.f32 %v1484, %v1634
    %v1636 = vmul.f32 %v1485, %v1634
    %v1637 = vadd.f32 %v1632, %v1635
    %v1638 = vadd.f32 %v1633, %v1636
    %v1639 = vstv %s343
    %v1640 = vmul.f32 %v1486, %v1639
    %v1641 = vmul.f32 %v1487, %v1639
    %v1642 = vadd.f32 %v1637, %v1640
    %v1643 = vadd.f32 %v1638, %v1641
    %v1644 = vstv %s345
    %v1645 = vmul.f32 %v1488, %v1644
    %v1646 = vmul.f32 %v1489, %v1644
    %v1647 = vadd.f32 %v1642, %v1645
    %v1648 = vadd.f32 %v1643, %v1646
    %v1649 = vstv %s347
    %v1650 = vmul.f32 %v1490, %v1649
    %v1651 = vmul.f32 %v1491, %v1649
    %v1652 = vadd.f32 %v1647, %v1650
    %v1653 = vadd.f32 %v1648, %v1651
    %v1654 = vstv %s349
    %v1655 = vmul.f32 %v1492, %v1654
    %v1656 = vmul.f32 %v1493, %v1654
    %v1657 = vadd.f32 %v1652, %v1655
    %v1658 = vadd.f32 %v1653, %v1656
    %v1659 = vstv %s351
    %v1660 = vmul.f32 %v1494, %v1659
    %v1661 = vmul.f32 %v1495, %v1659
    %v1662 = vadd.f32 %v1657, %v1660
    %v1663 = vadd.f32 %v1658, %v1661
    %v1664 = vstv %s353
    %v1665 = vmul.f32 %v1496, %v1664
    %v1666 = vmul.f32 %v1497, %v1664
    %v1667 = vadd.f32 %v1662, %v1665
    %v1668 = vadd.f32 %v1663, %v1666
    %v1669 = vstv %s355
    %v1670 = vmul.f32 %v1498, %v1669
    %v1671 = vmul.f32 %v1499, %v1669
    %v1672 = vadd.f32 %v1667, %v1670
    %v1673 = vadd.f32 %v1668, %v1671
    %v1674 = vstv %s357
    %v1675 = vmul.f32 %v1500, %v1674
    %v1676 = vmul.f32 %v1501, %v1674
    %v1677 = vadd.f32 %v1672, %v1675
    %v1678 = vadd.f32 %v1673, %v1676
    %v1679 = vstv %s359
    %v1680 = vmul.f32 %v1502, %v1679
    %v1681 = vmul.f32 %v1503, %v1679
    %v1682 = vadd.f32 %v1677, %v1680
    %v1683 = vadd.f32 %v1678, %v1681
    %v1684 = vstv %s361
    %v1685 = vmul.f32 %v1504, %v1684
    %v1686 = vmul.f32 %v1505, %v1684
    %v1687 = vadd.f32 %v1682, %v1685
    %v1688 = vadd.f32 %v1683, %v1686
    %v1689 = vstv %s363
    %v1690 = vmul.f32 %v1506, %v1689
    %v1691 = vmul.f32 %v1507, %v1689
    %v1692 = vadd.f32 %v1687, %v1690
    %v1693 = vadd.f32 %v1688, %v1691
    %v1694 = vstv %s365
    %v1695 = vmul.f32 %v1508, %v1694
    %v1696 = vmul.f32 %v1509, %v1694
    %v1697 = vadd.f32 %v1692, %v1695
    %v1698 = vadd.f32 %v1693, %v1696
    %v1699 = vstv %s367
    %v1700 = vmul.f32 %v1510, %v1699
    %v1701 = vmul.f32 %v1511, %v1699
    %v1702 = vadd.f32 %v1697, %v1700
    %v1703 = vadd.f32 %v1698, %v1701
    %v1704 = vstv %s369
    %v1705 = vmul.f32 %v1512, %v1704
    %v1706 = vmul.f32 %v1513, %v1704
    %v1707 = vadd.f32 %v1702, %v1705
    %v1708 = vadd.f32 %v1703, %v1706
    %v1709 = vstv %s371
    %v1710 = vmul.f32 %v1514, %v1709
    %v1711 = vmul.f32 %v1515, %v1709
    %v1712 = vadd.f32 %v1707, %v1710
    %v1713 = vadd.f32 %v1708, %v1711
    %v1714 = vstv %s373
    %v1715 = vmul.f32 %v1516, %v1714
    %v1716 = vmul.f32 %v1517, %v1714
    %v1717 = vadd.f32 %v1712, %v1715
    %v1718 = vadd.f32 %v1713, %v1716
    %v1719 = vstv %s375
    %v1720 = vmul.f32 %v1518, %v1719
    %v1721 = vmul.f32 %v1519, %v1719
    %v1722 = vadd.f32 %v1717, %v1720
    %v1723 = vadd.f32 %v1718, %v1721
    %s1724 = sadd.s32 0, 16
    %s1725 = scalar_lea.vmem [#allocation13], %s1724
    %1726 = vst [vmem:[%s1725] sm:$0xff] %v1722
    %1727 = vst [vmem:[%s1725 + $0x8] sm:$0xff] %v1723
    // Predicated region
    $region54: #{tpu_custom_call.1} parent=1 // pred_check
      _
    $region55: #{tpu_custom_call.1} parent=1 // pred_check_branch
      %1729 = sbr.rel (0) target = $region57
    $region56: #{tpu_custom_call.1} parent=1 // pred_region
      %s1731 = ssub.s32 512, 512
      %1732 = vsyncadd [#allocation3], %s1731
      %s1733 = sshll.u32 [#allocation13], 4
      %s1734 = int_to_ptr.vmem [resolvable:$true] %s1733
      %1739 = dma.vmem_to_hbm [thread:$0]  %s1734, 512, %s7, [#allocation3], 128, 128, 8
    $region57: #{tpu_custom_call.1} parent=1 // pred_fallthru
      _
    // Predicated region
    $region58: #{tpu_custom_call.1} parent=1 // pred_check
      _
    $region59: #{tpu_custom_call.1} parent=1 // pred_check_branch
      %1741 = sbr.rel (0) target = $region61
    $region60: #{tpu_custom_call.1} parent=1 // pred_region
      %1742 = dma.done [#allocation3], 512
    $region61: #{tpu_custom_call.1} parent=1 // pred_fallthru
      _
    %1743 = vsyncpa [#allocation3], 1
    %1744 = vsyncpa [#allocation4], 1
    %1745 = vsyncpa [#allocation5], 1
    %1746 = vsyncpa [#allocation8], 1
    %1747 = vsyncpa [#allocation11], 1

</llo_original>
